<compile_context>
chip_gen: v7x
topology: tpu7x:2x2x1
jax: 0.10.0
libtpu: 0.0.40
codegen_flags: <defaults>
</compile_context>

<pallas_src>
import functools

import numpy as np

import jax
import jax.numpy as jnp
from jax.experimental import pallas as pl
from jax.experimental.pallas import tpu as pltpu

_LOG2PI = float(np.log(2.0 * np.pi))
_TAPS = tuple((dh, dw) for dh in (-1, 0, 1) for dw in (-1, 0, 1))


# ----------------------------------------------------------------------------
# Fused per-level Pallas kernel
# ----------------------------------------------------------------------------

def _level_kernel(*refs, B, N, W, C, K, has_split):
    """One Glow level: K x (actnorm -> Woodbury -> affine coupling) [+ Split].

    Layout: channels on sublanes, flattened batch*spatial (B*H*W) on lanes.
    z is kept as a single contiguous (C, B*N) tile so the folded actnorm+channel-
    Woodbury is one matmul and the spatial Woodbury runs once on the whole tile.
    """
    if has_split:
        (z_ref, masks_ref, wc_ref, be_ref, us_ref, vs_ref,
         w1_ref, b1_ref, w2_ref, b2_ref, w3_ref, b3_ref,
         wsp_ref, bsp_ref, ind_ref, zo_ref, ld_ref) = refs
    else:
        (z_ref, masks_ref, wc_ref, be_ref, us_ref, vs_ref,
         w1_ref, b1_ref, w2_ref, b2_ref, w3_ref, b3_ref,
         ind_ref, zo_ref, ld_ref) = refs

    BN = B * N
    Ch = C // 2

    # XLU lane rotation when the lane dim is 128-aligned, jnp.roll fallback otherwise.
    if BN % 128 == 0:
        def roll1(v, s):
            return pltpu.roll(v, s, 1)
    else:
        def roll1(v, s):
            return jnp.roll(v, s, axis=1)

    def tap_stack(x):
        # In-kernel im2col for a 3x3 "same" conv on the (Cin, B*N) layout:
        # 9 lane rolls with precomputed boundary masks, stacked into (9*Cin, B*N)
        # so each conv is ONE matmul against a (Cout, 9*Cin) weight.
        blocks = []
        for t, (dh, dw) in enumerate(_TAPS):
            d = dh * W + dw
            if d == 0:
                blocks.append(x)
            else:
                blocks.append(roll1(x, (-d) % BN) * masks_ref[t])
        return jnp.concatenate(blocks, axis=0)

    z = z_ref[...]                                  # (C, BN), f32
    ld_lane = jnp.zeros((1, BN), jnp.float32)

    for k in range(K):
        # Actnorm folded into the channel Woodbury: one dense (C,C) x (C,BN) matmul.
        y = jnp.dot(wc_ref[k], z, preferred_element_type=jnp.float32) + be_ref[k]
        # Spatial Woodbury (block-diag low-rank form), whole tile, NxN never built.
        y = y + jnp.dot(
            jnp.dot(y, us_ref[k], preferred_element_type=jnp.float32),
            vs_ref[k], preferred_element_type=jnp.float32)
        z1 = y[:Ch]
        z2 = y[Ch:]

        # Affine coupling NN: conv3x3 + ReLU -> conv1x1 + ReLU -> conv3x3.
        # bf16 matmul operands, f32 accumulation; bias adds in f32.
        xs = tap_stack(z1).astype(jnp.bfloat16)          # (9*Ch, BN)
        h = jnp.dot(w1_ref[k], xs, preferred_element_type=jnp.float32) + b1_ref[k]
        h = jnp.maximum(h, 0.0)
        h = jnp.dot(w2_ref[k], h.astype(jnp.bfloat16),
                    preferred_element_type=jnp.float32) + b2_ref[k]
        h = jnp.maximum(h, 0.0)
        hs = tap_stack(h).astype(jnp.bfloat16)           # (9*hid, BN)
        out = jnp.dot(w3_ref[k], hs, preferred_element_type=jnp.float32) + b3_ref[k]
        shift = out[:Ch]                                 # merged heads: shift rows first
        sx = out[Ch:] + 2.0                              # raw scale (pre-sigmoid)

        # sigmoid(sx) with 2 EUP ops + approx reciprocal:
        #   e = exp(-|sx|);  log(sigmoid) = min(sx,0) - log(1+e);
        #   sigmoid = where(sx<0, e, 1) / (1+e).
        e = jnp.exp(-jnp.abs(sx))
        ope = 1.0 + e
        log_scale = jnp.minimum(sx, 0.0) - jnp.log(ope)
        scale = jnp.where(sx < 0.0, e, 1.0) * pl.reciprocal(ope, approx=True)
        z2 = (z2 + shift) * scale
        ld_lane = ld_lane + jnp.sum(log_scale, axis=0, keepdims=True)

        last = (k == K - 1)
        if last and has_split:
            # Split prior conv reuses the last step's z1 tap stack (no re-rolling).
            sp = jnp.dot(wsp_ref[...], xs, preferred_element_type=jnp.float32) + bsp_ref[...]
            mean = sp[:Ch]
            logs = sp[Ch:]
            diff = z2 - mean
            logp = -0.5 * (_LOG2PI + 2.0 * logs + diff * diff * jnp.exp(-2.0 * logs))
            ld_lane = ld_lane + jnp.sum(logp, axis=0, keepdims=True)
            zo_ref[...] = z1
        elif last:
            zo_ref[...] = jnp.concatenate([z1, z2], axis=0)
        else:
            z = jnp.concatenate([z1, z2], axis=0)

    # Per-sample logdet reduce in-kernel: rides the otherwise-idle MXU, output is a
    # lane-dense (1, 128) slab (first B lanes hold the per-sample values).
    ld_ref[...] = jnp.dot(ld_lane, ind_ref[...], preferred_element_type=jnp.float32)


def run_level(z, lvl, B):
    """Run one fused level kernel. z: (C, B, H, W) -> (C_out, B, H, W), per-sample logdet."""
    C, H, W, N = lvl["C"], lvl["H"], lvl["W"], lvl["N"]
    K = lvl["K"]
    Ch = C // 2
    BN = B * N
    has_split = lvl["has_split"]

    zin = z.reshape(C, BN)
    inputs = [zin, lvl["masks"], lvl["wc"], lvl["be"], lvl["us"], lvl["vs"],
              lvl["w1"], lvl["b1"], lvl["w2"], lvl["b2"], lvl["w3"], lvl["b3"]]
    if has_split:
        inputs += [lvl["wsp"], lvl["bsp"]]
        out_c = Ch
    else:
        out_c = C
    inputs.append(lvl["ind"])
    ind_cols = lvl["ind"].shape[1]

    kern = functools.partial(_level_kernel, B=B, N=N, W=W, C=C, K=K,
                             has_split=has_split)
    zo, ld_pad = pl.pallas_call(
        kern,
        out_shape=(jax.ShapeDtypeStruct((out_c, BN), jnp.float32),
                   jax.ShapeDtypeStruct((1, ind_cols), jnp.float32)),
    )(*inputs)
    return zo.reshape(out_c, B, H, W), ld_pad[0, :B]


# ----------------------------------------------------------------------------
# Parameter construction / folding (build time, off the hot path)
# ----------------------------------------------------------------------------

def _make_tap_masks(B, H, W):
    N = H * W
    p = np.arange(B * N)
    n = p % N
    r = n // W
    c = n % W
    ms = []
    for dh, dw in _TAPS:
        ok = (r + dh >= 0) & (r + dh < H) & (c + dw >= 0) & (c + dw < W)
        ms.append(ok.astype(np.float32))
    return jnp.asarray(np.stack(ms)[:, None, :])     # (9, 1, B*N)


def init_flownet_params(key, image_shape, hidden_channels, K, L, d_c, d_s):
    C, H, W = image_shape
    assert C in (1, 3)
    levels = []
    for l in range(L):
        C, H, W = C * 4, H // 2, W // 2
        N = H * W
        steps = []
        for _ in range(K):
            key, *ks = jax.random.split(key, 10)
            steps.append({
                "an_bias": 0.01 * jax.random.normal(ks[0], (C,), jnp.float32),
                "an_logs": 0.01 * jax.random.normal(ks[1], (C,), jnp.float32),
                "Uc": 0.05 * jax.random.normal(ks[2], (C, d_c[l]), jnp.float32),
                "Vc": 0.05 * jax.random.normal(ks[3], (d_c[l], C), jnp.float32),
                "Us": 0.05 * jax.random.normal(ks[4], (N, d_s[l]), jnp.float32),
                "Vs": 0.05 * jax.random.normal(ks[5], (d_s[l], N), jnp.float32),
                "w1": 0.05 * jax.random.normal(ks[6], (hidden_channels, C // 2, 3, 3), jnp.float32),
                "b1": jnp.zeros((hidden_channels,), jnp.float32),
                "w2": 0.05 * jax.random.normal(ks[7], (hidden_channels, hidden_channels, 1, 1), jnp.float32),
                "b2": jnp.zeros((hidden_channels,), jnp.float32),
                "w3": 0.05 * jax.random.normal(ks[8], (C, hidden_channels, 3, 3), jnp.float32),
                "b3": jnp.zeros((C,), jnp.float32),
                "logs3": jnp.zeros((C,), jnp.float32),
            })
        split = None
        if l < L - 1:
            key, k1 = jax.random.split(key)
            split = {
                "w": 0.05 * jax.random.normal(k1, (C, C // 2, 3, 3), jnp.float32),
                "b": jnp.zeros((C,), jnp.float32),
                "logs": jnp.zeros((C,), jnp.float32),
            }
        levels.append({"C": C, "H": H, "W": W, "steps": steps, "split": split})
        if l < L - 1:
            C = C // 2
    return levels


def _pack_conv3x3(w):
    # (Cout, Cin, 3, 3) -> (Cout, 9*Cin) with column index t*Cin + cin, t = (dh+1)*3+(dw+1).
    cout = w.shape[0]
    cin = w.shape[1]
    return jnp.transpose(w, (0, 2, 3, 1)).reshape(cout, 9 * cin)


def build_flownet(levels_raw, B, hidden_channels):
    levels = []
    logdet_const = 0.0
    for lvl in levels_raw:
        C, H, W = lvl["C"], lvl["H"], lvl["W"]
        N = H * W
        Ch = C // 2
        hid = hidden_channels
        K = len(lvl["steps"])
        BN = B * N
        eyeB = np.eye(B, dtype=np.float32)

        wc_l, be_l, us_l, vs_l = [], [], [], []
        w1_l, b1_l, w2_l, b2_l, w3_l, b3_l = [], [], [], [], [], []
        for p in lvl["steps"]:
            s = jnp.exp(p["an_logs"])
            Wc = jnp.eye(C, dtype=jnp.float32) + p["Uc"] @ p["Vc"]
            wc_l.append(Wc * s[None, :])                             # Wc @ diag(exp(logs))
            be_l.append((Wc @ (s * p["an_bias"])).reshape(C, 1))      # folded actnorm bias
            # Block-diagonal spatial Woodbury factors over the batch (build time).
            Us = np.asarray(p["Us"], np.float32)
            Vs = np.asarray(p["Vs"], np.float32)
            us_l.append(jnp.asarray(np.kron(eyeB, Us)))               # (B*N, B*ds)
            vs_l.append(jnp.asarray(np.kron(eyeB, Vs)))               # (B*ds, B*N)
            # Coupling-NN weights: tap-merged, head-merged, bf16 matmul operands.
            w1_l.append(_pack_conv3x3(p["w1"]).astype(jnp.bfloat16))  # (hid, 9*Ch)
            b1_l.append(p["b1"].reshape(hid, 1))
            w2_l.append(p["w2"].reshape(hid, hid).astype(jnp.bfloat16))
            b2_l.append(p["b2"].reshape(hid, 1))
            sc3 = jnp.exp(3.0 * p["logs3"])
            w3e = p["w3"] * sc3[:, None, None, None]
            b3e = p["b3"] * sc3
            # "Cross" split pre-applied and heads merged: shift rows first, scale rows second.
            w3m = jnp.concatenate([w3e[0::2], w3e[1::2]], axis=0)     # (C, hid, 3, 3)
            b3m = jnp.concatenate([b3e[0::2], b3e[1::2]], axis=0)
            w3_l.append(_pack_conv3x3(w3m).astype(jnp.bfloat16))      # (C, 9*hid)
            b3_l.append(b3m.reshape(C, 1))
            # Input-independent logdet terms hoisted to build time (host side).
            dc, ds = p["Vc"].shape[0], p["Vs"].shape[0]
            vcuc = np.asarray(p["Vc"] @ p["Uc"], dtype=np.float64)
            vsus = np.asarray(p["Vs"] @ p["Us"], dtype=np.float64)
            logdet_const += N * (float(np.sum(np.asarray(p["an_logs"], dtype=np.float64)))
                                 + float(np.linalg.slogdet(np.eye(dc) + vcuc)[1]))
            logdet_const += C * float(np.linalg.slogdet(np.eye(ds) + vsus)[1])

        # Lane-dense per-sample logdet reducer (lane n belongs to sample n // N).
        ind_cols = max(128, ((B + 127) // 128) * 128)
        ind = np.zeros((BN, ind_cols), np.float32)
        ind[np.arange(BN), np.arange(BN) // N] = 1.0

        entry = {
            "C": C, "H": H, "W": W, "N": N, "K": K, "hid": hid,
            "has_split": lvl["split"] is not None,
            "masks": _make_tap_masks(B, H, W),
            "ind": jnp.asarray(ind),
            "wc": jnp.stack(wc_l), "be": jnp.stack(be_l),
            "us": jnp.stack(us_l), "vs": jnp.stack(vs_l),
            "w1": jnp.stack(w1_l), "b1": jnp.stack(b1_l),
            "w2": jnp.stack(w2_l), "b2": jnp.stack(b2_l),
            "w3": jnp.stack(w3_l), "b3": jnp.stack(b3_l),
        }
        if lvl["split"] is not None:
            sp = lvl["split"]
            scs = jnp.exp(3.0 * sp["logs"])
            wse = sp["w"] * scs[:, None, None, None]
            bse = sp["b"] * scs
            wspm = jnp.concatenate([wse[0::2], wse[1::2]], axis=0)    # mean rows then logs rows
            bspm = jnp.concatenate([bse[0::2], bse[1::2]], axis=0)
            entry["wsp"] = _pack_conv3x3(wspm).astype(jnp.bfloat16)   # (C, 9*Ch)
            entry["bsp"] = bspm.reshape(C, 1)
        levels.append(entry)
    return {"levels": levels, "logdet_const": float(logdet_const), "B": B}


# ----------------------------------------------------------------------------
# FlowNet encode pass
# ----------------------------------------------------------------------------

def squeeze2x2_cbhw(z):
    # Same channel ordering as the NCHW SqueezeLayer, in the (C, B, H, W) layout.
    C, B, H, W = z.shape
    z = z.reshape(C, B, H // 2, 2, W // 2, 2)
    z = z.transpose(0, 3, 5, 1, 2, 4)
    return z.reshape(C * 4, B, H // 2, W // 2)


def flownet_encode(x, model):
    B = x.shape[0]
    z = jnp.transpose(x, (1, 0, 2, 3)).astype(jnp.float32)   # (C, B, H, W)
    logdet = jnp.zeros((B,), jnp.float32)
    for lvl in model["levels"]:
        z = squeeze2x2_cbhw(z)
        z, ld = run_level(z, lvl, B)
        logdet = logdet + ld
    z_out = jnp.transpose(z, (1, 0, 2, 3))                   # back to NCHW
    return z_out, logdet + model["logdet_const"]


if __name__ == "__main__":
    key = jax.random.PRNGKey(0)
    kx, kp = jax.random.split(key)

    # Small shapes consistent with the module: image_shape=(C,H,W)=(3,16,16), batch=2.
    B, image_shape = 2, (3, 16, 16)
    hidden_channels, K, L = 32, 2, 2
    d_c, d_s = [4, 4], [4, 4]  # Woodbury latent dims per level (is_me=False -> 2 transforms)

    x = jax.random.normal(kx, (B,) + image_shape, dtype=jnp.float32)
    raw = init_flownet_params(kp, image_shape, hidden_channels, K, L, d_c, d_s)
    model = build_flownet(raw, B, hidden_channels)

    encode = jax.jit(lambda inp: flownet_encode(inp, model))
    z, logdet = encode(x)
    z = jax.block_until_ready(z)
    logdet = jax.block_until_ready(logdet)

    assert z.shape == (B, 24, 4, 4), z.shape      # level-2 output: (-1, C*16//2, H//4, W//4)
    assert logdet.shape == (B,), logdet.shape
    assert bool(jnp.all(jnp.isfinite(z))) and bool(jnp.all(jnp.isfinite(logdet)))
    print("KERNEL_OK")
</pallas_src>

<mosaic_0001>
module attributes {stable_mosaic.version = 11 : i64} {
  func.func @_level_kernel(%arg0: memref<12x128xf32, #tpu.memory_space<vmem>>, %arg1: memref<9x1x128xf32, #tpu.memory_space<vmem>>, %arg2: memref<2x12x12xf32, #tpu.memory_space<vmem>>, %arg3: memref<2x12x1xf32, #tpu.memory_space<vmem>>, %arg4: memref<2x128x8xf32, #tpu.memory_space<vmem>>, %arg5: memref<2x8x128xf32, #tpu.memory_space<vmem>>, %arg6: memref<2x32x54xbf16, #tpu.memory_space<vmem>>, %arg7: memref<2x32x1xf32, #tpu.memory_space<vmem>>, %arg8: memref<2x32x32xbf16, #tpu.memory_space<vmem>>, %arg9: memref<2x32x1xf32, #tpu.memory_space<vmem>>, %arg10: memref<2x12x288xbf16, #tpu.memory_space<vmem>>, %arg11: memref<2x12x1xf32, #tpu.memory_space<vmem>>, %arg12: memref<12x54xbf16, #tpu.memory_space<vmem>>, %arg13: memref<12x1xf32, #tpu.memory_space<vmem>>, %arg14: memref<128x128xf32, #tpu.memory_space<vmem>>, %arg15: memref<6x128xf32, #tpu.memory_space<vmem>>, %arg16: memref<1x128xf32, #tpu.memory_space<vmem>>) attributes {dimension_semantics = [], scalar_prefetch = 0 : i64, scratch_operands = 0 : i64, tpu.core_type = #tpu.core_type<tc>} {
    %c0 = arith.constant 0 : index
    %c0_0 = arith.constant 0 : index
    %0 = vector.load %arg0[%c0, %c0_0] : memref<12x128xf32, #tpu.memory_space<vmem>>, vector<12x128xf32>
    %cst = arith.constant 0.000000e+00 : f32
    %1 = vector.broadcast %cst : f32 to vector<1x128xf32>
    %c0_1 = arith.constant 0 : index
    %c0_2 = arith.constant 0 : index
    %c0_3 = arith.constant 0 : index
    %2 = vector.load %arg2[%c0_1, %c0_2, %c0_3] : memref<2x12x12xf32, #tpu.memory_space<vmem>>, vector<1x12x12xf32>
    %3 = vector.shape_cast %2 : vector<1x12x12xf32> to vector<12x12xf32>
    %cst_4 = arith.constant dense<0.000000e+00> : vector<12x128xf32>
    %4 = tpu.matmul %3, %0, %cst_4 {dimension_numbers = #tpu.dot_dimension_numbers<[1], [0], [0], [1], [0, 0, 1, 1], [], []>} : vector<12x12xf32>, vector<12x128xf32>, vector<12x128xf32> -> vector<12x128xf32>
    %c0_5 = arith.constant 0 : index
    %c0_6 = arith.constant 0 : index
    %c0_7 = arith.constant 0 : index
    %5 = vector.load %arg3[%c0_5, %c0_6, %c0_7] : memref<2x12x1xf32, #tpu.memory_space<vmem>>, vector<1x12x1xf32>
    %6 = vector.shape_cast %5 : vector<1x12x1xf32> to vector<12x1xf32>
    %7 = vector.broadcast %6 : vector<12x1xf32> to vector<12x128xf32>
    %8 = arith.addf %4, %7 : vector<12x128xf32>
    %c0_8 = arith.constant 0 : index
    %c0_9 = arith.constant 0 : index
    %c0_10 = arith.constant 0 : index
    %9 = vector.load %arg4[%c0_8, %c0_9, %c0_10] : memref<2x128x8xf32, #tpu.memory_space<vmem>>, vector<1x128x8xf32>
    %10 = vector.shape_cast %9 : vector<1x128x8xf32> to vector<128x8xf32>
    %cst_11 = arith.constant dense<0.000000e+00> : vector<12x8xf32>
    %11 = tpu.matmul %8, %10, %cst_11 {dimension_numbers = #tpu.dot_dimension_numbers<[1], [0], [0], [1], [0, 0, 1, 1], [], []>} : vector<12x128xf32>, vector<128x8xf32>, vector<12x8xf32> -> vector<12x8xf32>
    %c0_12 = arith.constant 0 : index
    %c0_13 = arith.constant 0 : index
    %c0_14 = arith.constant 0 : index
    %12 = vector.load %arg5[%c0_12, %c0_13, %c0_14] : memref<2x8x128xf32, #tpu.memory_space<vmem>>, vector<1x8x128xf32>
    %13 = vector.shape_cast %12 : vector<1x8x128xf32> to vector<8x128xf32>
    %cst_15 = arith.constant dense<0.000000e+00> : vector<12x128xf32>
    %14 = tpu.matmul %11, %13, %cst_15 {dimension_numbers = #tpu.dot_dimension_numbers<[1], [0], [0], [1], [0, 0, 1, 1], [], []>} : vector<12x8xf32>, vector<8x128xf32>, vector<12x128xf32> -> vector<12x128xf32>
    %15 = arith.addf %8, %14 : vector<12x128xf32>
    %16 = vector.extract_strided_slice %15 {offsets = [0, 0], sizes = [6, 128], strides = [1, 1]} : vector<12x128xf32> to vector<6x128xf32>
    %17 = vector.extract_strided_slice %15 {offsets = [6, 0], sizes = [6, 128], strides = [1, 1]} : vector<12x128xf32> to vector<6x128xf32>
    %c9_i32 = arith.constant 9 : i32
    %18 = tpu.dynamic_rotate %16 by %c9_i32 dim 1 : vector<6x128xf32>, i32 -> vector<6x128xf32>
    %c0_16 = arith.constant 0 : index
    %c0_17 = arith.constant 0 : index
    %c0_18 = arith.constant 0 : index
    %19 = vector.load %arg1[%c0_16, %c0_17, %c0_18] : memref<9x1x128xf32, #tpu.memory_space<vmem>>, vector<1x1x128xf32>
    %20 = vector.shape_cast %19 : vector<1x1x128xf32> to vector<1x128xf32>
    %21 = vector.broadcast %20 : vector<1x128xf32> to vector<6x128xf32>
    %22 = arith.mulf %18, %21 : vector<6x128xf32>
    %c8_i32 = arith.constant 8 : i32
    %23 = tpu.dynamic_rotate %16 by %c8_i32 dim 1 : vector<6x128xf32>, i32 -> vector<6x128xf32>
    %c1 = arith.constant 1 : index
    %c0_19 = arith.constant 0 : index
    %c0_20 = arith.constant 0 : index
    %24 = vector.load %arg1[%c1, %c0_19, %c0_20] : memref<9x1x128xf32, #tpu.memory_space<vmem>>, vector<1x1x128xf32>
    %25 = vector.shape_cast %24 : vector<1x1x128xf32> to vector<1x128xf32>
    %26 = vector.broadcast %25 : vector<1x128xf32> to vector<6x128xf32>
    %27 = arith.mulf %23, %26 : vector<6x128xf32>
    %c7_i32 = arith.constant 7 : i32
    %28 = tpu.dynamic_rotate %16 by %c7_i32 dim 1 : vector<6x128xf32>, i32 -> vector<6x128xf32>
    %c2 = arith.constant 2 : index
    %c0_21 = arith.constant 0 : index
    %c0_22 = arith.constant 0 : index
    %29 = vector.load %arg1[%c2, %c0_21, %c0_22] : memref<9x1x128xf32, #tpu.memory_space<vmem>>, vector<1x1x128xf32>
    %30 = vector.shape_cast %29 : vector<1x1x128xf32> to vector<1x128xf32>
    %31 = vector.broadcast %30 : vector<1x128xf32> to vector<6x128xf32>
    %32 = arith.mulf %28, %31 : vector<6x128xf32>
    %c1_i32 = arith.constant 1 : i32
    %33 = tpu.dynamic_rotate %16 by %c1_i32 dim 1 : vector<6x128xf32>, i32 -> vector<6x128xf32>
    %c3 = arith.constant 3 : index
    %c0_23 = arith.constant 0 : index
    %c0_24 = arith.constant 0 : index
    %34 = vector.load %arg1[%c3, %c0_23, %c0_24] : memref<9x1x128xf32, #tpu.memory_space<vmem>>, vector<1x1x128xf32>
    %35 = vector.shape_cast %34 : vector<1x1x128xf32> to vector<1x128xf32>
    %36 = vector.broadcast %35 : vector<1x128xf32> to vector<6x128xf32>
    %37 = arith.mulf %33, %36 : vector<6x128xf32>
    %c127_i32 = arith.constant 127 : i32
    %38 = tpu.dynamic_rotate %16 by %c127_i32 dim 1 : vector<6x128xf32>, i32 -> vector<6x128xf32>
    %c5 = arith.constant 5 : index
    %c0_25 = arith.constant 0 : index
    %c0_26 = arith.constant 0 : index
    %39 = vector.load %arg1[%c5, %c0_25, %c0_26] : memref<9x1x128xf32, #tpu.memory_space<vmem>>, vector<1x1x128xf32>
    %40 = vector.shape_cast %39 : vector<1x1x128xf32> to vector<1x128xf32>
    %41 = vector.broadcast %40 : vector<1x128xf32> to vector<6x128xf32>
    %42 = arith.mulf %38, %41 : vector<6x128xf32>
    %c121_i32 = arith.constant 121 : i32
    %43 = tpu.dynamic_rotate %16 by %c121_i32 dim 1 : vector<6x128xf32>, i32 -> vector<6x128xf32>
    %c6 = arith.constant 6 : index
    %c0_27 = arith.constant 0 : index
    %c0_28 = arith.constant 0 : index
    %44 = vector.load %arg1[%c6, %c0_27, %c0_28] : memref<9x1x128xf32, #tpu.memory_space<vmem>>, vector<1x1x128xf32>
    %45 = vector.shape_cast %44 : vector<1x1x128xf32> to vector<1x128xf32>
    %46 = vector.broadcast %45 : vector<1x128xf32> to vector<6x128xf32>
    %47 = arith.mulf %43, %46 : vector<6x128xf32>
    %c120_i32 = arith.constant 120 : i32
    %48 = tpu.dynamic_rotate %16 by %c120_i32 dim 1 : vector<6x128xf32>, i32 -> vector<6x128xf32>
    %c7 = arith.constant 7 : index
    %c0_29 = arith.constant 0 : index
    %c0_30 = arith.constant 0 : index
    %49 = vector.load %arg1[%c7, %c0_29, %c0_30] : memref<9x1x128xf32, #tpu.memory_space<vmem>>, vector<1x1x128xf32>
    %50 = vector.shape_cast %49 : vector<1x1x128xf32> to vector<1x128xf32>
    %51 = vector.broadcast %50 : vector<1x128xf32> to vector<6x128xf32>
    %52 = arith.mulf %48, %51 : vector<6x128xf32>
    %c119_i32 = arith.constant 119 : i32
    %53 = tpu.dynamic_rotate %16 by %c119_i32 dim 1 : vector<6x128xf32>, i32 -> vector<6x128xf32>
    %c8 = arith.constant 8 : index
    %c0_31 = arith.constant 0 : index
    %c0_32 = arith.constant 0 : index
    %54 = vector.load %arg1[%c8, %c0_31, %c0_32] : memref<9x1x128xf32, #tpu.memory_space<vmem>>, vector<1x1x128xf32>
    %55 = vector.shape_cast %54 : vector<1x1x128xf32> to vector<1x128xf32>
    %56 = vector.broadcast %55 : vector<1x128xf32> to vector<6x128xf32>
    %57 = arith.mulf %53, %56 : vector<6x128xf32>
    %58 = tpu.concatenate %22, %27, %32, %37, %16, %42, %47, %52, %57 in 0 : vector<6x128xf32>, vector<6x128xf32>, vector<6x128xf32>, vector<6x128xf32>, vector<6x128xf32>, vector<6x128xf32>, vector<6x128xf32>, vector<6x128xf32>, vector<6x128xf32> -> vector<54x128xf32>
    %59 = arith.truncf %58 : vector<54x128xf32> to vector<54x128xbf16>
    %c0_33 = arith.constant 0 : index
    %c0_34 = arith.constant 0 : index
    %c0_35 = arith.constant 0 : index
    %60 = vector.load %arg6[%c0_33, %c0_34, %c0_35] : memref<2x32x54xbf16, #tpu.memory_space<vmem>>, vector<1x32x54xbf16>
    %61 = vector.shape_cast %60 : vector<1x32x54xbf16> to vector<32x54xbf16>
    %cst_36 = arith.constant dense<0.000000e+00> : vector<32x128xf32>
    %62 = tpu.matmul %61, %59, %cst_36 {dimension_numbers = #tpu.dot_dimension_numbers<[1], [0], [0], [1], [0, 0, 1, 1], [], []>} : vector<32x54xbf16>, vector<54x128xbf16>, vector<32x128xf32> -> vector<32x128xf32>
    %c0_37 = arith.constant 0 : index
    %c0_38 = arith.constant 0 : index
    %c0_39 = arith.constant 0 : index
    %63 = vector.load %arg7[%c0_37, %c0_38, %c0_39] : memref<2x32x1xf32, #tpu.memory_space<vmem>>, vector<1x32x1xf32>
    %64 = vector.shape_cast %63 : vector<1x32x1xf32> to vector<32x1xf32>
    %65 = vector.broadcast %64 : vector<32x1xf32> to vector<32x128xf32>
    %66 = arith.addf %62, %65 : vector<32x128xf32>
    %cst_40 = arith.constant 0.000000e+00 : f32
    %67 = vector.broadcast %cst_40 : f32 to vector<32x128xf32>
    %68 = arith.maximumf %66, %67 : vector<32x128xf32>
    %c0_41 = arith.constant 0 : index
    %c0_42 = arith.constant 0 : index
    %c0_43 = arith.constant 0 : index
    %69 = vector.load %arg8[%c0_41, %c0_42, %c0_43] : memref<2x32x32xbf16, #tpu.memory_space<vmem>>, vector<1x32x32xbf16>
    %70 = vector.shape_cast %69 : vector<1x32x32xbf16> to vector<32x32xbf16>
    %71 = arith.truncf %68 : vector<32x128xf32> to vector<32x128xbf16>
    %cst_44 = arith.constant dense<0.000000e+00> : vector<32x128xf32>
    %72 = tpu.matmul %70, %71, %cst_44 {dimension_numbers = #tpu.dot_dimension_numbers<[1], [0], [0], [1], [0, 0, 1, 1], [], []>} : vector<32x32xbf16>, vector<32x128xbf16>, vector<32x128xf32> -> vector<32x128xf32>
    %c0_45 = arith.constant 0 : index
    %c0_46 = arith.constant 0 : index
    %c0_47 = arith.constant 0 : index
    %73 = vector.load %arg9[%c0_45, %c0_46, %c0_47] : memref<2x32x1xf32, #tpu.memory_space<vmem>>, vector<1x32x1xf32>
    %74 = vector.shape_cast %73 : vector<1x32x1xf32> to vector<32x1xf32>
    %75 = vector.broadcast %74 : vector<32x1xf32> to vector<32x128xf32>
    %76 = arith.addf %72, %75 : vector<32x128xf32>
    %cst_48 = arith.constant 0.000000e+00 : f32
    %77 = vector.broadcast %cst_48 : f32 to vector<32x128xf32>
    %78 = arith.maximumf %76, %77 : vector<32x128xf32>
    %c9_i32_49 = arith.constant 9 : i32
    %79 = tpu.dynamic_rotate %78 by %c9_i32_49 dim 1 : vector<32x128xf32>, i32 -> vector<32x128xf32>
    %c0_50 = arith.constant 0 : index
    %c0_51 = arith.constant 0 : index
    %c0_52 = arith.constant 0 : index
    %80 = vector.load %arg1[%c0_50, %c0_51, %c0_52] : memref<9x1x128xf32, #tpu.memory_space<vmem>>, vector<1x1x128xf32>
    %81 = vector.shape_cast %80 : vector<1x1x128xf32> to vector<1x128xf32>
    %82 = vector.broadcast %81 : vector<1x128xf32> to vector<32x128xf32>
    %83 = arith.mulf %79, %82 : vector<32x128xf32>
    %c8_i32_53 = arith.constant 8 : i32
    %84 = tpu.dynamic_rotate %78 by %c8_i32_53 dim 1 : vector<32x128xf32>, i32 -> vector<32x128xf32>
    %c1_54 = arith.constant 1 : index
    %c0_55 = arith.constant 0 : index
    %c0_56 = arith.constant 0 : index
    %85 = vector.load %arg1[%c1_54, %c0_55, %c0_56] : memref<9x1x128xf32, #tpu.memory_space<vmem>>, vector<1x1x128xf32>
    %86 = vector.shape_cast %85 : vector<1x1x128xf32> to vector<1x128xf32>
    %87 = vector.broadcast %86 : vector<1x128xf32> to vector<32x128xf32>
    %88 = arith.mulf %84, %87 : vector<32x128xf32>
    %c7_i32_57 = arith.constant 7 : i32
    %89 = tpu.dynamic_rotate %78 by %c7_i32_57 dim 1 : vector<32x128xf32>, i32 -> vector<32x128xf32>
    %c2_58 = arith.constant 2 : index
    %c0_59 = arith.constant 0 : index
    %c0_60 = arith.constant 0 : index
    %90 = vector.load %arg1[%c2_58, %c0_59, %c0_60] : memref<9x1x128xf32, #tpu.memory_space<vmem>>, vector<1x1x128xf32>
    %91 = vector.shape_cast %90 : vector<1x1x128xf32> to vector<1x128xf32>
    %92 = vector.broadcast %91 : vector<1x128xf32> to vector<32x128xf32>
    %93 = arith.mulf %89, %92 : vector<32x128xf32>
    %c1_i32_61 = arith.constant 1 : i32
    %94 = tpu.dynamic_rotate %78 by %c1_i32_61 dim 1 : vector<32x128xf32>, i32 -> vector<32x128xf32>
    %c3_62 = arith.constant 3 : index
    %c0_63 = arith.constant 0 : index
    %c0_64 = arith.constant 0 : index
    %95 = vector.load %arg1[%c3_62, %c0_63, %c0_64] : memref<9x1x128xf32, #tpu.memory_space<vmem>>, vector<1x1x128xf32>
    %96 = vector.shape_cast %95 : vector<1x1x128xf32> to vector<1x128xf32>
    %97 = vector.broadcast %96 : vector<1x128xf32> to vector<32x128xf32>
    %98 = arith.mulf %94, %97 : vector<32x128xf32>
    %c127_i32_65 = arith.constant 127 : i32
    %99 = tpu.dynamic_rotate %78 by %c127_i32_65 dim 1 : vector<32x128xf32>, i32 -> vector<32x128xf32>
    %c5_66 = arith.constant 5 : index
    %c0_67 = arith.constant 0 : index
    %c0_68 = arith.constant 0 : index
    %100 = vector.load %arg1[%c5_66, %c0_67, %c0_68] : memref<9x1x128xf32, #tpu.memory_space<vmem>>, vector<1x1x128xf32>
    %101 = vector.shape_cast %100 : vector<1x1x128xf32> to vector<1x128xf32>
    %102 = vector.broadcast %101 : vector<1x128xf32> to vector<32x128xf32>
    %103 = arith.mulf %99, %102 : vector<32x128xf32>
    %c121_i32_69 = arith.constant 121 : i32
    %104 = tpu.dynamic_rotate %78 by %c121_i32_69 dim 1 : vector<32x128xf32>, i32 -> vector<32x128xf32>
    %c6_70 = arith.constant 6 : index
    %c0_71 = arith.constant 0 : index
    %c0_72 = arith.constant 0 : index
    %105 = vector.load %arg1[%c6_70, %c0_71, %c0_72] : memref<9x1x128xf32, #tpu.memory_space<vmem>>, vector<1x1x128xf32>
    %106 = vector.shape_cast %105 : vector<1x1x128xf32> to vector<1x128xf32>
    %107 = vector.broadcast %106 : vector<1x128xf32> to vector<32x128xf32>
    %108 = arith.mulf %104, %107 : vector<32x128xf32>
    %c120_i32_73 = arith.constant 120 : i32
    %109 = tpu.dynamic_rotate %78 by %c120_i32_73 dim 1 : vector<32x128xf32>, i32 -> vector<32x128xf32>
    %c7_74 = arith.constant 7 : index
    %c0_75 = arith.constant 0 : index
    %c0_76 = arith.constant 0 : index
    %110 = vector.load %arg1[%c7_74, %c0_75, %c0_76] : memref<9x1x128xf32, #tpu.memory_space<vmem>>, vector<1x1x128xf32>
    %111 = vector.shape_cast %110 : vector<1x1x128xf32> to vector<1x128xf32>
    %112 = vector.broadcast %111 : vector<1x128xf32> to vector<32x128xf32>
    %113 = arith.mulf %109, %112 : vector<32x128xf32>
    %c119_i32_77 = arith.constant 119 : i32
    %114 = tpu.dynamic_rotate %78 by %c119_i32_77 dim 1 : vector<32x128xf32>, i32 -> vector<32x128xf32>
    %c8_78 = arith.constant 8 : index
    %c0_79 = arith.constant 0 : index
    %c0_80 = arith.constant 0 : index
    %115 = vector.load %arg1[%c8_78, %c0_79, %c0_80] : memref<9x1x128xf32, #tpu.memory_space<vmem>>, vector<1x1x128xf32>
    %116 = vector.shape_cast %115 : vector<1x1x128xf32> to vector<1x128xf32>
    %117 = vector.broadcast %116 : vector<1x128xf32> to vector<32x128xf32>
    %118 = arith.mulf %114, %117 : vector<32x128xf32>
    %119 = tpu.concatenate %83, %88, %93, %98, %78, %103, %108, %113, %118 in 0 : vector<32x128xf32>, vector<32x128xf32>, vector<32x128xf32>, vector<32x128xf32>, vector<32x128xf32>, vector<32x128xf32>, vector<32x128xf32>, vector<32x128xf32>, vector<32x128xf32> -> vector<288x128xf32>
    %120 = arith.truncf %119 : vector<288x128xf32> to vector<288x128xbf16>
    %c0_81 = arith.constant 0 : index
    %c0_82 = arith.constant 0 : index
    %c0_83 = arith.constant 0 : index
    %121 = vector.load %arg10[%c0_81, %c0_82, %c0_83] : memref<2x12x288xbf16, #tpu.memory_space<vmem>>, vector<1x12x288xbf16>
    %122 = vector.shape_cast %121 : vector<1x12x288xbf16> to vector<12x288xbf16>
    %cst_84 = arith.constant dense<0.000000e+00> : vector<12x128xf32>
    %123 = tpu.matmul %122, %120, %cst_84 {dimension_numbers = #tpu.dot_dimension_numbers<[1], [0], [0], [1], [0, 0, 1, 1], [], []>} : vector<12x288xbf16>, vector<288x128xbf16>, vector<12x128xf32> -> vector<12x128xf32>
    %c0_85 = arith.constant 0 : index
    %c0_86 = arith.constant 0 : index
    %c0_87 = arith.constant 0 : index
    %124 = vector.load %arg11[%c0_85, %c0_86, %c0_87] : memref<2x12x1xf32, #tpu.memory_space<vmem>>, vector<1x12x1xf32>
    %125 = vector.shape_cast %124 : vector<1x12x1xf32> to vector<12x1xf32>
    %126 = vector.broadcast %125 : vector<12x1xf32> to vector<12x128xf32>
    %127 = arith.addf %123, %126 : vector<12x128xf32>
    %128 = vector.extract_strided_slice %127 {offsets = [0, 0], sizes = [6, 128], strides = [1, 1]} : vector<12x128xf32> to vector<6x128xf32>
    %129 = vector.extract_strided_slice %127 {offsets = [6, 0], sizes = [6, 128], strides = [1, 1]} : vector<12x128xf32> to vector<6x128xf32>
    %cst_88 = arith.constant 2.000000e+00 : f32
    %130 = vector.broadcast %cst_88 : f32 to vector<6x128xf32>
    %131 = arith.addf %129, %130 : vector<6x128xf32>
    %132 = math.absf %131 : vector<6x128xf32>
    %cst_89 = arith.constant 0.000000e+00 : f32
    %133 = vector.broadcast %cst_89 : f32 to vector<6x128xf32>
    %134 = arith.subf %133, %132 : vector<6x128xf32>
    %135 = math.exp %134 : vector<6x128xf32>
    %cst_90 = arith.constant 1.000000e+00 : f32
    %136 = vector.broadcast %cst_90 : f32 to vector<6x128xf32>
    %137 = arith.addf %136, %135 : vector<6x128xf32>
    %cst_91 = arith.constant 0.000000e+00 : f32
    %138 = vector.broadcast %cst_91 : f32 to vector<6x128xf32>
    %139 = arith.minimumf %131, %138 : vector<6x128xf32>
    %140 = math.log %137 : vector<6x128xf32>
    %141 = arith.subf %139, %140 : vector<6x128xf32>
    %cst_92 = arith.constant 0.000000e+00 : f32
    %142 = vector.broadcast %cst_92 : f32 to vector<6x128xf32>
    %143 = arith.cmpf olt, %131, %142 : vector<6x128xf32>
    %cst_93 = arith.constant 1.000000e+00 : f32
    %144 = vector.broadcast %cst_93 : f32 to vector<6x128xf32>
    %145 = arith.select %143, %135, %144 : vector<6x128xi1>, vector<6x128xf32>
    %146 = tpu.reciprocal %137 {approx = true} : vector<6x128xf32> -> vector<6x128xf32>
    %147 = arith.mulf %145, %146 : vector<6x128xf32>
    %148 = arith.addf %17, %128 : vector<6x128xf32>
    %149 = arith.mulf %148, %147 : vector<6x128xf32>
    %cst_94 = arith.constant dense<0.000000e+00> : vector<128xf32>
    %150 = vector.multi_reduction <add>, %141, %cst_94 [0] : vector<6x128xf32> to vector<128xf32>
    %151 = vector.shape_cast %150 : vector<128xf32> to vector<1x128xf32>
    %152 = arith.addf %1, %151 : vector<1x128xf32>
    %153 = tpu.concatenate %16, %149 in 0 : vector<6x128xf32>, vector<6x128xf32> -> vector<12x128xf32>
    %c1_95 = arith.constant 1 : index
    %c0_96 = arith.constant 0 : index
    %c0_97 = arith.constant 0 : index
    %154 = vector.load %arg2[%c1_95, %c0_96, %c0_97] : memref<2x12x12xf32, #tpu.memory_space<vmem>>, vector<1x12x12xf32>
    %155 = vector.shape_cast %154 : vector<1x12x12xf32> to vector<12x12xf32>
    %cst_98 = arith.constant dense<0.000000e+00> : vector<12x128xf32>
    %156 = tpu.matmul %155, %153, %cst_98 {dimension_numbers = #tpu.dot_dimension_numbers<[1], [0], [0], [1], [0, 0, 1, 1], [], []>} : vector<12x12xf32>, vector<12x128xf32>, vector<12x128xf32> -> vector<12x128xf32>
    %c1_99 = arith.constant 1 : index
    %c0_100 = arith.constant 0 : index
    %c0_101 = arith.constant 0 : index
    %157 = vector.load %arg3[%c1_99, %c0_100, %c0_101] : memref<2x12x1xf32, #tpu.memory_space<vmem>>, vector<1x12x1xf32>
    %158 = vector.shape_cast %157 : vector<1x12x1xf32> to vector<12x1xf32>
    %159 = vector.broadcast %158 : vector<12x1xf32> to vector<12x128xf32>
    %160 = arith.addf %156, %159 : vector<12x128xf32>
    %c1_102 = arith.constant 1 : index
    %c0_103 = arith.constant 0 : index
    %c0_104 = arith.constant 0 : index
    %161 = vector.load %arg4[%c1_102, %c0_103, %c0_104] : memref<2x128x8xf32, #tpu.memory_space<vmem>>, vector<1x128x8xf32>
    %162 = vector.shape_cast %161 : vector<1x128x8xf32> to vector<128x8xf32>
    %cst_105 = arith.constant dense<0.000000e+00> : vector<12x8xf32>
    %163 = tpu.matmul %160, %162, %cst_105 {dimension_numbers = #tpu.dot_dimension_numbers<[1], [0], [0], [1], [0, 0, 1, 1], [], []>} : vector<12x128xf32>, vector<128x8xf32>, vector<12x8xf32> -> vector<12x8xf32>
    %c1_106 = arith.constant 1 : index
    %c0_107 = arith.constant 0 : index
    %c0_108 = arith.constant 0 : index
    %164 = vector.load %arg5[%c1_106, %c0_107, %c0_108] : memref<2x8x128xf32, #tpu.memory_space<vmem>>, vector<1x8x128xf32>
    %165 = vector.shape_cast %164 : vector<1x8x128xf32> to vector<8x128xf32>
    %cst_109 = arith.constant dense<0.000000e+00> : vector<12x128xf32>
    %166 = tpu.matmul %163, %165, %cst_109 {dimension_numbers = #tpu.dot_dimension_numbers<[1], [0], [0], [1], [0, 0, 1, 1], [], []>} : vector<12x8xf32>, vector<8x128xf32>, vector<12x128xf32> -> vector<12x128xf32>
    %167 = arith.addf %160, %166 : vector<12x128xf32>
    %168 = vector.extract_strided_slice %167 {offsets = [0, 0], sizes = [6, 128], strides = [1, 1]} : vector<12x128xf32> to vector<6x128xf32>
    %169 = vector.extract_strided_slice %167 {offsets = [6, 0], sizes = [6, 128], strides = [1, 1]} : vector<12x128xf32> to vector<6x128xf32>
    %c9_i32_110 = arith.constant 9 : i32
    %170 = tpu.dynamic_rotate %168 by %c9_i32_110 dim 1 : vector<6x128xf32>, i32 -> vector<6x128xf32>
    %c0_111 = arith.constant 0 : index
    %c0_112 = arith.constant 0 : index
    %c0_113 = arith.constant 0 : index
    %171 = vector.load %arg1[%c0_111, %c0_112, %c0_113] : memref<9x1x128xf32, #tpu.memory_space<vmem>>, vector<1x1x128xf32>
    %172 = vector.shape_cast %171 : vector<1x1x128xf32> to vector<1x128xf32>
    %173 = vector.broadcast %172 : vector<1x128xf32> to vector<6x128xf32>
    %174 = arith.mulf %170, %173 : vector<6x128xf32>
    %c8_i32_114 = arith.constant 8 : i32
    %175 = tpu.dynamic_rotate %168 by %c8_i32_114 dim 1 : vector<6x128xf32>, i32 -> vector<6x128xf32>
    %c1_115 = arith.constant 1 : index
    %c0_116 = arith.constant 0 : index
    %c0_117 = arith.constant 0 : index
    %176 = vector.load %arg1[%c1_115, %c0_116, %c0_117] : memref<9x1x128xf32, #tpu.memory_space<vmem>>, vector<1x1x128xf32>
    %177 = vector.shape_cast %176 : vector<1x1x128xf32> to vector<1x128xf32>
    %178 = vector.broadcast %177 : vector<1x128xf32> to vector<6x128xf32>
    %179 = arith.mulf %175, %178 : vector<6x128xf32>
    %c7_i32_118 = arith.constant 7 : i32
    %180 = tpu.dynamic_rotate %168 by %c7_i32_118 dim 1 : vector<6x128xf32>, i32 -> vector<6x128xf32>
    %c2_119 = arith.constant 2 : index
    %c0_120 = arith.constant 0 : index
    %c0_121 = arith.constant 0 : index
    %181 = vector.load %arg1[%c2_119, %c0_120, %c0_121] : memref<9x1x128xf32, #tpu.memory_space<vmem>>, vector<1x1x128xf32>
    %182 = vector.shape_cast %181 : vector<1x1x128xf32> to vector<1x128xf32>
    %183 = vector.broadcast %182 : vector<1x128xf32> to vector<6x128xf32>
    %184 = arith.mulf %180, %183 : vector<6x128xf32>
    %c1_i32_122 = arith.constant 1 : i32
    %185 = tpu.dynamic_rotate %168 by %c1_i32_122 dim 1 : vector<6x128xf32>, i32 -> vector<6x128xf32>
    %c3_123 = arith.constant 3 : index
    %c0_124 = arith.constant 0 : index
    %c0_125 = arith.constant 0 : index
    %186 = vector.load %arg1[%c3_123, %c0_124, %c0_125] : memref<9x1x128xf32, #tpu.memory_space<vmem>>, vector<1x1x128xf32>
    %187 = vector.shape_cast %186 : vector<1x1x128xf32> to vector<1x128xf32>
    %188 = vector.broadcast %187 : vector<1x128xf32> to vector<6x128xf32>
    %189 = arith.mulf %185, %188 : vector<6x128xf32>
    %c127_i32_126 = arith.constant 127 : i32
    %190 = tpu.dynamic_rotate %168 by %c127_i32_126 dim 1 : vector<6x128xf32>, i32 -> vector<6x128xf32>
    %c5_127 = arith.constant 5 : index
    %c0_128 = arith.constant 0 : index
    %c0_129 = arith.constant 0 : index
    %191 = vector.load %arg1[%c5_127, %c0_128, %c0_129] : memref<9x1x128xf32, #tpu.memory_space<vmem>>, vector<1x1x128xf32>
    %192 = vector.shape_cast %191 : vector<1x1x128xf32> to vector<1x128xf32>
    %193 = vector.broadcast %192 : vector<1x128xf32> to vector<6x128xf32>
    %194 = arith.mulf %190, %193 : vector<6x128xf32>
    %c121_i32_130 = arith.constant 121 : i32
    %195 = tpu.dynamic_rotate %168 by %c121_i32_130 dim 1 : vector<6x128xf32>, i32 -> vector<6x128xf32>
    %c6_131 = arith.constant 6 : index
    %c0_132 = arith.constant 0 : index
    %c0_133 = arith.constant 0 : index
    %196 = vector.load %arg1[%c6_131, %c0_132, %c0_133] : memref<9x1x128xf32, #tpu.memory_space<vmem>>, vector<1x1x128xf32>
    %197 = vector.shape_cast %196 : vector<1x1x128xf32> to vector<1x128xf32>
    %198 = vector.broadcast %197 : vector<1x128xf32> to vector<6x128xf32>
    %199 = arith.mulf %195, %198 : vector<6x128xf32>
    %c120_i32_134 = arith.constant 120 : i32
    %200 = tpu.dynamic_rotate %168 by %c120_i32_134 dim 1 : vector<6x128xf32>, i32 -> vector<6x128xf32>
    %c7_135 = arith.constant 7 : index
    %c0_136 = arith.constant 0 : index
    %c0_137 = arith.constant 0 : index
    %201 = vector.load %arg1[%c7_135, %c0_136, %c0_137] : memref<9x1x128xf32, #tpu.memory_space<vmem>>, vector<1x1x128xf32>
    %202 = vector.shape_cast %201 : vector<1x1x128xf32> to vector<1x128xf32>
    %203 = vector.broadcast %202 : vector<1x128xf32> to vector<6x128xf32>
    %204 = arith.mulf %200, %203 : vector<6x128xf32>
    %c119_i32_138 = arith.constant 119 : i32
    %205 = tpu.dynamic_rotate %168 by %c119_i32_138 dim 1 : vector<6x128xf32>, i32 -> vector<6x128xf32>
    %c8_139 = arith.constant 8 : index
    %c0_140 = arith.constant 0 : index
    %c0_141 = arith.constant 0 : index
    %206 = vector.load %arg1[%c8_139, %c0_140, %c0_141] : memref<9x1x128xf32, #tpu.memory_space<vmem>>, vector<1x1x128xf32>
    %207 = vector.shape_cast %206 : vector<1x1x128xf32> to vector<1x128xf32>
    %208 = vector.broadcast %207 : vector<1x128xf32> to vector<6x128xf32>
    %209 = arith.mulf %205, %208 : vector<6x128xf32>
    %210 = tpu.concatenate %174, %179, %184, %189, %168, %194, %199, %204, %209 in 0 : vector<6x128xf32>, vector<6x128xf32>, vector<6x128xf32>, vector<6x128xf32>, vector<6x128xf32>, vector<6x128xf32>, vector<6x128xf32>, vector<6x128xf32>, vector<6x128xf32> -> vector<54x128xf32>
    %211 = arith.truncf %210 : vector<54x128xf32> to vector<54x128xbf16>
    %c1_142 = arith.constant 1 : index
    %c0_143 = arith.constant 0 : index
    %c0_144 = arith.constant 0 : index
    %212 = vector.load %arg6[%c1_142, %c0_143, %c0_144] : memref<2x32x54xbf16, #tpu.memory_space<vmem>>, vector<1x32x54xbf16>
    %213 = vector.shape_cast %212 : vector<1x32x54xbf16> to vector<32x54xbf16>
    %cst_145 = arith.constant dense<0.000000e+00> : vector<32x128xf32>
    %214 = tpu.matmul %213, %211, %cst_145 {dimension_numbers = #tpu.dot_dimension_numbers<[1], [0], [0], [1], [0, 0, 1, 1], [], []>} : vector<32x54xbf16>, vector<54x128xbf16>, vector<32x128xf32> -> vector<32x128xf32>
    %c1_146 = arith.constant 1 : index
    %c0_147 = arith.constant 0 : index
    %c0_148 = arith.constant 0 : index
    %215 = vector.load %arg7[%c1_146, %c0_147, %c0_148] : memref<2x32x1xf32, #tpu.memory_space<vmem>>, vector<1x32x1xf32>
    %216 = vector.shape_cast %215 : vector<1x32x1xf32> to vector<32x1xf32>
    %217 = vector.broadcast %216 : vector<32x1xf32> to vector<32x128xf32>
    %218 = arith.addf %214, %217 : vector<32x128xf32>
    %cst_149 = arith.constant 0.000000e+00 : f32
    %219 = vector.broadcast %cst_149 : f32 to vector<32x128xf32>
    %220 = arith.maximumf %218, %219 : vector<32x128xf32>
    %c1_150 = arith.constant 1 : index
    %c0_151 = arith.constant 0 : index
    %c0_152 = arith.constant 0 : index
    %221 = vector.load %arg8[%c1_150, %c0_151, %c0_152] : memref<2x32x32xbf16, #tpu.memory_space<vmem>>, vector<1x32x32xbf16>
    %222 = vector.shape_cast %221 : vector<1x32x32xbf16> to vector<32x32xbf16>
    %223 = arith.truncf %220 : vector<32x128xf32> to vector<32x128xbf16>
    %cst_153 = arith.constant dense<0.000000e+00> : vector<32x128xf32>
    %224 = tpu.matmul %222, %223, %cst_153 {dimension_numbers = #tpu.dot_dimension_numbers<[1], [0], [0], [1], [0, 0, 1, 1], [], []>} : vector<32x32xbf16>, vector<32x128xbf16>, vector<32x128xf32> -> vector<32x128xf32>
    %c1_154 = arith.constant 1 : index
    %c0_155 = arith.constant 0 : index
    %c0_156 = arith.constant 0 : index
    %225 = vector.load %arg9[%c1_154, %c0_155, %c0_156] : memref<2x32x1xf32, #tpu.memory_space<vmem>>, vector<1x32x1xf32>
    %226 = vector.shape_cast %225 : vector<1x32x1xf32> to vector<32x1xf32>
    %227 = vector.broadcast %226 : vector<32x1xf32> to vector<32x128xf32>
    %228 = arith.addf %224, %227 : vector<32x128xf32>
    %cst_157 = arith.constant 0.000000e+00 : f32
    %229 = vector.broadcast %cst_157 : f32 to vector<32x128xf32>
    %230 = arith.maximumf %228, %229 : vector<32x128xf32>
    %c9_i32_158 = arith.constant 9 : i32
    %231 = tpu.dynamic_rotate %230 by %c9_i32_158 dim 1 : vector<32x128xf32>, i32 -> vector<32x128xf32>
    %c0_159 = arith.constant 0 : index
    %c0_160 = arith.constant 0 : index
    %c0_161 = arith.constant 0 : index
    %232 = vector.load %arg1[%c0_159, %c0_160, %c0_161] : memref<9x1x128xf32, #tpu.memory_space<vmem>>, vector<1x1x128xf32>
    %233 = vector.shape_cast %232 : vector<1x1x128xf32> to vector<1x128xf32>
    %234 = vector.broadcast %233 : vector<1x128xf32> to vector<32x128xf32>
    %235 = arith.mulf %231, %234 : vector<32x128xf32>
    %c8_i32_162 = arith.constant 8 : i32
    %236 = tpu.dynamic_rotate %230 by %c8_i32_162 dim 1 : vector<32x128xf32>, i32 -> vector<32x128xf32>
    %c1_163 = arith.constant 1 : index
    %c0_164 = arith.constant 0 : index
    %c0_165 = arith.constant 0 : index
    %237 = vector.load %arg1[%c1_163, %c0_164, %c0_165] : memref<9x1x128xf32, #tpu.memory_space<vmem>>, vector<1x1x128xf32>
    %238 = vector.shape_cast %237 : vector<1x1x128xf32> to vector<1x128xf32>
    %239 = vector.broadcast %238 : vector<1x128xf32> to vector<32x128xf32>
    %240 = arith.mulf %236, %239 : vector<32x128xf32>
    %c7_i32_166 = arith.constant 7 : i32
    %241 = tpu.dynamic_rotate %230 by %c7_i32_166 dim 1 : vector<32x128xf32>, i32 -> vector<32x128xf32>
    %c2_167 = arith.constant 2 : index
    %c0_168 = arith.constant 0 : index
    %c0_169 = arith.constant 0 : index
    %242 = vector.load %arg1[%c2_167, %c0_168, %c0_169] : memref<9x1x128xf32, #tpu.memory_space<vmem>>, vector<1x1x128xf32>
    %243 = vector.shape_cast %242 : vector<1x1x128xf32> to vector<1x128xf32>
    %244 = vector.broadcast %243 : vector<1x128xf32> to vector<32x128xf32>
    %245 = arith.mulf %241, %244 : vector<32x128xf32>
    %c1_i32_170 = arith.constant 1 : i32
    %246 = tpu.dynamic_rotate %230 by %c1_i32_170 dim 1 : vector<32x128xf32>, i32 -> vector<32x128xf32>
    %c3_171 = arith.constant 3 : index
    %c0_172 = arith.constant 0 : index
    %c0_173 = arith.constant 0 : index
    %247 = vector.load %arg1[%c3_171, %c0_172, %c0_173] : memref<9x1x128xf32, #tpu.memory_space<vmem>>, vector<1x1x128xf32>
    %248 = vector.shape_cast %247 : vector<1x1x128xf32> to vector<1x128xf32>
    %249 = vector.broadcast %248 : vector<1x128xf32> to vector<32x128xf32>
    %250 = arith.mulf %246, %249 : vector<32x128xf32>
    %c127_i32_174 = arith.constant 127 : i32
    %251 = tpu.dynamic_rotate %230 by %c127_i32_174 dim 1 : vector<32x128xf32>, i32 -> vector<32x128xf32>
    %c5_175 = arith.constant 5 : index
    %c0_176 = arith.constant 0 : index
    %c0_177 = arith.constant 0 : index
    %252 = vector.load %arg1[%c5_175, %c0_176, %c0_177] : memref<9x1x128xf32, #tpu.memory_space<vmem>>, vector<1x1x128xf32>
    %253 = vector.shape_cast %252 : vector<1x1x128xf32> to vector<1x128xf32>
    %254 = vector.broadcast %253 : vector<1x128xf32> to vector<32x128xf32>
    %255 = arith.mulf %251, %254 : vector<32x128xf32>
    %c121_i32_178 = arith.constant 121 : i32
    %256 = tpu.dynamic_rotate %230 by %c121_i32_178 dim 1 : vector<32x128xf32>, i32 -> vector<32x128xf32>
    %c6_179 = arith.constant 6 : index
    %c0_180 = arith.constant 0 : index
    %c0_181 = arith.constant 0 : index
    %257 = vector.load %arg1[%c6_179, %c0_180, %c0_181] : memref<9x1x128xf32, #tpu.memory_space<vmem>>, vector<1x1x128xf32>
    %258 = vector.shape_cast %257 : vector<1x1x128xf32> to vector<1x128xf32>
    %259 = vector.broadcast %258 : vector<1x128xf32> to vector<32x128xf32>
    %260 = arith.mulf %256, %259 : vector<32x128xf32>
    %c120_i32_182 = arith.constant 120 : i32
    %261 = tpu.dynamic_rotate %230 by %c120_i32_182 dim 1 : vector<32x128xf32>, i32 -> vector<32x128xf32>
    %c7_183 = arith.constant 7 : index
    %c0_184 = arith.constant 0 : index
    %c0_185 = arith.constant 0 : index
    %262 = vector.load %arg1[%c7_183, %c0_184, %c0_185] : memref<9x1x128xf32, #tpu.memory_space<vmem>>, vector<1x1x128xf32>
    %263 = vector.shape_cast %262 : vector<1x1x128xf32> to vector<1x128xf32>
    %264 = vector.broadcast %263 : vector<1x128xf32> to vector<32x128xf32>
    %265 = arith.mulf %261, %264 : vector<32x128xf32>
    %c119_i32_186 = arith.constant 119 : i32
    %266 = tpu.dynamic_rotate %230 by %c119_i32_186 dim 1 : vector<32x128xf32>, i32 -> vector<32x128xf32>
    %c8_187 = arith.constant 8 : index
    %c0_188 = arith.constant 0 : index
    %c0_189 = arith.constant 0 : index
    %267 = vector.load %arg1[%c8_187, %c0_188, %c0_189] : memref<9x1x128xf32, #tpu.memory_space<vmem>>, vector<1x1x128xf32>
    %268 = vector.shape_cast %267 : vector<1x1x128xf32> to vector<1x128xf32>
    %269 = vector.broadcast %268 : vector<1x128xf32> to vector<32x128xf32>
    %270 = arith.mulf %266, %269 : vector<32x128xf32>
    %271 = tpu.concatenate %235, %240, %245, %250, %230, %255, %260, %265, %270 in 0 : vector<32x128xf32>, vector<32x128xf32>, vector<32x128xf32>, vector<32x128xf32>, vector<32x128xf32>, vector<32x128xf32>, vector<32x128xf32>, vector<32x128xf32>, vector<32x128xf32> -> vector<288x128xf32>
    %272 = arith.truncf %271 : vector<288x128xf32> to vector<288x128xbf16>
    %c1_190 = arith.constant 1 : index
    %c0_191 = arith.constant 0 : index
    %c0_192 = arith.constant 0 : index
    %273 = vector.load %arg10[%c1_190, %c0_191, %c0_192] : memref<2x12x288xbf16, #tpu.memory_space<vmem>>, vector<1x12x288xbf16>
    %274 = vector.shape_cast %273 : vector<1x12x288xbf16> to vector<12x288xbf16>
    %cst_193 = arith.constant dense<0.000000e+00> : vector<12x128xf32>
    %275 = tpu.matmul %274, %272, %cst_193 {dimension_numbers = #tpu.dot_dimension_numbers<[1], [0], [0], [1], [0, 0, 1, 1], [], []>} : vector<12x288xbf16>, vector<288x128xbf16>, vector<12x128xf32> -> vector<12x128xf32>
    %c1_194 = arith.constant 1 : index
    %c0_195 = arith.constant 0 : index
    %c0_196 = arith.constant 0 : index
    %276 = vector.load %arg11[%c1_194, %c0_195, %c0_196] : memref<2x12x1xf32, #tpu.memory_space<vmem>>, vector<1x12x1xf32>
    %277 = vector.shape_cast %276 : vector<1x12x1xf32> to vector<12x1xf32>
    %278 = vector.broadcast %277 : vector<12x1xf32> to vector<12x128xf32>
    %279 = arith.addf %275, %278 : vector<12x128xf32>
    %280 = vector.extract_strided_slice %279 {offsets = [0, 0], sizes = [6, 128], strides = [1, 1]} : vector<12x128xf32> to vector<6x128xf32>
    %281 = vector.extract_strided_slice %279 {offsets = [6, 0], sizes = [6, 128], strides = [1, 1]} : vector<12x128xf32> to vector<6x128xf32>
    %cst_197 = arith.constant 2.000000e+00 : f32
    %282 = vector.broadcast %cst_197 : f32 to vector<6x128xf32>
    %283 = arith.addf %281, %282 : vector<6x128xf32>
    %284 = math.absf %283 : vector<6x128xf32>
    %cst_198 = arith.constant 0.000000e+00 : f32
    %285 = vector.broadcast %cst_198 : f32 to vector<6x128xf32>
    %286 = arith.subf %285, %284 : vector<6x128xf32>
    %287 = math.exp %286 : vector<6x128xf32>
    %cst_199 = arith.constant 1.000000e+00 : f32
    %288 = vector.broadcast %cst_199 : f32 to vector<6x128xf32>
    %289 = arith.addf %288, %287 : vector<6x128xf32>
    %cst_200 = arith.constant 0.000000e+00 : f32
    %290 = vector.broadcast %cst_200 : f32 to vector<6x128xf32>
    %291 = arith.minimumf %283, %290 : vector<6x128xf32>
    %292 = math.log %289 : vector<6x128xf32>
    %293 = arith.subf %291, %292 : vector<6x128xf32>
    %cst_201 = arith.constant 0.000000e+00 : f32
    %294 = vector.broadcast %cst_201 : f32 to vector<6x128xf32>
    %295 = arith.cmpf olt, %283, %294 : vector<6x128xf32>
    %cst_202 = arith.constant 1.000000e+00 : f32
    %296 = vector.broadcast %cst_202 : f32 to vector<6x128xf32>
    %297 = arith.select %295, %287, %296 : vector<6x128xi1>, vector<6x128xf32>
    %298 = tpu.reciprocal %289 {approx = true} : vector<6x128xf32> -> vector<6x128xf32>
    %299 = arith.mulf %297, %298 : vector<6x128xf32>
    %300 = arith.addf %169, %280 : vector<6x128xf32>
    %301 = arith.mulf %300, %299 : vector<6x128xf32>
    %cst_203 = arith.constant dense<0.000000e+00> : vector<128xf32>
    %302 = vector.multi_reduction <add>, %293, %cst_203 [0] : vector<6x128xf32> to vector<128xf32>
    %303 = vector.shape_cast %302 : vector<128xf32> to vector<1x128xf32>
    %304 = arith.addf %152, %303 : vector<1x128xf32>
    %c0_204 = arith.constant 0 : index
    %c0_205 = arith.constant 0 : index
    %305 = vector.load %arg12[%c0_204, %c0_205] : memref<12x54xbf16, #tpu.memory_space<vmem>>, vector<12x54xbf16>
    %cst_206 = arith.constant dense<0.000000e+00> : vector<12x128xf32>
    %306 = tpu.matmul %305, %211, %cst_206 {dimension_numbers = #tpu.dot_dimension_numbers<[1], [0], [0], [1], [0, 0, 1, 1], [], []>} : vector<12x54xbf16>, vector<54x128xbf16>, vector<12x128xf32> -> vector<12x128xf32>
    %c0_207 = arith.constant 0 : index
    %c0_208 = arith.constant 0 : index
    %307 = vector.load %arg13[%c0_207, %c0_208] : memref<12x1xf32, #tpu.memory_space<vmem>>, vector<12x1xf32>
    %308 = vector.broadcast %307 : vector<12x1xf32> to vector<12x128xf32>
    %309 = arith.addf %306, %308 : vector<12x128xf32>
    %310 = vector.extract_strided_slice %309 {offsets = [0, 0], sizes = [6, 128], strides = [1, 1]} : vector<12x128xf32> to vector<6x128xf32>
    %311 = vector.extract_strided_slice %309 {offsets = [6, 0], sizes = [6, 128], strides = [1, 1]} : vector<12x128xf32> to vector<6x128xf32>
    %312 = arith.subf %301, %310 : vector<6x128xf32>
    %cst_209 = arith.constant 2.000000e+00 : f32
    %313 = vector.broadcast %cst_209 : f32 to vector<6x128xf32>
    %314 = arith.mulf %313, %311 : vector<6x128xf32>
    %cst_210 = arith.constant 1.83787704 : f32
    %315 = vector.broadcast %cst_210 : f32 to vector<6x128xf32>
    %316 = arith.addf %315, %314 : vector<6x128xf32>
    %317 = arith.mulf %312, %312 : vector<6x128xf32>
    %cst_211 = arith.constant -2.000000e+00 : f32
    %318 = vector.broadcast %cst_211 : f32 to vector<6x128xf32>
    %319 = arith.mulf %318, %311 : vector<6x128xf32>
    %320 = math.exp %319 : vector<6x128xf32>
    %321 = arith.mulf %317, %320 : vector<6x128xf32>
    %322 = arith.addf %316, %321 : vector<6x128xf32>
    %cst_212 = arith.constant -5.000000e-01 : f32
    %323 = vector.broadcast %cst_212 : f32 to vector<6x128xf32>
    %324 = arith.mulf %323, %322 : vector<6x128xf32>
    %cst_213 = arith.constant dense<0.000000e+00> : vector<128xf32>
    %325 = vector.multi_reduction <add>, %324, %cst_213 [0] : vector<6x128xf32> to vector<128xf32>
    %326 = vector.shape_cast %325 : vector<128xf32> to vector<1x128xf32>
    %327 = arith.addf %304, %326 : vector<1x128xf32>
    %c0_214 = arith.constant 0 : index
    %c0_215 = arith.constant 0 : index
    %328 = vector.load %arg15[%c0_214, %c0_215] : memref<6x128xf32, #tpu.memory_space<vmem>>, vector<6x128xf32>
    tpu.vector_store %arg15[%c0_214, %c0_215], %168 {strides = array<i32>} : memref<6x128xf32, #tpu.memory_space<vmem>>, vector<6x128xf32>,
    %c0_216 = arith.constant 0 : index
    %c0_217 = arith.constant 0 : index
    %329 = vector.load %arg14[%c0_216, %c0_217] : memref<128x128xf32, #tpu.memory_space<vmem>>, vector<128x128xf32>
    %cst_218 = arith.constant dense<0.000000e+00> : vector<1x128xf32>
    %330 = tpu.matmul %327, %329, %cst_218 {dimension_numbers = #tpu.dot_dimension_numbers<[1], [0], [0], [1], [0, 0, 1, 1], [], []>} : vector<1x128xf32>, vector<128x128xf32>, vector<1x128xf32> -> vector<1x128xf32>
    %c0_219 = arith.constant 0 : index
    %c0_220 = arith.constant 0 : index
    %331 = vector.load %arg16[%c0_219, %c0_220] : memref<1x128xf32, #tpu.memory_space<vmem>>, vector<1x128xf32>
    tpu.vector_store %arg16[%c0_219, %c0_220], %330 {strides = array<i32>} : memref<1x128xf32, #tpu.memory_space<vmem>>, vector<1x128xf32>,
    return
  }
}

module attributes {stable_mosaic.version = 11 : i64} {
  func.func @_level_kernel(%arg0: memref<24x32xf32, #tpu.memory_space<vmem>>, %arg1: memref<9x1x32xf32, #tpu.memory_space<vmem>>, %arg2: memref<2x24x24xf32, #tpu.memory_space<vmem>>, %arg3: memref<2x24x1xf32, #tpu.memory_space<vmem>>, %arg4: memref<2x32x8xf32, #tpu.memory_space<vmem>>, %arg5: memref<2x8x32xf32, #tpu.memory_space<vmem>>, %arg6: memref<2x32x108xbf16, #tpu.memory_space<vmem>>, %arg7: memref<2x32x1xf32, #tpu.memory_space<vmem>>, %arg8: memref<2x32x32xbf16, #tpu.memory_space<vmem>>, %arg9: memref<2x32x1xf32, #tpu.memory_space<vmem>>, %arg10: memref<2x24x288xbf16, #tpu.memory_space<vmem>>, %arg11: memref<2x24x1xf32, #tpu.memory_space<vmem>>, %arg12: memref<32x128xf32, #tpu.memory_space<vmem>>, %arg13: memref<24x32xf32, #tpu.memory_space<vmem>>, %arg14: memref<1x128xf32, #tpu.memory_space<vmem>>) attributes {dimension_semantics = [], scalar_prefetch = 0 : i64, scratch_operands = 0 : i64, tpu.core_type = #tpu.core_type<tc>} {
    %c0 = arith.constant 0 : index
    %c0_0 = arith.constant 0 : index
    %0 = vector.load %arg0[%c0, %c0_0] : memref<24x32xf32, #tpu.memory_space<vmem>>, vector<24x32xf32>
    %cst = arith.constant 0.000000e+00 : f32
    %1 = vector.broadcast %cst : f32 to vector<1x32xf32>
    %c0_1 = arith.constant 0 : index
    %c0_2 = arith.constant 0 : index
    %c0_3 = arith.constant 0 : index
    %2 = vector.load %arg2[%c0_1, %c0_2, %c0_3] : memref<2x24x24xf32, #tpu.memory_space<vmem>>, vector<1x24x24xf32>
    %3 = vector.shape_cast %2 : vector<1x24x24xf32> to vector<24x24xf32>
    %cst_4 = arith.constant dense<0.000000e+00> : vector<24x32xf32>
    %4 = tpu.matmul %3, %0, %cst_4 {dimension_numbers = #tpu.dot_dimension_numbers<[1], [0], [0], [1], [0, 0, 1, 1], [], []>} : vector<24x24xf32>, vector<24x32xf32>, vector<24x32xf32> -> vector<24x32xf32>
    %c0_5 = arith.constant 0 : index
    %c0_6 = arith.constant 0 : index
    %c0_7 = arith.constant 0 : index
    %5 = vector.load %arg3[%c0_5, %c0_6, %c0_7] : memref<2x24x1xf32, #tpu.memory_space<vmem>>, vector<1x24x1xf32>
    %6 = vector.shape_cast %5 : vector<1x24x1xf32> to vector<24x1xf32>
    %7 = vector.broadcast %6 : vector<24x1xf32> to vector<24x32xf32>
    %8 = arith.addf %4, %7 : vector<24x32xf32>
    %c0_8 = arith.constant 0 : index
    %c0_9 = arith.constant 0 : index
    %c0_10 = arith.constant 0 : index
    %9 = vector.load %arg4[%c0_8, %c0_9, %c0_10] : memref<2x32x8xf32, #tpu.memory_space<vmem>>, vector<1x32x8xf32>
    %10 = vector.shape_cast %9 : vector<1x32x8xf32> to vector<32x8xf32>
    %cst_11 = arith.constant dense<0.000000e+00> : vector<24x8xf32>
    %11 = tpu.matmul %8, %10, %cst_11 {dimension_numbers = #tpu.dot_dimension_numbers<[1], [0], [0], [1], [0, 0, 1, 1], [], []>} : vector<24x32xf32>, vector<32x8xf32>, vector<24x8xf32> -> vector<24x8xf32>
    %c0_12 = arith.constant 0 : index
    %c0_13 = arith.constant 0 : index
    %c0_14 = arith.constant 0 : index
    %12 = vector.load %arg5[%c0_12, %c0_13, %c0_14] : memref<2x8x32xf32, #tpu.memory_space<vmem>>, vector<1x8x32xf32>
    %13 = vector.shape_cast %12 : vector<1x8x32xf32> to vector<8x32xf32>
    %cst_15 = arith.constant dense<0.000000e+00> : vector<24x32xf32>
    %14 = tpu.matmul %11, %13, %cst_15 {dimension_numbers = #tpu.dot_dimension_numbers<[1], [0], [0], [1], [0, 0, 1, 1], [], []>} : vector<24x8xf32>, vector<8x32xf32>, vector<24x32xf32> -> vector<24x32xf32>
    %15 = arith.addf %8, %14 : vector<24x32xf32>
    %16 = vector.extract_strided_slice %15 {offsets = [0, 0], sizes = [12, 32], strides = [1, 1]} : vector<24x32xf32> to vector<12x32xf32>
    %17 = vector.extract_strided_slice %15 {offsets = [12, 0], sizes = [12, 32], strides = [1, 1]} : vector<24x32xf32> to vector<12x32xf32>
    %18 = vector.extract_strided_slice %16 {offsets = [0, 27], sizes = [12, 5], strides = [1, 1]} : vector<12x32xf32> to vector<12x5xf32>
    %19 = vector.extract_strided_slice %16 {offsets = [0, 0], sizes = [12, 27], strides = [1, 1]} : vector<12x32xf32> to vector<12x27xf32>
    %20 = tpu.concatenate %18, %19 in 1 : vector<12x5xf32>, vector<12x27xf32> -> vector<12x32xf32>
    %c0_16 = arith.constant 0 : index
    %c0_17 = arith.constant 0 : index
    %c0_18 = arith.constant 0 : index
    %21 = vector.load %arg1[%c0_16, %c0_17, %c0_18] : memref<9x1x32xf32, #tpu.memory_space<vmem>>, vector<1x1x32xf32>
    %22 = vector.shape_cast %21 : vector<1x1x32xf32> to vector<1x32xf32>
    %23 = vector.broadcast %22 : vector<1x32xf32> to vector<12x32xf32>
    %24 = arith.mulf %20, %23 : vector<12x32xf32>
    %25 = vector.extract_strided_slice %16 {offsets = [0, 28], sizes = [12, 4], strides = [1, 1]} : vector<12x32xf32> to vector<12x4xf32>
    %26 = vector.extract_strided_slice %16 {offsets = [0, 0], sizes = [12, 28], strides = [1, 1]} : vector<12x32xf32> to vector<12x28xf32>
    %27 = tpu.concatenate %25, %26 in 1 : vector<12x4xf32>, vector<12x28xf32> -> vector<12x32xf32>
    %c1 = arith.constant 1 : index
    %c0_19 = arith.constant 0 : index
    %c0_20 = arith.constant 0 : index
    %28 = vector.load %arg1[%c1, %c0_19, %c0_20] : memref<9x1x32xf32, #tpu.memory_space<vmem>>, vector<1x1x32xf32>
    %29 = vector.shape_cast %28 : vector<1x1x32xf32> to vector<1x32xf32>
    %30 = vector.broadcast %29 : vector<1x32xf32> to vector<12x32xf32>
    %31 = arith.mulf %27, %30 : vector<12x32xf32>
    %32 = vector.extract_strided_slice %16 {offsets = [0, 29], sizes = [12, 3], strides = [1, 1]} : vector<12x32xf32> to vector<12x3xf32>
    %33 = vector.extract_strided_slice %16 {offsets = [0, 0], sizes = [12, 29], strides = [1, 1]} : vector<12x32xf32> to vector<12x29xf32>
    %34 = tpu.concatenate %32, %33 in 1 : vector<12x3xf32>, vector<12x29xf32> -> vector<12x32xf32>
    %c2 = arith.constant 2 : index
    %c0_21 = arith.constant 0 : index
    %c0_22 = arith.constant 0 : index
    %35 = vector.load %arg1[%c2, %c0_21, %c0_22] : memref<9x1x32xf32, #tpu.memory_space<vmem>>, vector<1x1x32xf32>
    %36 = vector.shape_cast %35 : vector<1x1x32xf32> to vector<1x32xf32>
    %37 = vector.broadcast %36 : vector<1x32xf32> to vector<12x32xf32>
    %38 = arith.mulf %34, %37 : vector<12x32xf32>
    %39 = vector.extract_strided_slice %16 {offsets = [0, 31], sizes = [12, 1], strides = [1, 1]} : vector<12x32xf32> to vector<12x1xf32>
    %40 = vector.extract_strided_slice %16 {offsets = [0, 0], sizes = [12, 31], strides = [1, 1]} : vector<12x32xf32> to vector<12x31xf32>
    %41 = tpu.concatenate %39, %40 in 1 : vector<12x1xf32>, vector<12x31xf32> -> vector<12x32xf32>
    %c3 = arith.constant 3 : index
    %c0_23 = arith.constant 0 : index
    %c0_24 = arith.constant 0 : index
    %42 = vector.load %arg1[%c3, %c0_23, %c0_24] : memref<9x1x32xf32, #tpu.memory_space<vmem>>, vector<1x1x32xf32>
    %43 = vector.shape_cast %42 : vector<1x1x32xf32> to vector<1x32xf32>
    %44 = vector.broadcast %43 : vector<1x32xf32> to vector<12x32xf32>
    %45 = arith.mulf %41, %44 : vector<12x32xf32>
    %46 = vector.extract_strided_slice %16 {offsets = [0, 1], sizes = [12, 31], strides = [1, 1]} : vector<12x32xf32> to vector<12x31xf32>
    %47 = vector.extract_strided_slice %16 {offsets = [0, 0], sizes = [12, 1], strides = [1, 1]} : vector<12x32xf32> to vector<12x1xf32>
    %48 = tpu.concatenate %46, %47 in 1 : vector<12x31xf32>, vector<12x1xf32> -> vector<12x32xf32>
    %c5 = arith.constant 5 : index
    %c0_25 = arith.constant 0 : index
    %c0_26 = arith.constant 0 : index
    %49 = vector.load %arg1[%c5, %c0_25, %c0_26] : memref<9x1x32xf32, #tpu.memory_space<vmem>>, vector<1x1x32xf32>
    %50 = vector.shape_cast %49 : vector<1x1x32xf32> to vector<1x32xf32>
    %51 = vector.broadcast %50 : vector<1x32xf32> to vector<12x32xf32>
    %52 = arith.mulf %48, %51 : vector<12x32xf32>
    %53 = vector.extract_strided_slice %16 {offsets = [0, 3], sizes = [12, 29], strides = [1, 1]} : vector<12x32xf32> to vector<12x29xf32>
    %54 = vector.extract_strided_slice %16 {offsets = [0, 0], sizes = [12, 3], strides = [1, 1]} : vector<12x32xf32> to vector<12x3xf32>
    %55 = tpu.concatenate %53, %54 in 1 : vector<12x29xf32>, vector<12x3xf32> -> vector<12x32xf32>
    %c6 = arith.constant 6 : index
    %c0_27 = arith.constant 0 : index
    %c0_28 = arith.constant 0 : index
    %56 = vector.load %arg1[%c6, %c0_27, %c0_28] : memref<9x1x32xf32, #tpu.memory_space<vmem>>, vector<1x1x32xf32>
    %57 = vector.shape_cast %56 : vector<1x1x32xf32> to vector<1x32xf32>
    %58 = vector.broadcast %57 : vector<1x32xf32> to vector<12x32xf32>
    %59 = arith.mulf %55, %58 : vector<12x32xf32>
    %60 = vector.extract_strided_slice %16 {offsets = [0, 4], sizes = [12, 28], strides = [1, 1]} : vector<12x32xf32> to vector<12x28xf32>
    %61 = vector.extract_strided_slice %16 {offsets = [0, 0], sizes = [12, 4], strides = [1, 1]} : vector<12x32xf32> to vector<12x4xf32>
    %62 = tpu.concatenate %60, %61 in 1 : vector<12x28xf32>, vector<12x4xf32> -> vector<12x32xf32>
    %c7 = arith.constant 7 : index
    %c0_29 = arith.constant 0 : index
    %c0_30 = arith.constant 0 : index
    %63 = vector.load %arg1[%c7, %c0_29, %c0_30] : memref<9x1x32xf32, #tpu.memory_space<vmem>>, vector<1x1x32xf32>
    %64 = vector.shape_cast %63 : vector<1x1x32xf32> to vector<1x32xf32>
    %65 = vector.broadcast %64 : vector<1x32xf32> to vector<12x32xf32>
    %66 = arith.mulf %62, %65 : vector<12x32xf32>
    %67 = vector.extract_strided_slice %16 {offsets = [0, 5], sizes = [12, 27], strides = [1, 1]} : vector<12x32xf32> to vector<12x27xf32>
    %68 = vector.extract_strided_slice %16 {offsets = [0, 0], sizes = [12, 5], strides = [1, 1]} : vector<12x32xf32> to vector<12x5xf32>
    %69 = tpu.concatenate %67, %68 in 1 : vector<12x27xf32>, vector<12x5xf32> -> vector<12x32xf32>
    %c8 = arith.constant 8 : index
    %c0_31 = arith.constant 0 : index
    %c0_32 = arith.constant 0 : index
    %70 = vector.load %arg1[%c8, %c0_31, %c0_32] : memref<9x1x32xf32, #tpu.memory_space<vmem>>, vector<1x1x32xf32>
    %71 = vector.shape_cast %70 : vector<1x1x32xf32> to vector<1x32xf32>
    %72 = vector.broadcast %71 : vector<1x32xf32> to vector<12x32xf32>
    %73 = arith.mulf %69, %72 : vector<12x32xf32>
    %74 = tpu.concatenate %24, %31, %38, %45, %16, %52, %59, %66, %73 in 0 : vector<12x32xf32>, vector<12x32xf32>, vector<12x32xf32>, vector<12x32xf32>, vector<12x32xf32>, vector<12x32xf32>, vector<12x32xf32>, vector<12x32xf32>, vector<12x32xf32> -> vector<108x32xf32>
    %75 = arith.truncf %74 : vector<108x32xf32> to vector<108x32xbf16>
    %c0_33 = arith.constant 0 : index
    %c0_34 = arith.constant 0 : index
    %c0_35 = arith.constant 0 : index
    %76 = vector.load %arg6[%c0_33, %c0_34, %c0_35] : memref<2x32x108xbf16, #tpu.memory_space<vmem>>, vector<1x32x108xbf16>
    %77 = vector.shape_cast %76 : vector<1x32x108xbf16> to vector<32x108xbf16>
    %cst_36 = arith.constant dense<0.000000e+00> : vector<32x32xf32>
    %78 = tpu.matmul %77, %75, %cst_36 {dimension_numbers = #tpu.dot_dimension_numbers<[1], [0], [0], [1], [0, 0, 1, 1], [], []>} : vector<32x108xbf16>, vector<108x32xbf16>, vector<32x32xf32> -> vector<32x32xf32>
    %c0_37 = arith.constant 0 : index
    %c0_38 = arith.constant 0 : index
    %c0_39 = arith.constant 0 : index
    %79 = vector.load %arg7[%c0_37, %c0_38, %c0_39] : memref<2x32x1xf32, #tpu.memory_space<vmem>>, vector<1x32x1xf32>
    %80 = vector.shape_cast %79 : vector<1x32x1xf32> to vector<32x1xf32>
    %81 = vector.broadcast %80 : vector<32x1xf32> to vector<32x32xf32>
    %82 = arith.addf %78, %81 : vector<32x32xf32>
    %cst_40 = arith.constant 0.000000e+00 : f32
    %83 = vector.broadcast %cst_40 : f32 to vector<32x32xf32>
    %84 = arith.maximumf %82, %83 : vector<32x32xf32>
    %c0_41 = arith.constant 0 : index
    %c0_42 = arith.constant 0 : index
    %c0_43 = arith.constant 0 : index
    %85 = vector.load %arg8[%c0_41, %c0_42, %c0_43] : memref<2x32x32xbf16, #tpu.memory_space<vmem>>, vector<1x32x32xbf16>
    %86 = vector.shape_cast %85 : vector<1x32x32xbf16> to vector<32x32xbf16>
    %87 = arith.truncf %84 : vector<32x32xf32> to vector<32x32xbf16>
    %cst_44 = arith.constant dense<0.000000e+00> : vector<32x32xf32>
    %88 = tpu.matmul %86, %87, %cst_44 {dimension_numbers = #tpu.dot_dimension_numbers<[1], [0], [0], [1], [0, 0, 1, 1], [], []>} : vector<32x32xbf16>, vector<32x32xbf16>, vector<32x32xf32> -> vector<32x32xf32>
    %c0_45 = arith.constant 0 : index
    %c0_46 = arith.constant 0 : index
    %c0_47 = arith.constant 0 : index
    %89 = vector.load %arg9[%c0_45, %c0_46, %c0_47] : memref<2x32x1xf32, #tpu.memory_space<vmem>>, vector<1x32x1xf32>
    %90 = vector.shape_cast %89 : vector<1x32x1xf32> to vector<32x1xf32>
    %91 = vector.broadcast %90 : vector<32x1xf32> to vector<32x32xf32>
    %92 = arith.addf %88, %91 : vector<32x32xf32>
    %cst_48 = arith.constant 0.000000e+00 : f32
    %93 = vector.broadcast %cst_48 : f32 to vector<32x32xf32>
    %94 = arith.maximumf %92, %93 : vector<32x32xf32>
    %95 = vector.extract_strided_slice %94 {offsets = [0, 27], sizes = [32, 5], strides = [1, 1]} : vector<32x32xf32> to vector<32x5xf32>
    %96 = vector.extract_strided_slice %94 {offsets = [0, 0], sizes = [32, 27], strides = [1, 1]} : vector<32x32xf32> to vector<32x27xf32>
    %97 = tpu.concatenate %95, %96 in 1 : vector<32x5xf32>, vector<32x27xf32> -> vector<32x32xf32>
    %c0_49 = arith.constant 0 : index
    %c0_50 = arith.constant 0 : index
    %c0_51 = arith.constant 0 : index
    %98 = vector.load %arg1[%c0_49, %c0_50, %c0_51] : memref<9x1x32xf32, #tpu.memory_space<vmem>>, vector<1x1x32xf32>
    %99 = vector.shape_cast %98 : vector<1x1x32xf32> to vector<1x32xf32>
    %100 = vector.broadcast %99 : vector<1x32xf32> to vector<32x32xf32>
    %101 = arith.mulf %97, %100 : vector<32x32xf32>
    %102 = vector.extract_strided_slice %94 {offsets = [0, 28], sizes = [32, 4], strides = [1, 1]} : vector<32x32xf32> to vector<32x4xf32>
    %103 = vector.extract_strided_slice %94 {offsets = [0, 0], sizes = [32, 28], strides = [1, 1]} : vector<32x32xf32> to vector<32x28xf32>
    %104 = tpu.concatenate %102, %103 in 1 : vector<32x4xf32>, vector<32x28xf32> -> vector<32x32xf32>
    %c1_52 = arith.constant 1 : index
    %c0_53 = arith.constant 0 : index
    %c0_54 = arith.constant 0 : index
    %105 = vector.load %arg1[%c1_52, %c0_53, %c0_54] : memref<9x1x32xf32, #tpu.memory_space<vmem>>, vector<1x1x32xf32>
    %106 = vector.shape_cast %105 : vector<1x1x32xf32> to vector<1x32xf32>
    %107 = vector.broadcast %106 : vector<1x32xf32> to vector<32x32xf32>
    %108 = arith.mulf %104, %107 : vector<32x32xf32>
    %109 = vector.extract_strided_slice %94 {offsets = [0, 29], sizes = [32, 3], strides = [1, 1]} : vector<32x32xf32> to vector<32x3xf32>
    %110 = vector.extract_strided_slice %94 {offsets = [0, 0], sizes = [32, 29], strides = [1, 1]} : vector<32x32xf32> to vector<32x29xf32>
    %111 = tpu.concatenate %109, %110 in 1 : vector<32x3xf32>, vector<32x29xf32> -> vector<32x32xf32>
    %c2_55 = arith.constant 2 : index
    %c0_56 = arith.constant 0 : index
    %c0_57 = arith.constant 0 : index
    %112 = vector.load %arg1[%c2_55, %c0_56, %c0_57] : memref<9x1x32xf32, #tpu.memory_space<vmem>>, vector<1x1x32xf32>
    %113 = vector.shape_cast %112 : vector<1x1x32xf32> to vector<1x32xf32>
    %114 = vector.broadcast %113 : vector<1x32xf32> to vector<32x32xf32>
    %115 = arith.mulf %111, %114 : vector<32x32xf32>
    %116 = vector.extract_strided_slice %94 {offsets = [0, 31], sizes = [32, 1], strides = [1, 1]} : vector<32x32xf32> to vector<32x1xf32>
    %117 = vector.extract_strided_slice %94 {offsets = [0, 0], sizes = [32, 31], strides = [1, 1]} : vector<32x32xf32> to vector<32x31xf32>
    %118 = tpu.concatenate %116, %117 in 1 : vector<32x1xf32>, vector<32x31xf32> -> vector<32x32xf32>
    %c3_58 = arith.constant 3 : index
    %c0_59 = arith.constant 0 : index
    %c0_60 = arith.constant 0 : index
    %119 = vector.load %arg1[%c3_58, %c0_59, %c0_60] : memref<9x1x32xf32, #tpu.memory_space<vmem>>, vector<1x1x32xf32>
    %120 = vector.shape_cast %119 : vector<1x1x32xf32> to vector<1x32xf32>
    %121 = vector.broadcast %120 : vector<1x32xf32> to vector<32x32xf32>
    %122 = arith.mulf %118, %121 : vector<32x32xf32>
    %123 = vector.extract_strided_slice %94 {offsets = [0, 1], sizes = [32, 31], strides = [1, 1]} : vector<32x32xf32> to vector<32x31xf32>
    %124 = vector.extract_strided_slice %94 {offsets = [0, 0], sizes = [32, 1], strides = [1, 1]} : vector<32x32xf32> to vector<32x1xf32>
    %125 = tpu.concatenate %123, %124 in 1 : vector<32x31xf32>, vector<32x1xf32> -> vector<32x32xf32>
    %c5_61 = arith.constant 5 : index
    %c0_62 = arith.constant 0 : index
    %c0_63 = arith.constant 0 : index
    %126 = vector.load %arg1[%c5_61, %c0_62, %c0_63] : memref<9x1x32xf32, #tpu.memory_space<vmem>>, vector<1x1x32xf32>
    %127 = vector.shape_cast %126 : vector<1x1x32xf32> to vector<1x32xf32>
    %128 = vector.broadcast %127 : vector<1x32xf32> to vector<32x32xf32>
    %129 = arith.mulf %125, %128 : vector<32x32xf32>
    %130 = vector.extract_strided_slice %94 {offsets = [0, 3], sizes = [32, 29], strides = [1, 1]} : vector<32x32xf32> to vector<32x29xf32>
    %131 = vector.extract_strided_slice %94 {offsets = [0, 0], sizes = [32, 3], strides = [1, 1]} : vector<32x32xf32> to vector<32x3xf32>
    %132 = tpu.concatenate %130, %131 in 1 : vector<32x29xf32>, vector<32x3xf32> -> vector<32x32xf32>
    %c6_64 = arith.constant 6 : index
    %c0_65 = arith.constant 0 : index
    %c0_66 = arith.constant 0 : index
    %133 = vector.load %arg1[%c6_64, %c0_65, %c0_66] : memref<9x1x32xf32, #tpu.memory_space<vmem>>, vector<1x1x32xf32>
    %134 = vector.shape_cast %133 : vector<1x1x32xf32> to vector<1x32xf32>
    %135 = vector.broadcast %134 : vector<1x32xf32> to vector<32x32xf32>
    %136 = arith.mulf %132, %135 : vector<32x32xf32>
    %137 = vector.extract_strided_slice %94 {offsets = [0, 4], sizes = [32, 28], strides = [1, 1]} : vector<32x32xf32> to vector<32x28xf32>
    %138 = vector.extract_strided_slice %94 {offsets = [0, 0], sizes = [32, 4], strides = [1, 1]} : vector<32x32xf32> to vector<32x4xf32>
    %139 = tpu.concatenate %137, %138 in 1 : vector<32x28xf32>, vector<32x4xf32> -> vector<32x32xf32>
    %c7_67 = arith.constant 7 : index
    %c0_68 = arith.constant 0 : index
    %c0_69 = arith.constant 0 : index
    %140 = vector.load %arg1[%c7_67, %c0_68, %c0_69] : memref<9x1x32xf32, #tpu.memory_space<vmem>>, vector<1x1x32xf32>
    %141 = vector.shape_cast %140 : vector<1x1x32xf32> to vector<1x32xf32>
    %142 = vector.broadcast %141 : vector<1x32xf32> to vector<32x32xf32>
    %143 = arith.mulf %139, %142 : vector<32x32xf32>
    %144 = vector.extract_strided_slice %94 {offsets = [0, 5], sizes = [32, 27], strides = [1, 1]} : vector<32x32xf32> to vector<32x27xf32>
    %145 = vector.extract_strided_slice %94 {offsets = [0, 0], sizes = [32, 5], strides = [1, 1]} : vector<32x32xf32> to vector<32x5xf32>
    %146 = tpu.concatenate %144, %145 in 1 : vector<32x27xf32>, vector<32x5xf32> -> vector<32x32xf32>
    %c8_70 = arith.constant 8 : index
    %c0_71 = arith.constant 0 : index
    %c0_72 = arith.constant 0 : index
    %147 = vector.load %arg1[%c8_70, %c0_71, %c0_72] : memref<9x1x32xf32, #tpu.memory_space<vmem>>, vector<1x1x32xf32>
    %148 = vector.shape_cast %147 : vector<1x1x32xf32> to vector<1x32xf32>
    %149 = vector.broadcast %148 : vector<1x32xf32> to vector<32x32xf32>
    %150 = arith.mulf %146, %149 : vector<32x32xf32>
    %151 = tpu.concatenate %101, %108, %115, %122, %94, %129, %136, %143, %150 in 0 : vector<32x32xf32>, vector<32x32xf32>, vector<32x32xf32>, vector<32x32xf32>, vector<32x32xf32>, vector<32x32xf32>, vector<32x32xf32>, vector<32x32xf32>, vector<32x32xf32> -> vector<288x32xf32>
    %152 = arith.truncf %151 : vector<288x32xf32> to vector<288x32xbf16>
    %c0_73 = arith.constant 0 : index
    %c0_74 = arith.constant 0 : index
    %c0_75 = arith.constant 0 : index
    %153 = vector.load %arg10[%c0_73, %c0_74, %c0_75] : memref<2x24x288xbf16, #tpu.memory_space<vmem>>, vector<1x24x288xbf16>
    %154 = vector.shape_cast %153 : vector<1x24x288xbf16> to vector<24x288xbf16>
    %cst_76 = arith.constant dense<0.000000e+00> : vector<24x32xf32>
    %155 = tpu.matmul %154, %152, %cst_76 {dimension_numbers = #tpu.dot_dimension_numbers<[1], [0], [0], [1], [0, 0, 1, 1], [], []>} : vector<24x288xbf16>, vector<288x32xbf16>, vector<24x32xf32> -> vector<24x32xf32>
    %c0_77 = arith.constant 0 : index
    %c0_78 = arith.constant 0 : index
    %c0_79 = arith.constant 0 : index
    %156 = vector.load %arg11[%c0_77, %c0_78, %c0_79] : memref<2x24x1xf32, #tpu.memory_space<vmem>>, vector<1x24x1xf32>
    %157 = vector.shape_cast %156 : vector<1x24x1xf32> to vector<24x1xf32>
    %158 = vector.broadcast %157 : vector<24x1xf32> to vector<24x32xf32>
    %159 = arith.addf %155, %158 : vector<24x32xf32>
    %160 = vector.extract_strided_slice %159 {offsets = [0, 0], sizes = [12, 32], strides = [1, 1]} : vector<24x32xf32> to vector<12x32xf32>
    %161 = vector.extract_strided_slice %159 {offsets = [12, 0], sizes = [12, 32], strides = [1, 1]} : vector<24x32xf32> to vector<12x32xf32>
    %cst_80 = arith.constant 2.000000e+00 : f32
    %162 = vector.broadcast %cst_80 : f32 to vector<12x32xf32>
    %163 = arith.addf %161, %162 : vector<12x32xf32>
    %164 = math.absf %163 : vector<12x32xf32>
    %cst_81 = arith.constant 0.000000e+00 : f32
    %165 = vector.broadcast %cst_81 : f32 to vector<12x32xf32>
    %166 = arith.subf %165, %164 : vector<12x32xf32>
    %167 = math.exp %166 : vector<12x32xf32>
    %cst_82 = arith.constant 1.000000e+00 : f32
    %168 = vector.broadcast %cst_82 : f32 to vector<12x32xf32>
    %169 = arith.addf %168, %167 : vector<12x32xf32>
    %cst_83 = arith.constant 0.000000e+00 : f32
    %170 = vector.broadcast %cst_83 : f32 to vector<12x32xf32>
    %171 = arith.minimumf %163, %170 : vector<12x32xf32>
    %172 = math.log %169 : vector<12x32xf32>
    %173 = arith.subf %171, %172 : vector<12x32xf32>
    %cst_84 = arith.constant 0.000000e+00 : f32
    %174 = vector.broadcast %cst_84 : f32 to vector<12x32xf32>
    %175 = arith.cmpf olt, %163, %174 : vector<12x32xf32>
    %cst_85 = arith.constant 1.000000e+00 : f32
    %176 = vector.broadcast %cst_85 : f32 to vector<12x32xf32>
    %177 = arith.select %175, %167, %176 : vector<12x32xi1>, vector<12x32xf32>
    %178 = tpu.reciprocal %169 {approx = true} : vector<12x32xf32> -> vector<12x32xf32>
    %179 = arith.mulf %177, %178 : vector<12x32xf32>
    %180 = arith.addf %17, %160 : vector<12x32xf32>
    %181 = arith.mulf %180, %179 : vector<12x32xf32>
    %cst_86 = arith.constant dense<0.000000e+00> : vector<32xf32>
    %182 = vector.multi_reduction <add>, %173, %cst_86 [0] : vector<12x32xf32> to vector<32xf32>
    %183 = vector.shape_cast %182 : vector<32xf32> to vector<1x32xf32>
    %184 = arith.addf %1, %183 : vector<1x32xf32>
    %185 = tpu.concatenate %16, %181 in 0 : vector<12x32xf32>, vector<12x32xf32> -> vector<24x32xf32>
    %c1_87 = arith.constant 1 : index
    %c0_88 = arith.constant 0 : index
    %c0_89 = arith.constant 0 : index
    %186 = vector.load %arg2[%c1_87, %c0_88, %c0_89] : memref<2x24x24xf32, #tpu.memory_space<vmem>>, vector<1x24x24xf32>
    %187 = vector.shape_cast %186 : vector<1x24x24xf32> to vector<24x24xf32>
    %cst_90 = arith.constant dense<0.000000e+00> : vector<24x32xf32>
    %188 = tpu.matmul %187, %185, %cst_90 {dimension_numbers = #tpu.dot_dimension_numbers<[1], [0], [0], [1], [0, 0, 1, 1], [], []>} : vector<24x24xf32>, vector<24x32xf32>, vector<24x32xf32> -> vector<24x32xf32>
    %c1_91 = arith.constant 1 : index
    %c0_92 = arith.constant 0 : index
    %c0_93 = arith.constant 0 : index
    %189 = vector.load %arg3[%c1_91, %c0_92, %c0_93] : memref<2x24x1xf32, #tpu.memory_space<vmem>>, vector<1x24x1xf32>
    %190 = vector.shape_cast %189 : vector<1x24x1xf32> to vector<24x1xf32>
    %191 = vector.broadcast %190 : vector<24x1xf32> to vector<24x32xf32>
    %192 = arith.addf %188, %191 : vector<24x32xf32>
    %c1_94 = arith.constant 1 : index
    %c0_95 = arith.constant 0 : index
    %c0_96 = arith.constant 0 : index
    %193 = vector.load %arg4[%c1_94, %c0_95, %c0_96] : memref<2x32x8xf32, #tpu.memory_space<vmem>>, vector<1x32x8xf32>
    %194 = vector.shape_cast %193 : vector<1x32x8xf32> to vector<32x8xf32>
    %cst_97 = arith.constant dense<0.000000e+00> : vector<24x8xf32>
    %195 = tpu.matmul %192, %194, %cst_97 {dimension_numbers = #tpu.dot_dimension_numbers<[1], [0], [0], [1], [0, 0, 1, 1], [], []>} : vector<24x32xf32>, vector<32x8xf32>, vector<24x8xf32> -> vector<24x8xf32>
    %c1_98 = arith.constant 1 : index
    %c0_99 = arith.constant 0 : index
    %c0_100 = arith.constant 0 : index
    %196 = vector.load %arg5[%c1_98, %c0_99, %c0_100] : memref<2x8x32xf32, #tpu.memory_space<vmem>>, vector<1x8x32xf32>
    %197 = vector.shape_cast %196 : vector<1x8x32xf32> to vector<8x32xf32>
    %cst_101 = arith.constant dense<0.000000e+00> : vector<24x32xf32>
    %198 = tpu.matmul %195, %197, %cst_101 {dimension_numbers = #tpu.dot_dimension_numbers<[1], [0], [0], [1], [0, 0, 1, 1], [], []>} : vector<24x8xf32>, vector<8x32xf32>, vector<24x32xf32> -> vector<24x32xf32>
    %199 = arith.addf %192, %198 : vector<24x32xf32>
    %200 = vector.extract_strided_slice %199 {offsets = [0, 0], sizes = [12, 32], strides = [1, 1]} : vector<24x32xf32> to vector<12x32xf32>
    %201 = vector.extract_strided_slice %199 {offsets = [12, 0], sizes = [12, 32], strides = [1, 1]} : vector<24x32xf32> to vector<12x32xf32>
    %202 = vector.extract_strided_slice %200 {offsets = [0, 27], sizes = [12, 5], strides = [1, 1]} : vector<12x32xf32> to vector<12x5xf32>
    %203 = vector.extract_strided_slice %200 {offsets = [0, 0], sizes = [12, 27], strides = [1, 1]} : vector<12x32xf32> to vector<12x27xf32>
    %204 = tpu.concatenate %202, %203 in 1 : vector<12x5xf32>, vector<12x27xf32> -> vector<12x32xf32>
    %c0_102 = arith.constant 0 : index
    %c0_103 = arith.constant 0 : index
    %c0_104 = arith.constant 0 : index
    %205 = vector.load %arg1[%c0_102, %c0_103, %c0_104] : memref<9x1x32xf32, #tpu.memory_space<vmem>>, vector<1x1x32xf32>
    %206 = vector.shape_cast %205 : vector<1x1x32xf32> to vector<1x32xf32>
    %207 = vector.broadcast %206 : vector<1x32xf32> to vector<12x32xf32>
    %208 = arith.mulf %204, %207 : vector<12x32xf32>
    %209 = vector.extract_strided_slice %200 {offsets = [0, 28], sizes = [12, 4], strides = [1, 1]} : vector<12x32xf32> to vector<12x4xf32>
    %210 = vector.extract_strided_slice %200 {offsets = [0, 0], sizes = [12, 28], strides = [1, 1]} : vector<12x32xf32> to vector<12x28xf32>
    %211 = tpu.concatenate %209, %210 in 1 : vector<12x4xf32>, vector<12x28xf32> -> vector<12x32xf32>
    %c1_105 = arith.constant 1 : index
    %c0_106 = arith.constant 0 : index
    %c0_107 = arith.constant 0 : index
    %212 = vector.load %arg1[%c1_105, %c0_106, %c0_107] : memref<9x1x32xf32, #tpu.memory_space<vmem>>, vector<1x1x32xf32>
    %213 = vector.shape_cast %212 : vector<1x1x32xf32> to vector<1x32xf32>
    %214 = vector.broadcast %213 : vector<1x32xf32> to vector<12x32xf32>
    %215 = arith.mulf %211, %214 : vector<12x32xf32>
    %216 = vector.extract_strided_slice %200 {offsets = [0, 29], sizes = [12, 3], strides = [1, 1]} : vector<12x32xf32> to vector<12x3xf32>
    %217 = vector.extract_strided_slice %200 {offsets = [0, 0], sizes = [12, 29], strides = [1, 1]} : vector<12x32xf32> to vector<12x29xf32>
    %218 = tpu.concatenate %216, %217 in 1 : vector<12x3xf32>, vector<12x29xf32> -> vector<12x32xf32>
    %c2_108 = arith.constant 2 : index
    %c0_109 = arith.constant 0 : index
    %c0_110 = arith.constant 0 : index
    %219 = vector.load %arg1[%c2_108, %c0_109, %c0_110] : memref<9x1x32xf32, #tpu.memory_space<vmem>>, vector<1x1x32xf32>
    %220 = vector.shape_cast %219 : vector<1x1x32xf32> to vector<1x32xf32>
    %221 = vector.broadcast %220 : vector<1x32xf32> to vector<12x32xf32>
    %222 = arith.mulf %218, %221 : vector<12x32xf32>
    %223 = vector.extract_strided_slice %200 {offsets = [0, 31], sizes = [12, 1], strides = [1, 1]} : vector<12x32xf32> to vector<12x1xf32>
    %224 = vector.extract_strided_slice %200 {offsets = [0, 0], sizes = [12, 31], strides = [1, 1]} : vector<12x32xf32> to vector<12x31xf32>
    %225 = tpu.concatenate %223, %224 in 1 : vector<12x1xf32>, vector<12x31xf32> -> vector<12x32xf32>
    %c3_111 = arith.constant 3 : index
    %c0_112 = arith.constant 0 : index
    %c0_113 = arith.constant 0 : index
    %226 = vector.load %arg1[%c3_111, %c0_112, %c0_113] : memref<9x1x32xf32, #tpu.memory_space<vmem>>, vector<1x1x32xf32>
    %227 = vector.shape_cast %226 : vector<1x1x32xf32> to vector<1x32xf32>
    %228 = vector.broadcast %227 : vector<1x32xf32> to vector<12x32xf32>
    %229 = arith.mulf %225, %228 : vector<12x32xf32>
    %230 = vector.extract_strided_slice %200 {offsets = [0, 1], sizes = [12, 31], strides = [1, 1]} : vector<12x32xf32> to vector<12x31xf32>
    %231 = vector.extract_strided_slice %200 {offsets = [0, 0], sizes = [12, 1], strides = [1, 1]} : vector<12x32xf32> to vector<12x1xf32>
    %232 = tpu.concatenate %230, %231 in 1 : vector<12x31xf32>, vector<12x1xf32> -> vector<12x32xf32>
    %c5_114 = arith.constant 5 : index
    %c0_115 = arith.constant 0 : index
    %c0_116 = arith.constant 0 : index
    %233 = vector.load %arg1[%c5_114, %c0_115, %c0_116] : memref<9x1x32xf32, #tpu.memory_space<vmem>>, vector<1x1x32xf32>
    %234 = vector.shape_cast %233 : vector<1x1x32xf32> to vector<1x32xf32>
    %235 = vector.broadcast %234 : vector<1x32xf32> to vector<12x32xf32>
    %236 = arith.mulf %232, %235 : vector<12x32xf32>
    %237 = vector.extract_strided_slice %200 {offsets = [0, 3], sizes = [12, 29], strides = [1, 1]} : vector<12x32xf32> to vector<12x29xf32>
    %238 = vector.extract_strided_slice %200 {offsets = [0, 0], sizes = [12, 3], strides = [1, 1]} : vector<12x32xf32> to vector<12x3xf32>
    %239 = tpu.concatenate %237, %238 in 1 : vector<12x29xf32>, vector<12x3xf32> -> vector<12x32xf32>
    %c6_117 = arith.constant 6 : index
    %c0_118 = arith.constant 0 : index
    %c0_119 = arith.constant 0 : index
    %240 = vector.load %arg1[%c6_117, %c0_118, %c0_119] : memref<9x1x32xf32, #tpu.memory_space<vmem>>, vector<1x1x32xf32>
    %241 = vector.shape_cast %240 : vector<1x1x32xf32> to vector<1x32xf32>
    %242 = vector.broadcast %241 : vector<1x32xf32> to vector<12x32xf32>
    %243 = arith.mulf %239, %242 : vector<12x32xf32>
    %244 = vector.extract_strided_slice %200 {offsets = [0, 4], sizes = [12, 28], strides = [1, 1]} : vector<12x32xf32> to vector<12x28xf32>
    %245 = vector.extract_strided_slice %200 {offsets = [0, 0], sizes = [12, 4], strides = [1, 1]} : vector<12x32xf32> to vector<12x4xf32>
    %246 = tpu.concatenate %244, %245 in 1 : vector<12x28xf32>, vector<12x4xf32> -> vector<12x32xf32>
    %c7_120 = arith.constant 7 : index
    %c0_121 = arith.constant 0 : index
    %c0_122 = arith.constant 0 : index
    %247 = vector.load %arg1[%c7_120, %c0_121, %c0_122] : memref<9x1x32xf32, #tpu.memory_space<vmem>>, vector<1x1x32xf32>
    %248 = vector.shape_cast %247 : vector<1x1x32xf32> to vector<1x32xf32>
    %249 = vector.broadcast %248 : vector<1x32xf32> to vector<12x32xf32>
    %250 = arith.mulf %246, %249 : vector<12x32xf32>
    %251 = vector.extract_strided_slice %200 {offsets = [0, 5], sizes = [12, 27], strides = [1, 1]} : vector<12x32xf32> to vector<12x27xf32>
    %252 = vector.extract_strided_slice %200 {offsets = [0, 0], sizes = [12, 5], strides = [1, 1]} : vector<12x32xf32> to vector<12x5xf32>
    %253 = tpu.concatenate %251, %252 in 1 : vector<12x27xf32>, vector<12x5xf32> -> vector<12x32xf32>
    %c8_123 = arith.constant 8 : index
    %c0_124 = arith.constant 0 : index
    %c0_125 = arith.constant 0 : index
    %254 = vector.load %arg1[%c8_123, %c0_124, %c0_125] : memref<9x1x32xf32, #tpu.memory_space<vmem>>, vector<1x1x32xf32>
    %255 = vector.shape_cast %254 : vector<1x1x32xf32> to vector<1x32xf32>
    %256 = vector.broadcast %255 : vector<1x32xf32> to vector<12x32xf32>
    %257 = arith.mulf %253, %256 : vector<12x32xf32>
    %258 = tpu.concatenate %208, %215, %222, %229, %200, %236, %243, %250, %257 in 0 : vector<12x32xf32>, vector<12x32xf32>, vector<12x32xf32>, vector<12x32xf32>, vector<12x32xf32>, vector<12x32xf32>, vector<12x32xf32>, vector<12x32xf32>, vector<12x32xf32> -> vector<108x32xf32>
    %259 = arith.truncf %258 : vector<108x32xf32> to vector<108x32xbf16>
    %c1_126 = arith.constant 1 : index
    %c0_127 = arith.constant 0 : index
    %c0_128 = arith.constant 0 : index
    %260 = vector.load %arg6[%c1_126, %c0_127, %c0_128] : memref<2x32x108xbf16, #tpu.memory_space<vmem>>, vector<1x32x108xbf16>
    %261 = vector.shape_cast %260 : vector<1x32x108xbf16> to vector<32x108xbf16>
    %cst_129 = arith.constant dense<0.000000e+00> : vector<32x32xf32>
    %262 = tpu.matmul %261, %259, %cst_129 {dimension_numbers = #tpu.dot_dimension_numbers<[1], [0], [0], [1], [0, 0, 1, 1], [], []>} : vector<32x108xbf16>, vector<108x32xbf16>, vector<32x32xf32> -> vector<32x32xf32>
    %c1_130 = arith.constant 1 : index
    %c0_131 = arith.constant 0 : index
    %c0_132 = arith.constant 0 : index
    %263 = vector.load %arg7[%c1_130, %c0_131, %c0_132] : memref<2x32x1xf32, #tpu.memory_space<vmem>>, vector<1x32x1xf32>
    %264 = vector.shape_cast %263 : vector<1x32x1xf32> to vector<32x1xf32>
    %265 = vector.broadcast %264 : vector<32x1xf32> to vector<32x32xf32>
    %266 = arith.addf %262, %265 : vector<32x32xf32>
    %cst_133 = arith.constant 0.000000e+00 : f32
    %267 = vector.broadcast %cst_133 : f32 to vector<32x32xf32>
    %268 = arith.maximumf %266, %267 : vector<32x32xf32>
    %c1_134 = arith.constant 1 : index
    %c0_135 = arith.constant 0 : index
    %c0_136 = arith.constant 0 : index
    %269 = vector.load %arg8[%c1_134, %c0_135, %c0_136] : memref<2x32x32xbf16, #tpu.memory_space<vmem>>, vector<1x32x32xbf16>
    %270 = vector.shape_cast %269 : vector<1x32x32xbf16> to vector<32x32xbf16>
    %271 = arith.truncf %268 : vector<32x32xf32> to vector<32x32xbf16>
    %cst_137 = arith.constant dense<0.000000e+00> : vector<32x32xf32>
    %272 = tpu.matmul %270, %271, %cst_137 {dimension_numbers = #tpu.dot_dimension_numbers<[1], [0], [0], [1], [0, 0, 1, 1], [], []>} : vector<32x32xbf16>, vector<32x32xbf16>, vector<32x32xf32> -> vector<32x32xf32>
    %c1_138 = arith.constant 1 : index
    %c0_139 = arith.constant 0 : index
    %c0_140 = arith.constant 0 : index
    %273 = vector.load %arg9[%c1_138, %c0_139, %c0_140] : memref<2x32x1xf32, #tpu.memory_space<vmem>>, vector<1x32x1xf32>
    %274 = vector.shape_cast %273 : vector<1x32x1xf32> to vector<32x1xf32>
    %275 = vector.broadcast %274 : vector<32x1xf32> to vector<32x32xf32>
    %276 = arith.addf %272, %275 : vector<32x32xf32>
    %cst_141 = arith.constant 0.000000e+00 : f32
    %277 = vector.broadcast %cst_141 : f32 to vector<32x32xf32>
    %278 = arith.maximumf %276, %277 : vector<32x32xf32>
    %279 = vector.extract_strided_slice %278 {offsets = [0, 27], sizes = [32, 5], strides = [1, 1]} : vector<32x32xf32> to vector<32x5xf32>
    %280 = vector.extract_strided_slice %278 {offsets = [0, 0], sizes = [32, 27], strides = [1, 1]} : vector<32x32xf32> to vector<32x27xf32>
    %281 = tpu.concatenate %279, %280 in 1 : vector<32x5xf32>, vector<32x27xf32> -> vector<32x32xf32>
    %c0_142 = arith.constant 0 : index
    %c0_143 = arith.constant 0 : index
    %c0_144 = arith.constant 0 : index
    %282 = vector.load %arg1[%c0_142, %c0_143, %c0_144] : memref<9x1x32xf32, #tpu.memory_space<vmem>>, vector<1x1x32xf32>
    %283 = vector.shape_cast %282 : vector<1x1x32xf32> to vector<1x32xf32>
    %284 = vector.broadcast %283 : vector<1x32xf32> to vector<32x32xf32>
    %285 = arith.mulf %281, %284 : vector<32x32xf32>
    %286 = vector.extract_strided_slice %278 {offsets = [0, 28], sizes = [32, 4], strides = [1, 1]} : vector<32x32xf32> to vector<32x4xf32>
    %287 = vector.extract_strided_slice %278 {offsets = [0, 0], sizes = [32, 28], strides = [1, 1]} : vector<32x32xf32> to vector<32x28xf32>
    %288 = tpu.concatenate %286, %287 in 1 : vector<32x4xf32>, vector<32x28xf32> -> vector<32x32xf32>
    %c1_145 = arith.constant 1 : index
    %c0_146 = arith.constant 0 : index
    %c0_147 = arith.constant 0 : index
    %289 = vector.load %arg1[%c1_145, %c0_146, %c0_147] : memref<9x1x32xf32, #tpu.memory_space<vmem>>, vector<1x1x32xf32>
    %290 = vector.shape_cast %289 : vector<1x1x32xf32> to vector<1x32xf32>
    %291 = vector.broadcast %290 : vector<1x32xf32> to vector<32x32xf32>
    %292 = arith.mulf %288, %291 : vector<32x32xf32>
    %293 = vector.extract_strided_slice %278 {offsets = [0, 29], sizes = [32, 3], strides = [1, 1]} : vector<32x32xf32> to vector<32x3xf32>
    %294 = vector.extract_strided_slice %278 {offsets = [0, 0], sizes = [32, 29], strides = [1, 1]} : vector<32x32xf32> to vector<32x29xf32>
    %295 = tpu.concatenate %293, %294 in 1 : vector<32x3xf32>, vector<32x29xf32> -> vector<32x32xf32>
    %c2_148 = arith.constant 2 : index
    %c0_149 = arith.constant 0 : index
    %c0_150 = arith.constant 0 : index
    %296 = vector.load %arg1[%c2_148, %c0_149, %c0_150] : memref<9x1x32xf32, #tpu.memory_space<vmem>>, vector<1x1x32xf32>
    %297 = vector.shape_cast %296 : vector<1x1x32xf32> to vector<1x32xf32>
    %298 = vector.broadcast %297 : vector<1x32xf32> to vector<32x32xf32>
    %299 = arith.mulf %295, %298 : vector<32x32xf32>
    %300 = vector.extract_strided_slice %278 {offsets = [0, 31], sizes = [32, 1], strides = [1, 1]} : vector<32x32xf32> to vector<32x1xf32>
    %301 = vector.extract_strided_slice %278 {offsets = [0, 0], sizes = [32, 31], strides = [1, 1]} : vector<32x32xf32> to vector<32x31xf32>
    %302 = tpu.concatenate %300, %301 in 1 : vector<32x1xf32>, vector<32x31xf32> -> vector<32x32xf32>
    %c3_151 = arith.constant 3 : index
    %c0_152 = arith.constant 0 : index
    %c0_153 = arith.constant 0 : index
    %303 = vector.load %arg1[%c3_151, %c0_152, %c0_153] : memref<9x1x32xf32, #tpu.memory_space<vmem>>, vector<1x1x32xf32>
    %304 = vector.shape_cast %303 : vector<1x1x32xf32> to vector<1x32xf32>
    %305 = vector.broadcast %304 : vector<1x32xf32> to vector<32x32xf32>
    %306 = arith.mulf %302, %305 : vector<32x32xf32>
    %307 = vector.extract_strided_slice %278 {offsets = [0, 1], sizes = [32, 31], strides = [1, 1]} : vector<32x32xf32> to vector<32x31xf32>
    %308 = vector.extract_strided_slice %278 {offsets = [0, 0], sizes = [32, 1], strides = [1, 1]} : vector<32x32xf32> to vector<32x1xf32>
    %309 = tpu.concatenate %307, %308 in 1 : vector<32x31xf32>, vector<32x1xf32> -> vector<32x32xf32>
    %c5_154 = arith.constant 5 : index
    %c0_155 = arith.constant 0 : index
    %c0_156 = arith.constant 0 : index
    %310 = vector.load %arg1[%c5_154, %c0_155, %c0_156] : memref<9x1x32xf32, #tpu.memory_space<vmem>>, vector<1x1x32xf32>
    %311 = vector.shape_cast %310 : vector<1x1x32xf32> to vector<1x32xf32>
    %312 = vector.broadcast %311 : vector<1x32xf32> to vector<32x32xf32>
    %313 = arith.mulf %309, %312 : vector<32x32xf32>
    %314 = vector.extract_strided_slice %278 {offsets = [0, 3], sizes = [32, 29], strides = [1, 1]} : vector<32x32xf32> to vector<32x29xf32>
    %315 = vector.extract_strided_slice %278 {offsets = [0, 0], sizes = [32, 3], strides = [1, 1]} : vector<32x32xf32> to vector<32x3xf32>
    %316 = tpu.concatenate %314, %315 in 1 : vector<32x29xf32>, vector<32x3xf32> -> vector<32x32xf32>
    %c6_157 = arith.constant 6 : index
    %c0_158 = arith.constant 0 : index
    %c0_159 = arith.constant 0 : index
    %317 = vector.load %arg1[%c6_157, %c0_158, %c0_159] : memref<9x1x32xf32, #tpu.memory_space<vmem>>, vector<1x1x32xf32>
    %318 = vector.shape_cast %317 : vector<1x1x32xf32> to vector<1x32xf32>
    %319 = vector.broadcast %318 : vector<1x32xf32> to vector<32x32xf32>
    %320 = arith.mulf %316, %319 : vector<32x32xf32>
    %321 = vector.extract_strided_slice %278 {offsets = [0, 4], sizes = [32, 28], strides = [1, 1]} : vector<32x32xf32> to vector<32x28xf32>
    %322 = vector.extract_strided_slice %278 {offsets = [0, 0], sizes = [32, 4], strides = [1, 1]} : vector<32x32xf32> to vector<32x4xf32>
    %323 = tpu.concatenate %321, %322 in 1 : vector<32x28xf32>, vector<32x4xf32> -> vector<32x32xf32>
    %c7_160 = arith.constant 7 : index
    %c0_161 = arith.constant 0 : index
    %c0_162 = arith.constant 0 : index
    %324 = vector.load %arg1[%c7_160, %c0_161, %c0_162] : memref<9x1x32xf32, #tpu.memory_space<vmem>>, vector<1x1x32xf32>
    %325 = vector.shape_cast %324 : vector<1x1x32xf32> to vector<1x32xf32>
    %326 = vector.broadcast %325 : vector<1x32xf32> to vector<32x32xf32>
    %327 = arith.mulf %323, %326 : vector<32x32xf32>
    %328 = vector.extract_strided_slice %278 {offsets = [0, 5], sizes = [32, 27], strides = [1, 1]} : vector<32x32xf32> to vector<32x27xf32>
    %329 = vector.extract_strided_slice %278 {offsets = [0, 0], sizes = [32, 5], strides = [1, 1]} : vector<32x32xf32> to vector<32x5xf32>
    %330 = tpu.concatenate %328, %329 in 1 : vector<32x27xf32>, vector<32x5xf32> -> vector<32x32xf32>
    %c8_163 = arith.constant 8 : index
    %c0_164 = arith.constant 0 : index
    %c0_165 = arith.constant 0 : index
    %331 = vector.load %arg1[%c8_163, %c0_164, %c0_165] : memref<9x1x32xf32, #tpu.memory_space<vmem>>, vector<1x1x32xf32>
    %332 = vector.shape_cast %331 : vector<1x1x32xf32> to vector<1x32xf32>
    %333 = vector.broadcast %332 : vector<1x32xf32> to vector<32x32xf32>
    %334 = arith.mulf %330, %333 : vector<32x32xf32>
    %335 = tpu.concatenate %285, %292, %299, %306, %278, %313, %320, %327, %334 in 0 : vector<32x32xf32>, vector<32x32xf32>, vector<32x32xf32>, vector<32x32xf32>, vector<32x32xf32>, vector<32x32xf32>, vector<32x32xf32>, vector<32x32xf32>, vector<32x32xf32> -> vector<288x32xf32>
    %336 = arith.truncf %335 : vector<288x32xf32> to vector<288x32xbf16>
    %c1_166 = arith.constant 1 : index
    %c0_167 = arith.constant 0 : index
    %c0_168 = arith.constant 0 : index
    %337 = vector.load %arg10[%c1_166, %c0_167, %c0_168] : memref<2x24x288xbf16, #tpu.memory_space<vmem>>, vector<1x24x288xbf16>
    %338 = vector.shape_cast %337 : vector<1x24x288xbf16> to vector<24x288xbf16>
    %cst_169 = arith.constant dense<0.000000e+00> : vector<24x32xf32>
    %339 = tpu.matmul %338, %336, %cst_169 {dimension_numbers = #tpu.dot_dimension_numbers<[1], [0], [0], [1], [0, 0, 1, 1], [], []>} : vector<24x288xbf16>, vector<288x32xbf16>, vector<24x32xf32> -> vector<24x32xf32>
    %c1_170 = arith.constant 1 : index
    %c0_171 = arith.constant 0 : index
    %c0_172 = arith.constant 0 : index
    %340 = vector.load %arg11[%c1_170, %c0_171, %c0_172] : memref<2x24x1xf32, #tpu.memory_space<vmem>>, vector<1x24x1xf32>
    %341 = vector.shape_cast %340 : vector<1x24x1xf32> to vector<24x1xf32>
    %342 = vector.broadcast %341 : vector<24x1xf32> to vector<24x32xf32>
    %343 = arith.addf %339, %342 : vector<24x32xf32>
    %344 = vector.extract_strided_slice %343 {offsets = [0, 0], sizes = [12, 32], strides = [1, 1]} : vector<24x32xf32> to vector<12x32xf32>
    %345 = vector.extract_strided_slice %343 {offsets = [12, 0], sizes = [12, 32], strides = [1, 1]} : vector<24x32xf32> to vector<12x32xf32>
    %cst_173 = arith.constant 2.000000e+00 : f32
    %346 = vector.broadcast %cst_173 : f32 to vector<12x32xf32>
    %347 = arith.addf %345, %346 : vector<12x32xf32>
    %348 = math.absf %347 : vector<12x32xf32>
    %cst_174 = arith.constant 0.000000e+00 : f32
    %349 = vector.broadcast %cst_174 : f32 to vector<12x32xf32>
    %350 = arith.subf %349, %348 : vector<12x32xf32>
    %351 = math.exp %350 : vector<12x32xf32>
    %cst_175 = arith.constant 1.000000e+00 : f32
    %352 = vector.broadcast %cst_175 : f32 to vector<12x32xf32>
    %353 = arith.addf %352, %351 : vector<12x32xf32>
    %cst_176 = arith.constant 0.000000e+00 : f32
    %354 = vector.broadcast %cst_176 : f32 to vector<12x32xf32>
    %355 = arith.minimumf %347, %354 : vector<12x32xf32>
    %356 = math.log %353 : vector<12x32xf32>
    %357 = arith.subf %355, %356 : vector<12x32xf32>
    %cst_177 = arith.constant 0.000000e+00 : f32
    %358 = vector.broadcast %cst_177 : f32 to vector<12x32xf32>
    %359 = arith.cmpf olt, %347, %358 : vector<12x32xf32>
    %cst_178 = arith.constant 1.000000e+00 : f32
    %360 = vector.broadcast %cst_178 : f32 to vector<12x32xf32>
    %361 = arith.select %359, %351, %360 : vector<12x32xi1>, vector<12x32xf32>
    %362 = tpu.reciprocal %353 {approx = true} : vector<12x32xf32> -> vector<12x32xf32>
    %363 = arith.mulf %361, %362 : vector<12x32xf32>
    %364 = arith.addf %201, %344 : vector<12x32xf32>
    %365 = arith.mulf %364, %363 : vector<12x32xf32>
    %cst_179 = arith.constant dense<0.000000e+00> : vector<32xf32>
    %366 = vector.multi_reduction <add>, %357, %cst_179 [0] : vector<12x32xf32> to vector<32xf32>
    %367 = vector.shape_cast %366 : vector<32xf32> to vector<1x32xf32>
    %368 = arith.addf %184, %367 : vector<1x32xf32>
    %369 = tpu.concatenate %200, %365 in 0 : vector<12x32xf32>, vector<12x32xf32> -> vector<24x32xf32>
    %c0_180 = arith.constant 0 : index
    %c0_181 = arith.constant 0 : index
    %370 = vector.load %arg13[%c0_180, %c0_181] : memref<24x32xf32, #tpu.memory_space<vmem>>, vector<24x32xf32>
    tpu.vector_store %arg13[%c0_180, %c0_181], %369 {strides = array<i32>} : memref<24x32xf32, #tpu.memory_space<vmem>>, vector<24x32xf32>,
    %c0_182 = arith.constant 0 : index
    %c0_183 = arith.constant 0 : index
    %371 = vector.load %arg12[%c0_182, %c0_183] : memref<32x128xf32, #tpu.memory_space<vmem>>, vector<32x128xf32>
    %cst_184 = arith.constant dense<0.000000e+00> : vector<1x128xf32>
    %372 = tpu.matmul %368, %371, %cst_184 {dimension_numbers = #tpu.dot_dimension_numbers<[1], [0], [0], [1], [0, 0, 1, 1], [], []>} : vector<1x32xf32>, vector<32x128xf32>, vector<1x128xf32> -> vector<1x128xf32>
    %c0_185 = arith.constant 0 : index
    %c0_186 = arith.constant 0 : index
    %373 = vector.load %arg14[%c0_185, %c0_186] : memref<1x128xf32, #tpu.memory_space<vmem>>, vector<1x128xf32>
    tpu.vector_store %arg14[%c0_185, %c0_186], %372 {strides = array<i32>} : memref<1x128xf32, #tpu.memory_space<vmem>>, vector<1x128xf32>,
    return
  }
}

</mosaic_0001>

<llo_original>
// kernel: _lambda_.2
$region0: #{_lambda_.2}
  #allocation0 [shape = 'u32[]', space=smem, size = 0x4, offset = 0x4, fixed_abs, tag = 'smem constant byte address 0x4 - core index']
  #allocation1 [shape = 'u32[144,128]{1,0:T(1,128)}', space=vmem, size = 0x12000, scoped, tag = 'internal scratch']
  %s0 = inlined_call_operand.vmem [shape: f32[12,128], index: 0, kind: input, shape index: {}]
  %s1 = inlined_call_operand.vmem [shape: f32[9,1,128], index: 1, kind: input, shape index: {}]
  %s2 = inlined_call_operand.vmem [shape: f32[2,12,12], index: 2, kind: input, shape index: {}]
  %s3 = inlined_call_operand.vmem [shape: f32[2,12,1], index: 3, kind: input, shape index: {}]
  %s4 = inlined_call_operand.vmem [shape: f32[2,128,8], index: 4, kind: input, shape index: {}]
  %s5 = inlined_call_operand.vmem [shape: f32[2,8,128], index: 5, kind: input, shape index: {}]
  %s6 = inlined_call_operand.vmem [shape: bf16[2,32,54], index: 6, kind: input, shape index: {}]
  %s7 = inlined_call_operand.vmem [shape: f32[2,32,1], index: 7, kind: input, shape index: {}, may-alias: {7,9}]
  %s8 = inlined_call_operand.vmem [shape: bf16[2,32,32], index: 8, kind: input, shape index: {}]
  %s9 = inlined_call_operand.vmem [shape: f32[2,32,1], index: 9, kind: input, shape index: {}, may-alias: {7,9}]
  %s10 = inlined_call_operand.vmem [shape: bf16[2,12,288], index: 10, kind: input, shape index: {}]
  %s11 = inlined_call_operand.vmem [shape: f32[2,12,1], index: 11, kind: input, shape index: {}]
  %s12 = inlined_call_operand.vmem [shape: bf16[12,54], index: 12, kind: input, shape index: {}]
  %s13 = inlined_call_operand.vmem [shape: f32[12,1], index: 13, kind: input, shape index: {}]
  %s14 = inlined_call_operand.vmem [shape: f32[128,128], index: 14, kind: input, shape index: {}]
  %s15 = inlined_call_operand.vmem [shape: f32[6,128], index: 15, kind: output, shape index: {0}]
  %s16 = inlined_call_operand.vmem [shape: f32[1,128], index: 16, kind: output, shape index: {1}]
  %17 = xla_tuple %s15, %s16
  %s18 = sld [smem:[#allocation0]]
  $region78: #{_lambda_.2} parent=0
    _
  %s20 = ssub.s32 1, %s18
  %s21 = scalar_select 0, %s20, %s18
  // Predicated region
  $region2: #{_lambda_.2} parent=0 // pred_check
    _
  $region3: #{_lambda_.2} parent=0 // pred_check_branch
    %23 = sbr.rel (0) target = $region5
  $region4: #{_lambda_.2} parent=0 // pred_region
    _
  $region5: #{_lambda_.2} parent=0 // pred_fallthru
    _
  // Predicated region
  $region6: #{_lambda_.2} parent=0 // pred_check
    _
  $region7: #{_lambda_.2} parent=0 // pred_check_branch
    %25 = sbr.rel (0) target = $region9
  $region8: #{_lambda_.2} parent=0 // pred_region
    _
  $region9: #{_lambda_.2} parent=0 // pred_fallthru
    _
  // Predicated region
  $region10: #{_lambda_.2} parent=0 // pred_check
    _
  $region11: #{_lambda_.2} parent=0 // pred_check_branch
    %27 = sbr.rel (0) target = $region13
  $region12: #{_lambda_.2} parent=0 // pred_region
    _
  $region13: #{_lambda_.2} parent=0 // pred_fallthru
    _
  // Predicated region
  $region14: #{_lambda_.2} parent=0 // pred_check
    _
  $region15: #{_lambda_.2} parent=0 // pred_check_branch
    %29 = sbr.rel (0) target = $region17
  $region16: #{_lambda_.2} parent=0 // pred_region
    _
  $region17: #{_lambda_.2} parent=0 // pred_fallthru
    _
  // Predicated region
  $region18: #{_lambda_.2} parent=0 // pred_check
    _
  $region19: #{_lambda_.2} parent=0 // pred_check_branch
    %31 = sbr.rel (0) target = $region21
  $region20: #{_lambda_.2} parent=0 // pred_region
    _
  $region21: #{_lambda_.2} parent=0 // pred_fallthru
    _
  // Predicated region
  $region22: #{_lambda_.2} parent=0 // pred_check
    _
  $region23: #{_lambda_.2} parent=0 // pred_check_branch
    %33 = sbr.rel (0) target = $region25
  $region24: #{_lambda_.2} parent=0 // pred_region
    _
  $region25: #{_lambda_.2} parent=0 // pred_fallthru
    _
  // Predicated region
  $region26: #{_lambda_.2} parent=0 // pred_check
    _
  $region27: #{_lambda_.2} parent=0 // pred_check_branch
    %35 = sbr.rel (0) target = $region29
  $region28: #{_lambda_.2} parent=0 // pred_region
    _
  $region29: #{_lambda_.2} parent=0 // pred_fallthru
    _
  // Predicated region
  $region30: #{_lambda_.2} parent=0 // pred_check
    _
  $region31: #{_lambda_.2} parent=0 // pred_check_branch
    %37 = sbr.rel (0) target = $region33
  $region32: #{_lambda_.2} parent=0 // pred_region
    _
  $region33: #{_lambda_.2} parent=0 // pred_fallthru
    _
  // Predicated region
  $region34: #{_lambda_.2} parent=0 // pred_check
    _
  $region35: #{_lambda_.2} parent=0 // pred_check_branch
    %39 = sbr.rel (0) target = $region37
  $region36: #{_lambda_.2} parent=0 // pred_region
    _
  $region37: #{_lambda_.2} parent=0 // pred_fallthru
    _
  // Predicated region
  $region38: #{_lambda_.2} parent=0 // pred_check
    _
  $region39: #{_lambda_.2} parent=0 // pred_check_branch
    %41 = sbr.rel (0) target = $region41
  $region40: #{_lambda_.2} parent=0 // pred_region
    _
  $region41: #{_lambda_.2} parent=0 // pred_fallthru
    _
  // Predicated region
  $region42: #{_lambda_.2} parent=0 // pred_check
    _
  $region43: #{_lambda_.2} parent=0 // pred_check_branch
    %43 = sbr.rel (0) target = $region45
  $region44: #{_lambda_.2} parent=0 // pred_region
    _
  $region45: #{_lambda_.2} parent=0 // pred_fallthru
    _
  // Predicated region
  $region46: #{_lambda_.2} parent=0 // pred_check
    _
  $region47: #{_lambda_.2} parent=0 // pred_check_branch
    %45 = sbr.rel (0) target = $region49
  $region48: #{_lambda_.2} parent=0 // pred_region
    _
  $region49: #{_lambda_.2} parent=0 // pred_fallthru
    _
  // Predicated region
  $region50: #{_lambda_.2} parent=0 // pred_check
    _
  $region51: #{_lambda_.2} parent=0 // pred_check_branch
    %47 = sbr.rel (0) target = $region53
  $region52: #{_lambda_.2} parent=0 // pred_region
    _
  $region53: #{_lambda_.2} parent=0 // pred_fallthru
    _
  // Predicated region
  $region54: #{_lambda_.2} parent=0 // pred_check
    _
  $region55: #{_lambda_.2} parent=0 // pred_check_branch
    %49 = sbr.rel (0) target = $region57
  $region56: #{_lambda_.2} parent=0 // pred_region
    _
  $region57: #{_lambda_.2} parent=0 // pred_fallthru
    _
  // Predicated region
  $region58: #{_lambda_.2} parent=0 // pred_check
    _
  $region59: #{_lambda_.2} parent=0 // pred_check_branch
    %51 = sbr.rel (0) target = $region61
  $region60: #{_lambda_.2} parent=0 // pred_region
    _
  $region61: #{_lambda_.2} parent=0 // pred_fallthru
    _
  %v53 = vld [vmem:[%s0] sm:$0xff]
  %v54 = vld [vmem:[%s0 + $0x8] sm:$0xf]
  %v55 = vld [vmem:[%s2] sm:$0xff]
  %v56 = vld [vmem:[%s2 + $0x8] sm:$0xf]
  %v57 = vld [vmem:[%s3] sm:$0xff]
  %v58 = vld [vmem:[%s3 + $0x8] sm:$0xf]
  %60 = vset.pattern.permute.xlu0 0
  %61 = vperm.xlu0 %60, %v57
  %v62 = vpop.permute.xlu0 %61
  %65 = vset.pattern.permute.xlu0 0
  %66 = vperm.xlu0 %65, %v58
  %v67 = vpop.permute.xlu0 %66
  %vm69 = vcmask 97280
  %v71 = vsel %vm69, %v55, 0
  %v74 = vsel %vm69, %v56, 0
  %vm76 = vcmask 1043456
  %v78 = vsel %vm76, %v54, 0
  %80 = vmatprep.subr.mxu0 0.0
  %81 = vmatpush1.msra.mxu0 %v53
  %82 = vmatprep.subr.mxu0 0.0
  %83 = vmatpush1.msra.mxu0 %v78
  %84 = vmatprep.subr.mxu0 0.0
  %85 = vmatpush1.msra.mxu0 0.0
  %86 = vmatprep.subr.mxu0 0.0
  %87 = vmatpush1.msra.mxu0 0.0
  %88 = vmatprep.subr.mxu0 0.0
  %89 = vmatpush1.msra.mxu0 0.0
  %90 = vmatprep.subr.mxu0 0.0
  %91 = vmatpush1.msra.mxu0 0.0
  %92 = vmatprep.subr.mxu0 0.0
  %93 = vmatpush1.msra.mxu0 0.0
  %94 = vmatprep.subr.mxu0 0.0
  %95 = vmatpush1.msra.mxu0 0.0
  %96 = vmatprep.subr.mxu0 0.0
  %97 = vmatpush1.msra.mxu0 0.0
  %98 = vmatprep.subr.mxu0 0.0
  %99 = vmatpush1.msra.mxu0 0.0
  %100 = vmatprep.subr.mxu0 0.0
  %101 = vmatpush1.msra.mxu0 0.0
  %102 = vmatprep.subr.mxu0 0.0
  %103 = vmatpush1.msra.mxu0 0.0
  %104 = vmatprep.subr.mxu0 0.0
  %105 = vmatpush1.msra.mxu0 0.0
  %106 = vmatprep.subr.mxu0 0.0
  %107 = vmatpush1.msra.mxu0 0.0
  %108 = vmatprep.subr.mxu0 0.0
  %109 = vmatpush1.msra.mxu0 0.0
  %110 = vmatprep.subr.mxu0 0.0
  %111 = vmatpush1.msra.mxu0 0.0
  %112 = vmatprep.subr.mxu0 0.0
  %113 = vmatpush1.msra.mxu0 0.0
  %114 = vmatprep.subr.mxu0 0.0
  %115 = vmatpush1.msra.mxu0 0.0
  %116 = vmatprep.subr.mxu0 0.0
  %117 = vmatpush1.msra.mxu0 0.0
  %118 = vmatprep.subr.mxu0 0.0
  %119 = vmatpush1.msra.mxu0 0.0
  %120 = vmatprep.subr.mxu0 0.0
  %121 = vmatpush1.msra.mxu0 0.0
  %122 = vmatprep.subr.mxu0 0.0
  %123 = vmatpush1.msra.mxu0 0.0
  %124 = vmatprep.subr.mxu0 0.0
  %125 = vmatpush1.msra.mxu0 0.0
  %126 = vmatprep.subr.mxu0 0.0
  %127 = vmatpush1.msra.mxu0 0.0
  %128 = vmatprep.subr.mxu0 0.0
  %129 = vmatpush1.msra.mxu0 0.0
  %130 = vmatprep.subr.mxu0 0.0
  %131 = vmatpush1.msra.mxu0 0.0
  %132 = vmatprep.subr.mxu0 0.0
  %133 = vmatpush1.msra.mxu0 0.0
  %134 = vmatprep.subr.mxu0 0.0
  %135 = vmatpush1.msra.mxu0 0.0
  %136 = vmatprep.subr.mxu0 0.0
  %137 = vmatpush1.msra.mxu0 0.0
  %138 = vmatprep.subr.mxu0 0.0
  %139 = vmatpush1.msra.mxu0 0.0
  %140 = vmatprep.subr.mxu0 0.0
  %141 = vmatpush1.msra.mxu0 0.0
  %142 = vmatprep.subr.mxu0 0.0
  %143 = vmatpush1.msra.mxu0 0.0
  %144 = vmatprep.mubr.f32.mxu0 0.0
  %145 = vmatmul.mubr.f32.gmra.mrb[0].mxu0 %v71
  %v146 = vpop.f32.mrb[0].mxu0
  %v147 = vadd.f32 %v62, %v146
  %v148 = vpop.f32.mrb[0].mxu0
  %149 = vmatprep.mubr.f32.mxu0 0.0
  %150 = vmatmul.mubr.f32.gmra.mrb[0].mxu0 %v74
  %v151 = vpop.f32.mrb[0].mxu0
  %v152 = vadd.f32 %v67, %v151
  %v153 = vpop.f32.mrb[0].mxu0
  %154 = vdwg.mxu0
  %v155 = vld [vmem:[%s4] sm:$0xff]
  %v156 = vld [vmem:[%s4 + $0x8] sm:$0xff]
  %v157 = vld [vmem:[%s4 + $0x10] sm:$0xff]
  %v158 = vld [vmem:[%s4 + $0x18] sm:$0xff]
  %v159 = vld [vmem:[%s4 + $0x20] sm:$0xff]
  %v160 = vld [vmem:[%s4 + $0x28] sm:$0xff]
  %v161 = vld [vmem:[%s4 + $0x30] sm:$0xff]
  %v162 = vld [vmem:[%s4 + $0x38] sm:$0xff]
  %v163 = vld [vmem:[%s4 + $0x40] sm:$0xff]
  %v164 = vld [vmem:[%s4 + $0x48] sm:$0xff]
  %v165 = vld [vmem:[%s4 + $0x50] sm:$0xff]
  %v166 = vld [vmem:[%s4 + $0x58] sm:$0xff]
  %v167 = vld [vmem:[%s4 + $0x60] sm:$0xff]
  %v168 = vld [vmem:[%s4 + $0x68] sm:$0xff]
  %v169 = vld [vmem:[%s4 + $0x70] sm:$0xff]
  %v170 = vld [vmem:[%s4 + $0x78] sm:$0xff]
  %171 = vmatprep.subr.mxu0 0.0
  %172 = vmatpush1.msra.mxu0 %v155
  %173 = vmatprep.subr.mxu0 0.0
  %174 = vmatpush1.msra.mxu0 %v156
  %175 = vmatprep.subr.mxu0 0.0
  %176 = vmatpush1.msra.mxu0 %v157
  %177 = vmatprep.subr.mxu0 0.0
  %178 = vmatpush1.msra.mxu0 %v158
  %179 = vmatprep.subr.mxu0 0.0
  %180 = vmatpush1.msra.mxu0 %v159
  %181 = vmatprep.subr.mxu0 0.0
  %182 = vmatpush1.msra.mxu0 %v160
  %183 = vmatprep.subr.mxu0 0.0
  %184 = vmatpush1.msra.mxu0 %v161
  %185 = vmatprep.subr.mxu0 0.0
  %186 = vmatpush1.msra.mxu0 %v162
  %187 = vmatprep.subr.mxu0 0.0
  %188 = vmatpush1.msra.mxu0 %v163
  %189 = vmatprep.subr.mxu0 0.0
  %190 = vmatpush1.msra.mxu0 %v164
  %191 = vmatprep.subr.mxu0 0.0
  %192 = vmatpush1.msra.mxu0 %v165
  %193 = vmatprep.subr.mxu0 0.0
  %194 = vmatpush1.msra.mxu0 %v166
  %195 = vmatprep.subr.mxu0 0.0
  %196 = vmatpush1.msra.mxu0 %v167
  %197 = vmatprep.subr.mxu0 0.0
  %198 = vmatpush1.msra.mxu0 %v168
  %199 = vmatprep.subr.mxu0 0.0
  %200 = vmatpush1.msra.mxu0 %v169
  %201 = vmatprep.subr.mxu0 0.0
  %202 = vmatpush1.msra.mxu0 %v170
  %203 = vmatprep.subr.mxu0 0.0
  %204 = vmatpush1.msra.mxu0 0.0
  %205 = vmatprep.subr.mxu0 0.0
  %206 = vmatpush1.msra.mxu0 0.0
  %207 = vmatprep.subr.mxu0 0.0
  %208 = vmatpush1.msra.mxu0 0.0
  %209 = vmatprep.subr.mxu0 0.0
  %210 = vmatpush1.msra.mxu0 0.0
  %211 = vmatprep.subr.mxu0 0.0
  %212 = vmatpush1.msra.mxu0 0.0
  %213 = vmatprep.subr.mxu0 0.0
  %214 = vmatpush1.msra.mxu0 0.0
  %215 = vmatprep.subr.mxu0 0.0
  %216 = vmatpush1.msra.mxu0 0.0
  %217 = vmatprep.subr.mxu0 0.0
  %218 = vmatpush1.msra.mxu0 0.0
  %219 = vmatprep.subr.mxu0 0.0
  %220 = vmatpush1.msra.mxu0 0.0
  %221 = vmatprep.subr.mxu0 0.0
  %222 = vmatpush1.msra.mxu0 0.0
  %223 = vmatprep.subr.mxu0 0.0
  %224 = vmatpush1.msra.mxu0 0.0
  %225 = vmatprep.subr.mxu0 0.0
  %226 = vmatpush1.msra.mxu0 0.0
  %227 = vmatprep.subr.mxu0 0.0
  %228 = vmatpush1.msra.mxu0 0.0
  %229 = vmatprep.subr.mxu0 0.0
  %230 = vmatpush1.msra.mxu0 0.0
  %231 = vmatprep.subr.mxu0 0.0
  %232 = vmatpush1.msra.mxu0 0.0
  %233 = vmatprep.subr.mxu0 0.0
  %234 = vmatpush1.msra.mxu0 0.0
  %235 = vmatprep.mubr.f32.mxu0 0.0
  %236 = vmatmul.mubr.f32.gmra.mrb[0].mxu0 %v147
  %v237 = vpop.f32.mrb[0].mxu0
  %v238 = vadd.f32 0.0, %v237
  %v239 = vpop.f32.mrb[0].mxu0
  %240 = vmatprep.mubr.f32.mxu0 0.0
  %241 = vmatmul.mubr.f32.gmra.mrb[0].mxu0 %v152
  %v242 = vpop.f32.mrb[0].mxu0
  %v243 = vadd.f32 0.0, %v242
  %v244 = vpop.f32.mrb[0].mxu0
  %245 = vdwg.mxu0
  %v246 = vld [vmem:[%s5] sm:$0xff]
  %vm247 = vcmask 64512
  %v249 = vsel %vm247, %v238, 0
  %v252 = vsel %vm247, %v243, 0
  %254 = vmatprep.subr.mxu0 0.0
  %255 = vmatpush1.msra.mxu0 %v246
  %256 = vmatprep.subr.mxu0 0.0
  %257 = vmatpush1.msra.mxu0 0.0
  %258 = vmatprep.subr.mxu0 0.0
  %259 = vmatpush1.msra.mxu0 0.0
  %260 = vmatprep.subr.mxu0 0.0
  %261 = vmatpush1.msra.mxu0 0.0
  %262 = vmatprep.subr.mxu0 0.0
  %263 = vmatpush1.msra.mxu0 0.0
  %264 = vmatprep.subr.mxu0 0.0
  %265 = vmatpush1.msra.mxu0 0.0
  %266 = vmatprep.subr.mxu0 0.0
  %267 = vmatpush1.msra.mxu0 0.0
  %268 = vmatprep.subr.mxu0 0.0
  %269 = vmatpush1.msra.mxu0 0.0
  %270 = vmatprep.subr.mxu0 0.0
  %271 = vmatpush1.msra.mxu0 0.0
  %272 = vmatprep.subr.mxu0 0.0
  %273 = vmatpush1.msra.mxu0 0.0
  %274 = vmatprep.subr.mxu0 0.0
  %275 = vmatpush1.msra.mxu0 0.0
  %276 = vmatprep.subr.mxu0 0.0
  %277 = vmatpush1.msra.mxu0 0.0
  %278 = vmatprep.subr.mxu0 0.0
  %279 = vmatpush1.msra.mxu0 0.0
  %280 = vmatprep.subr.mxu0 0.0
  %281 = vmatpush1.msra.mxu0 0.0
  %282 = vmatprep.subr.mxu0 0.0
  %283 = vmatpush1.msra.mxu0 0.0
  %284 = vmatprep.subr.mxu0 0.0
  %285 = vmatpush1.msra.mxu0 0.0
  %286 = vmatprep.subr.mxu0 0.0
  %287 = vmatpush1.msra.mxu0 0.0
  %288 = vmatprep.subr.mxu0 0.0
  %289 = vmatpush1.msra.mxu0 0.0
  %290 = vmatprep.subr.mxu0 0.0
  %291 = vmatpush1.msra.mxu0 0.0
  %292 = vmatprep.subr.mxu0 0.0
  %293 = vmatpush1.msra.mxu0 0.0
  %294 = vmatprep.subr.mxu0 0.0
  %295 = vmatpush1.msra.mxu0 0.0
  %296 = vmatprep.subr.mxu0 0.0
  %297 = vmatpush1.msra.mxu0 0.0
  %298 = vmatprep.subr.mxu0 0.0
  %299 = vmatpush1.msra.mxu0 0.0
  %300 = vmatprep.subr.mxu0 0.0
  %301 = vmatpush1.msra.mxu0 0.0
  %302 = vmatprep.subr.mxu0 0.0
  %303 = vmatpush1.msra.mxu0 0.0
  %304 = vmatprep.subr.mxu0 0.0
  %305 = vmatpush1.msra.mxu0 0.0
  %306 = vmatprep.subr.mxu0 0.0
  %307 = vmatpush1.msra.mxu0 0.0
  %308 = vmatprep.subr.mxu0 0.0
  %309 = vmatpush1.msra.mxu0 0.0
  %310 = vmatprep.subr.mxu0 0.0
  %311 = vmatpush1.msra.mxu0 0.0
  %312 = vmatprep.subr.mxu0 0.0
  %313 = vmatpush1.msra.mxu0 0.0
  %314 = vmatprep.subr.mxu0 0.0
  %315 = vmatpush1.msra.mxu0 0.0
  %316 = vmatprep.subr.mxu0 0.0
  %317 = vmatpush1.msra.mxu0 0.0
  %318 = vmatprep.mubr.f32.mxu0 0.0
  %319 = vmatmul.mubr.f32.gmra.mrb[0].mxu0 %v249
  %v320 = vpop.f32.mrb[0].mxu0
  %v321 = vadd.f32 0.0, %v320
  %v322 = vpop.f32.mrb[0].mxu0
  %323 = vmatprep.mubr.f32.mxu0 0.0
  %324 = vmatmul.mubr.f32.gmra.mrb[0].mxu0 %v252
  %v325 = vpop.f32.mrb[0].mxu0
  %v326 = vadd.f32 0.0, %v325
  %v327 = vpop.f32.mrb[0].mxu0
  %328 = vdwg.mxu0
  %v329 = vadd.f32 %v147, %v321
  %v330 = vadd.f32 %v152, %v326
  %331 = vrot.lane.b32.xlu0 %v329, 9
  %v332 = vpop.permute.xlu0 %331
  %v333 = vld [vmem:[%s1] sm:$0x1]
  %v335 = vlaneseq
  %v336 = vshrl.u32 %v335, 7
  %v337 = vsub.s32 0, %v336
  %v338 = vrot.slane %v333, %v337
  %v340 = vmul.f32 %v332, %v338
  %341 = vrot.lane.b32.xlu0 %v329, 8
  %v342 = vpop.permute.xlu0 %341
  %s343 = scalar_lea.vmem %s1, 1
  %v344 = vld [vmem:[%s343] sm:$0x1]
  %v346 = vlaneseq
  %v347 = vshrl.u32 %v346, 7
  %v348 = vsub.s32 0, %v347
  %v349 = vrot.slane %v344, %v348
  %v351 = vmul.f32 %v342, %v349
  %352 = vrot.lane.b32.xlu0 %v329, 7
  %v353 = vpop.permute.xlu0 %352
  %s354 = scalar_lea.vmem %s1, 2
  %v355 = vld [vmem:[%s354] sm:$0x1]
  %v357 = vlaneseq
  %v358 = vshrl.u32 %v357, 7
  %v359 = vsub.s32 0, %v358
  %v360 = vrot.slane %v355, %v359
  %v362 = vmul.f32 %v353, %v360
  %363 = vrot.lane.b32.xlu0 %v329, 1
  %v364 = vpop.permute.xlu0 %363
  %s365 = scalar_lea.vmem %s1, 3
  %v366 = vld [vmem:[%s365] sm:$0x1]
  %v368 = vlaneseq
  %v369 = vshrl.u32 %v368, 7
  %v370 = vsub.s32 0, %v369
  %v371 = vrot.slane %v366, %v370
  %v373 = vmul.f32 %v364, %v371
  %374 = vrot.lane.b32.xlu0 %v329, 127
  %v375 = vpop.permute.xlu0 %374
  %s376 = scalar_lea.vmem %s1, 5
  %v377 = vld [vmem:[%s376] sm:$0x1]
  %v379 = vlaneseq
  %v380 = vshrl.u32 %v379, 7
  %v381 = vsub.s32 0, %v380
  %v382 = vrot.slane %v377, %v381
  %v384 = vmul.f32 %v375, %v382
  %385 = vrot.lane.b32.xlu0 %v329, 121
  %v386 = vpop.permute.xlu0 %385
  %s387 = scalar_lea.vmem %s1, 6
  %v388 = vld [vmem:[%s387] sm:$0x1]
  %v390 = vlaneseq
  %v391 = vshrl.u32 %v390, 7
  %v392 = vsub.s32 0, %v391
  %v393 = vrot.slane %v388, %v392
  %v395 = vmul.f32 %v386, %v393
  %396 = vrot.lane.b32.xlu0 %v329, 120
  %v397 = vpop.permute.xlu0 %396
  %s398 = scalar_lea.vmem %s1, 7
  %v399 = vld [vmem:[%s398] sm:$0x1]
  %v401 = vlaneseq
  %v402 = vshrl.u32 %v401, 7
  %v403 = vsub.s32 0, %v402
  %v404 = vrot.slane %v399, %v403
  %v406 = vmul.f32 %v397, %v404
  %407 = vrot.lane.b32.xlu0 %v329, 119
  %v408 = vpop.permute.xlu0 %407
  %s409 = scalar_lea.vmem %s1, 8
  %v410 = vld [vmem:[%s409] sm:$0x1]
  %v412 = vlaneseq
  %v413 = vshrl.u32 %v412, 7
  %v414 = vsub.s32 0, %v413
  %v415 = vrot.slane %v410, %v414
  %v417 = vmul.f32 %v408, %v415
  %v419 = vrot.slane %v351, 2
  %v422 = vrot.slane %v362, 4
  %v425 = vrot.slane %v373, 6
  %v428 = vrot.slane %v384, 2
  %v431 = vrot.slane %v395, 4
  %v434 = vrot.slane %v406, 6
  %vm436 = vcmask 1045504
  %v437 = vsel %vm436, %v340, %v419
  %v438 = vsel %vm76, %v419, %v422
  %vm439 = vcmask 1041408
  %v440 = vsel %vm439, %v422, %v425
  %v441 = vsel %vm436, %v329, %v428
  %v442 = vsel %vm76, %v428, %v431
  %v443 = vsel %vm439, %v431, %v434
  %v444 = vpack.c.bf16 %v438, %v437
  %v445 = vpack.c.bf16 %v441, %v440
  %v446 = vpack.c.bf16 %v443, %v442
  %v447 = vpack.c.bf16 %v417, %v417
  %v448 = vld [vmem:[%s6] sm:$0xf]
  %v449 = vld [vmem:[%s6 + $0x4] sm:$0xf]
  %v450 = vld [vmem:[%s6 + $0x8] sm:$0xf]
  %v451 = vld [vmem:[%s6 + $0xc] sm:$0xf]
  %v452 = vld [vmem:[%s7] sm:$0xff]
  %v453 = vld [vmem:[%s7 + $0x8] sm:$0xff]
  %v454 = vld [vmem:[%s7 + $0x10] sm:$0xff]
  %v455 = vld [vmem:[%s7 + $0x18] sm:$0xff]
  %457 = vset.pattern.permute.xlu0 0
  %458 = vperm.xlu0 %457, %v452
  %v459 = vpop.permute.xlu0 %458
  %462 = vset.pattern.permute.xlu0 0
  %463 = vperm.xlu0 %462, %v453
  %v464 = vpop.permute.xlu0 %463
  %467 = vset.pattern.permute.xlu0 0
  %468 = vperm.xlu0 %467, %v454
  %v469 = vpop.permute.xlu0 %468
  %472 = vset.pattern.permute.xlu0 0
  %473 = vperm.xlu0 %472, %v455
  %v474 = vpop.permute.xlu0 %473
  %v480 = vunpack.c.l.b16 %v448
  %v481 = vunpack.c.l.b16 %v449
  %v482 = vunpack.c.l.b16 %v450
  %v483 = vunpack.c.l.b16 %v451
  %v484 = vpack.c.b16 %v481, %v480
  %v485 = vpack.c.b16 %v483, %v482
  %vm486 = vcmask 441344
  %v488 = vsel %vm486, %v484, 0
  %v491 = vsel %vm486, %v485, 0
  %vm493 = vcmask 1042432
  %v495 = vsel %vm493, %v447, 0
  %497 = vmatprep.subr.bf16.mxu0 0
  %498 = vmatpush1.bf16.msra.mxu0 %v444
  %499 = vmatprep.subr.bf16.mxu0 0
  %500 = vmatpush1.bf16.msra.mxu0 %v445
  %501 = vmatprep.subr.bf16.mxu0 0
  %502 = vmatpush1.bf16.msra.mxu0 %v446
  %503 = vmatprep.subr.bf16.mxu0 0
  %504 = vmatpush1.bf16.msra.mxu0 %v495
  %505 = vmatprep.subr.bf16.mxu0 0
  %506 = vmatpush1.bf16.msra.mxu0 0
  %507 = vmatprep.subr.bf16.mxu0 0
  %508 = vmatpush1.bf16.msra.mxu0 0
  %509 = vmatprep.subr.bf16.mxu0 0
  %510 = vmatpush1.bf16.msra.mxu0 0
  %511 = vmatprep.subr.bf16.mxu0 0
  %512 = vmatpush1.bf16.msra.mxu0 0
  %513 = vmatprep.subr.bf16.mxu0 0
  %514 = vmatpush1.bf16.msra.mxu0 0
  %515 = vmatprep.subr.bf16.mxu0 0
  %516 = vmatpush1.bf16.msra.mxu0 0
  %517 = vmatprep.subr.bf16.mxu0 0
  %518 = vmatpush1.bf16.msra.mxu0 0
  %519 = vmatprep.subr.bf16.mxu0 0
  %520 = vmatpush1.bf16.msra.mxu0 0
  %521 = vmatprep.subr.bf16.mxu0 0
  %522 = vmatpush1.bf16.msra.mxu0 0
  %523 = vmatprep.subr.bf16.mxu0 0
  %524 = vmatpush1.bf16.msra.mxu0 0
  %525 = vmatprep.subr.bf16.mxu0 0
  %526 = vmatpush1.bf16.msra.mxu0 0
  %527 = vmatprep.subr.bf16.mxu0 0
  %528 = vmatpush1.bf16.msra.mxu0 0
  %529 = vmatprep.mubr.bf16.mxu0 0
  %530 = vmatmul.mubr.bf16.gmra.mrb[0].mxu0 %v488
  %v531 = vpop.f32.mrb[0].mxu0
  %v532 = vadd.f32 %v459, %v531
  %v533 = vpop.f32.mrb[0].mxu0
  %v534 = vpop.f32.mrb[0].mxu0
  %v535 = vadd.f32 %v464, %v534
  %v536 = vpop.f32.mrb[0].mxu0
  %537 = vmatprep.mubr.bf16.mxu0 0
  %538 = vmatmul.mubr.bf16.gmra.mrb[0].mxu0 %v491
  %v539 = vpop.f32.mrb[0].mxu0
  %v540 = vadd.f32 %v469, %v539
  %v541 = vpop.f32.mrb[0].mxu0
  %v542 = vpop.f32.mrb[0].mxu0
  %v543 = vadd.f32 %v474, %v542
  %v544 = vpop.f32.mrb[0].mxu0
  %545 = vdwg.mxu0
  %v546 = vmax.f32 %v532, 0.0
  %v547 = vmax.f32 %v535, 0.0
  %v548 = vmax.f32 %v540, 0.0
  %v549 = vmax.f32 %v543, 0.0
  %v550 = vld [vmem:[%s8] sm:$0xf]
  %v551 = vld [vmem:[%s8 + $0x4] sm:$0xf]
  %v552 = vld [vmem:[%s8 + $0x8] sm:$0xf]
  %v553 = vld [vmem:[%s8 + $0xc] sm:$0xf]
  %v554 = vpack.c.bf16 %v547, %v546
  %v555 = vpack.c.bf16 %v549, %v548
  %v556 = vld [vmem:[%s9] sm:$0xff]
  %v557 = vld [vmem:[%s9 + $0x8] sm:$0xff]
  %v558 = vld [vmem:[%s9 + $0x10] sm:$0xff]
  %v559 = vld [vmem:[%s9 + $0x18] sm:$0xff]
  %561 = vset.pattern.permute.xlu0 0
  %562 = vperm.xlu0 %561, %v556
  %v563 = vpop.permute.xlu0 %562
  %566 = vset.pattern.permute.xlu0 0
  %567 = vperm.xlu0 %566, %v557
  %v568 = vpop.permute.xlu0 %567
  %571 = vset.pattern.permute.xlu0 0
  %572 = vperm.xlu0 %571, %v558
  %v573 = vpop.permute.xlu0 %572
  %576 = vset.pattern.permute.xlu0 0
  %577 = vperm.xlu0 %576, %v559
  %v578 = vpop.permute.xlu0 %577
  %v584 = vunpack.c.l.b16 %v550
  %v585 = vunpack.c.l.b16 %v551
  %v586 = vunpack.c.l.b16 %v552
  %v587 = vunpack.c.l.b16 %v553
  %v588 = vpack.c.b16 %v585, %v584
  %v589 = vpack.c.b16 %v587, %v586
  %vm590 = vcmask 261120
  %v592 = vsel %vm590, %v588, 0
  %v595 = vsel %vm590, %v589, 0
  %597 = vmatprep.subr.bf16.mxu0 0
  %598 = vmatpush1.bf16.msra.mxu0 %v554
  %599 = vmatprep.subr.bf16.mxu0 0
  %600 = vmatpush1.bf16.msra.mxu0 %v555
  %601 = vmatprep.subr.bf16.mxu0 0
  %602 = vmatpush1.bf16.msra.mxu0 0
  %603 = vmatprep.subr.bf16.mxu0 0
  %604 = vmatpush1.bf16.msra.mxu0 0
  %605 = vmatprep.subr.bf16.mxu0 0
  %606 = vmatpush1.bf16.msra.mxu0 0
  %607 = vmatprep.subr.bf16.mxu0 0
  %608 = vmatpush1.bf16.msra.mxu0 0
  %609 = vmatprep.subr.bf16.mxu0 0
  %610 = vmatpush1.bf16.msra.mxu0 0
  %611 = vmatprep.subr.bf16.mxu0 0
  %612 = vmatpush1.bf16.msra.mxu0 0
  %613 = vmatprep.subr.bf16.mxu0 0
  %614 = vmatpush1.bf16.msra.mxu0 0
  %615 = vmatprep.subr.bf16.mxu0 0
  %616 = vmatpush1.bf16.msra.mxu0 0
  %617 = vmatprep.subr.bf16.mxu0 0
  %618 = vmatpush1.bf16.msra.mxu0 0
  %619 = vmatprep.subr.bf16.mxu0 0
  %620 = vmatpush1.bf16.msra.mxu0 0
  %621 = vmatprep.subr.bf16.mxu0 0
  %622 = vmatpush1.bf16.msra.mxu0 0
  %623 = vmatprep.subr.bf16.mxu0 0
  %624 = vmatpush1.bf16.msra.mxu0 0
  %625 = vmatprep.subr.bf16.mxu0 0
  %626 = vmatpush1.bf16.msra.mxu0 0
  %627 = vmatprep.subr.bf16.mxu0 0
  %628 = vmatpush1.bf16.msra.mxu0 0
  %629 = vmatprep.mubr.bf16.mxu0 0
  %630 = vmatmul.mubr.bf16.gmra.mrb[0].mxu0 %v592
  %v631 = vpop.f32.mrb[0].mxu0
  %v632 = vadd.f32 %v563, %v631
  %v633 = vpop.f32.mrb[0].mxu0
  %v634 = vpop.f32.mrb[0].mxu0
  %v635 = vadd.f32 %v568, %v634
  %v636 = vpop.f32.mrb[0].mxu0
  %637 = vmatprep.mubr.bf16.mxu0 0
  %638 = vmatmul.mubr.bf16.gmra.mrb[0].mxu0 %v595
  %v639 = vpop.f32.mrb[0].mxu0
  %v640 = vadd.f32 %v573, %v639
  %v641 = vpop.f32.mrb[0].mxu0
  %v642 = vpop.f32.mrb[0].mxu0
  %v643 = vadd.f32 %v578, %v642
  %v644 = vpop.f32.mrb[0].mxu0
  %645 = vdwg.mxu0
  %v646 = vmax.f32 %v632, 0.0
  %v647 = vmax.f32 %v635, 0.0
  %v648 = vmax.f32 %v640, 0.0
  %v649 = vmax.f32 %v643, 0.0
  %650 = vrot.lane.b32.xlu0 %v646, 9
  %v651 = vpop.permute.xlu0 %650
  %652 = vrot.lane.b32.xlu0 %v647, 9
  %v653 = vpop.permute.xlu0 %652
  %654 = vrot.lane.b32.xlu0 %v648, 9
  %v655 = vpop.permute.xlu0 %654
  %656 = vrot.lane.b32.xlu0 %v649, 9
  %v657 = vpop.permute.xlu0 %656
  %v658 = vmul.f32 %v651, %v338
  %v659 = vmul.f32 %v653, %v338
  %v660 = vmul.f32 %v655, %v338
  %v661 = vmul.f32 %v657, %v338
  %662 = vrot.lane.b32.xlu0 %v646, 8
  %v663 = vpop.permute.xlu0 %662
  %664 = vrot.lane.b32.xlu0 %v647, 8
  %v665 = vpop.permute.xlu0 %664
  %666 = vrot.lane.b32.xlu0 %v648, 8
  %v667 = vpop.permute.xlu0 %666
  %668 = vrot.lane.b32.xlu0 %v649, 8
  %v669 = vpop.permute.xlu0 %668
  %v670 = vmul.f32 %v663, %v349
  %v671 = vmul.f32 %v665, %v349
  %v672 = vmul.f32 %v667, %v349
  %v673 = vmul.f32 %v669, %v349
  %674 = vrot.lane.b32.xlu0 %v646, 7
  %v675 = vpop.permute.xlu0 %674
  %676 = vrot.lane.b32.xlu0 %v647, 7
  %v677 = vpop.permute.xlu0 %676
  %678 = vrot.lane.b32.xlu0 %v648, 7
  %v679 = vpop.permute.xlu0 %678
  %680 = vrot.lane.b32.xlu0 %v649, 7
  %v681 = vpop.permute.xlu0 %680
  %v682 = vmul.f32 %v675, %v360
  %v683 = vmul.f32 %v677, %v360
  %v684 = vmul.f32 %v679, %v360
  %v685 = vmul.f32 %v681, %v360
  %686 = vrot.lane.b32.xlu0 %v646, 1
  %v687 = vpop.permute.xlu0 %686
  %688 = vrot.lane.b32.xlu0 %v647, 1
  %v689 = vpop.permute.xlu0 %688
  %690 = vrot.lane.b32.xlu0 %v648, 1
  %v691 = vpop.permute.xlu0 %690
  %692 = vrot.lane.b32.xlu0 %v649, 1
  %v693 = vpop.permute.xlu0 %692
  %v694 = vmul.f32 %v687, %v371
  %v695 = vmul.f32 %v689, %v371
  %v696 = vmul.f32 %v691, %v371
  %v697 = vmul.f32 %v693, %v371
  %698 = vrot.lane.b32.xlu0 %v646, 127
  %v699 = vpop.permute.xlu0 %698
  %700 = vrot.lane.b32.xlu0 %v647, 127
  %v701 = vpop.permute.xlu0 %700
  %702 = vrot.lane.b32.xlu0 %v648, 127
  %v703 = vpop.permute.xlu0 %702
  %704 = vrot.lane.b32.xlu0 %v649, 127
  %v705 = vpop.permute.xlu0 %704
  %v706 = vmul.f32 %v699, %v382
  %v707 = vmul.f32 %v701, %v382
  %v708 = vmul.f32 %v703, %v382
  %v709 = vmul.f32 %v705, %v382
  %710 = vrot.lane.b32.xlu0 %v646, 121
  %v711 = vpop.permute.xlu0 %710
  %712 = vrot.lane.b32.xlu0 %v647, 121
  %v713 = vpop.permute.xlu0 %712
  %714 = vrot.lane.b32.xlu0 %v648, 121
  %v715 = vpop.permute.xlu0 %714
  %716 = vrot.lane.b32.xlu0 %v649, 121
  %v717 = vpop.permute.xlu0 %716
  %v718 = vmul.f32 %v711, %v393
  %v719 = vmul.f32 %v713, %v393
  %v720 = vmul.f32 %v715, %v393
  %v721 = vmul.f32 %v717, %v393
  %722 = vrot.lane.b32.xlu0 %v646, 120
  %v723 = vpop.permute.xlu0 %722
  %724 = vrot.lane.b32.xlu0 %v647, 120
  %v725 = vpop.permute.xlu0 %724
  %726 = vrot.lane.b32.xlu0 %v648, 120
  %v727 = vpop.permute.xlu0 %726
  %728 = vrot.lane.b32.xlu0 %v649, 120
  %v729 = vpop.permute.xlu0 %728
  %v730 = vmul.f32 %v723, %v404
  %v731 = vmul.f32 %v725, %v404
  %v732 = vmul.f32 %v727, %v404
  %v733 = vmul.f32 %v729, %v404
  %734 = vrot.lane.b32.xlu0 %v646, 119
  %v735 = vpop.permute.xlu0 %734
  %736 = vrot.lane.b32.xlu0 %v647, 119
  %v737 = vpop.permute.xlu0 %736
  %738 = vrot.lane.b32.xlu0 %v648, 119
  %v739 = vpop.permute.xlu0 %738
  %740 = vrot.lane.b32.xlu0 %v649, 119
  %v741 = vpop.permute.xlu0 %740
  %v742 = vmul.f32 %v735, %v415
  %v743 = vmul.f32 %v737, %v415
  %v744 = vmul.f32 %v739, %v415
  %v745 = vmul.f32 %v741, %v415
  %v746 = vpack.c.bf16 %v659, %v658
  %v747 = vpack.c.bf16 %v661, %v660
  %v748 = vpack.c.bf16 %v671, %v670
  %v749 = vpack.c.bf16 %v673, %v672
  %v750 = vpack.c.bf16 %v683, %v682
  %v751 = vpack.c.bf16 %v685, %v684
  %v752 = vpack.c.bf16 %v695, %v694
  %v753 = vpack.c.bf16 %v697, %v696
  %v754 = vpack.c.bf16 %v647, %v646
  %v755 = vpack.c.bf16 %v649, %v648
  %v756 = vpack.c.bf16 %v707, %v706
  %v757 = vpack.c.bf16 %v709, %v708
  %v758 = vpack.c.bf16 %v719, %v718
  %v759 = vpack.c.bf16 %v721, %v720
  %v760 = vpack.c.bf16 %v731, %v730
  %v761 = vpack.c.bf16 %v733, %v732
  %v762 = vpack.c.bf16 %v743, %v742
  %v763 = vpack.c.bf16 %v745, %v744
  %v764 = vld [vmem:[%s10] sm:$0xff]
  %v765 = vld [vmem:[%s10 + $0x8] sm:$0xf]
  %v766 = vld [vmem:[%s10 + $0xc] sm:$0x33]
  %v767 = vld [vmem:[%s10 + $0x14] sm:$0x3]
  %v768 = vld [vmem:[%s11] sm:$0xff]
  %v769 = vld [vmem:[%s11 + $0x8] sm:$0xf]
  %771 = vset.pattern.permute.xlu0 0
  %772 = vperm.xlu0 %771, %v768
  %v773 = vpop.permute.xlu0 %772
  %776 = vset.pattern.permute.xlu0 0
  %777 = vperm.xlu0 %776, %v769
  %v778 = vpop.permute.xlu0 %777
  %v784 = vunpack.c.l.b16 %v764
  %v785 = vunpack.c.h.b16 %v764
  %v786 = vunpack.c.l.b16 %v765
  %v787 = vunpack.c.l.b16 %v766
  %v788 = vunpack.c.h.b16 %v766
  %v789 = vunpack.c.l.b16 %v767
  %v790 = vpack.c.b16 %v787, %v784
  %v791 = vpack.c.b16 %v788, %v785
  %v792 = vpack.c.b16 %v789, %v786
  %v796 = vsel %vm590, %v792, 0
  %798 = vmatprep.subr.bf16.mxu0 0
  %799 = vmatpush1.bf16.msra.mxu0 %v746
  %800 = vmatprep.subr.bf16.mxu0 0
  %801 = vmatpush1.bf16.msra.mxu0 %v747
  %802 = vmatprep.subr.bf16.mxu0 0
  %803 = vmatpush1.bf16.msra.mxu0 %v748
  %804 = vmatprep.subr.bf16.mxu0 0
  %805 = vmatpush1.bf16.msra.mxu0 %v749
  %806 = vmatprep.subr.bf16.mxu0 0
  %807 = vmatpush1.bf16.msra.mxu0 %v750
  %808 = vmatprep.subr.bf16.mxu0 0
  %809 = vmatpush1.bf16.msra.mxu0 %v751
  %810 = vmatprep.subr.bf16.mxu0 0
  %811 = vmatpush1.bf16.msra.mxu0 %v752
  %812 = vmatprep.subr.bf16.mxu0 0
  %813 = vmatpush1.bf16.msra.mxu0 %v753
  %814 = vmatprep.subr.bf16.mxu0 0
  %815 = vmatpush1.bf16.msra.mxu0 %v754
  %816 = vmatprep.subr.bf16.mxu0 0
  %817 = vmatpush1.bf16.msra.mxu0 %v755
  %818 = vmatprep.subr.bf16.mxu0 0
  %819 = vmatpush1.bf16.msra.mxu0 %v756
  %820 = vmatprep.subr.bf16.mxu0 0
  %821 = vmatpush1.bf16.msra.mxu0 %v757
  %822 = vmatprep.subr.bf16.mxu0 0
  %823 = vmatpush1.bf16.msra.mxu0 %v758
  %824 = vmatprep.subr.bf16.mxu0 0
  %825 = vmatpush1.bf16.msra.mxu0 %v759
  %826 = vmatprep.subr.bf16.mxu0 0
  %827 = vmatpush1.bf16.msra.mxu0 %v760
  %828 = vmatprep.subr.bf16.mxu0 0
  %829 = vmatpush1.bf16.msra.mxu0 %v761
  %830 = vmatprep.mubr.bf16.mxu0 %v791
  %831 = vmatmul.mubr.bf16.gmra.mrb[0].mxu0 %v790
  %v832 = vpop.f32.mrb[0].mxu0
  %v833 = vadd.f32 %v773, %v832
  %v834 = vpop.f32.mrb[0].mxu0
  %v835 = vpop.f32.mrb[0].mxu0
  %v836 = vadd.f32 %v778, %v835
  %v837 = vpop.f32.mrb[0].mxu0
  %838 = vdwg.mxu0
  %839 = vmatprep.subr.bf16.mxu0 0
  %840 = vmatpush1.bf16.msra.mxu0 %v762
  %841 = vmatprep.subr.bf16.mxu0 0
  %842 = vmatpush1.bf16.msra.mxu0 %v763
  %843 = vmatprep.subr.bf16.mxu0 0
  %844 = vmatpush1.bf16.msra.mxu0 0
  %845 = vmatprep.subr.bf16.mxu0 0
  %846 = vmatpush1.bf16.msra.mxu0 0
  %847 = vmatprep.subr.bf16.mxu0 0
  %848 = vmatpush1.bf16.msra.mxu0 0
  %849 = vmatprep.subr.bf16.mxu0 0
  %850 = vmatpush1.bf16.msra.mxu0 0
  %851 = vmatprep.subr.bf16.mxu0 0
  %852 = vmatpush1.bf16.msra.mxu0 0
  %853 = vmatprep.subr.bf16.mxu0 0
  %854 = vmatpush1.bf16.msra.mxu0 0
  %855 = vmatprep.subr.bf16.mxu0 0
  %856 = vmatpush1.bf16.msra.mxu0 0
  %857 = vmatprep.subr.bf16.mxu0 0
  %858 = vmatpush1.bf16.msra.mxu0 0
  %859 = vmatprep.subr.bf16.mxu0 0
  %860 = vmatpush1.bf16.msra.mxu0 0
  %861 = vmatprep.subr.bf16.mxu0 0
  %862 = vmatpush1.bf16.msra.mxu0 0
  %863 = vmatprep.subr.bf16.mxu0 0
  %864 = vmatpush1.bf16.msra.mxu0 0
  %865 = vmatprep.subr.bf16.mxu0 0
  %866 = vmatpush1.bf16.msra.mxu0 0
  %867 = vmatprep.subr.bf16.mxu0 0
  %868 = vmatpush1.bf16.msra.mxu0 0
  %869 = vmatprep.subr.bf16.mxu0 0
  %870 = vmatpush1.bf16.msra.mxu0 0
  %871 = vmatprep.mubr.bf16.mxu0 0
  %872 = vmatmul.mubr.bf16.gmra.mrb[0].mxu0 %v796
  %v873 = vpop.f32.mrb[0].mxu0
  %v874 = vadd.f32 %v833, %v873
  %v875 = vpop.f32.mrb[0].mxu0
  %v876 = vpop.f32.mrb[0].mxu0
  %v877 = vadd.f32 %v836, %v876
  %v878 = vpop.f32.mrb[0].mxu0
  %879 = vdwg.mxu0
  %v880 = vadd.f32 %v874, 2.0
  %v881 = vadd.f32 %v877, 2.0
  %v882 = vand.u32 2147483647, %v880
  %v883 = vand.u32 2147483647, %v881
  %v884 = vsub.f32 0.0, %v882
  %v885 = vsub.f32 0.0, %v883
  %v886 = vmul.f32 %v884, 1.442695
  %v887 = vpow.pop %v886
  %v888 = vmul.f32 %v885, 1.442695
  %v889 = vpow.pop %v888
  %v890 = vadd.f32 %v887, 1.0
  %v891 = vadd.f32 %v889, 1.0
  %v892 = vmin.f32 %v880, 0.0
  %v893 = vmin.f32 %v881, 0.0
  %v894 = vlog2.pop %v890
  %v895 = vmul.f32 %v894, 0.6931472
  %v896 = vlog2.pop %v891
  %v897 = vmul.f32 %v896, 0.6931472
  %v898 = vsub.f32 %v892, %v895
  %v899 = vsub.f32 %v893, %v897
  %vm900 = vcmp.lt.f32.partialorder %v880, 0.0
  %vm901 = vcmp.lt.f32.partialorder %v881, 0.0
  %v902 = vsel %vm900, %v887, 1.0
  %v903 = vsel %vm901, %v889, 1.0
  %v904 = vrcp.pop %v890
  %v905 = vrcp.pop %v891
  %v906 = vmul.f32 %v902, %v904
  %v907 = vmul.f32 %v903, %v905
  %v909 = vrot.slane %v874, 2
  %v911 = vadd.f32 %v329, %v909
  %v912 = vadd.f32 %v330, %v909
  %v913 = vmul.f32 %v911, %v906
  %v914 = vmul.f32 %v912, %v907
  %v917 = vrot.slane %v898, 6
  %v918 = vrot.slane %v899, 6
  %v919 = vsel %vm439, %v917, %v918
  %v921 = vsel %vm436, %v919, 0.0
  %v922 = vrot.slane %v921, 4
  %v923 = vadd.f32 %v921, %v922
  %v924 = vrot.slane %v923, 2
  %v925 = vadd.f32 %v923, %v924
  %v926 = vrot.slane %v925, 1
  %v927 = vadd.f32 %v925, %v926
  %v928 = vadd.f32 %v927, 0.0
  %v929 = vsel %vm436, %v329, %v913
  %s930 = scalar_lea.vmem %s2, 16
  %v931 = vld [vmem:[%s930] sm:$0xff]
  %v932 = vld [vmem:[%s930 + $0x8] sm:$0xf]
  %s933 = scalar_lea.vmem %s3, 16
  %v934 = vld [vmem:[%s933] sm:$0xff]
  %v935 = vld [vmem:[%s933 + $0x8] sm:$0xf]
  %937 = vset.pattern.permute.xlu0 0
  %938 = vperm.xlu0 %937, %v934
  %v939 = vpop.permute.xlu0 %938
  %942 = vset.pattern.permute.xlu0 0
  %943 = vperm.xlu0 %942, %v935
  %v944 = vpop.permute.xlu0 %943
  %v947 = vsel %vm69, %v931, 0
  %v950 = vsel %vm69, %v932, 0
  %v953 = vsel %vm76, %v914, 0
  %955 = vmatprep.subr.mxu0 0.0
  %956 = vmatpush1.msra.mxu0 %v929
  %957 = vmatprep.subr.mxu0 0.0
  %958 = vmatpush1.msra.mxu0 %v953
  %959 = vmatprep.subr.mxu0 0.0
  %960 = vmatpush1.msra.mxu0 0.0
  %961 = vmatprep.subr.mxu0 0.0
  %962 = vmatpush1.msra.mxu0 0.0
  %963 = vmatprep.subr.mxu0 0.0
  %964 = vmatpush1.msra.mxu0 0.0
  %965 = vmatprep.subr.mxu0 0.0
  %966 = vmatpush1.msra.mxu0 0.0
  %967 = vmatprep.subr.mxu0 0.0
  %968 = vmatpush1.msra.mxu0 0.0
  %969 = vmatprep.subr.mxu0 0.0
  %970 = vmatpush1.msra.mxu0 0.0
  %971 = vmatprep.subr.mxu0 0.0
  %972 = vmatpush1.msra.mxu0 0.0
  %973 = vmatprep.subr.mxu0 0.0
  %974 = vmatpush1.msra.mxu0 0.0
  %975 = vmatprep.subr.mxu0 0.0
  %976 = vmatpush1.msra.mxu0 0.0
  %977 = vmatprep.subr.mxu0 0.0
  %978 = vmatpush1.msra.mxu0 0.0
  %979 = vmatprep.subr.mxu0 0.0
  %980 = vmatpush1.msra.mxu0 0.0
  %981 = vmatprep.subr.mxu0 0.0
  %982 = vmatpush1.msra.mxu0 0.0
  %983 = vmatprep.subr.mxu0 0.0
  %984 = vmatpush1.msra.mxu0 0.0
  %985 = vmatprep.subr.mxu0 0.0
  %986 = vmatpush1.msra.mxu0 0.0
  %987 = vmatprep.subr.mxu0 0.0
  %988 = vmatpush1.msra.mxu0 0.0
  %989 = vmatprep.subr.mxu0 0.0
  %990 = vmatpush1.msra.mxu0 0.0
  %991 = vmatprep.subr.mxu0 0.0
  %992 = vmatpush1.msra.mxu0 0.0
  %993 = vmatprep.subr.mxu0 0.0
  %994 = vmatpush1.msra.mxu0 0.0
  %995 = vmatprep.subr.mxu0 0.0
  %996 = vmatpush1.msra.mxu0 0.0
  %997 = vmatprep.subr.mxu0 0.0
  %998 = vmatpush1.msra.mxu0 0.0
  %999 = vmatprep.subr.mxu0 0.0
  %1000 = vmatpush1.msra.mxu0 0.0
  %1001 = vmatprep.subr.mxu0 0.0
  %1002 = vmatpush1.msra.mxu0 0.0
  %1003 = vmatprep.subr.mxu0 0.0
  %1004 = vmatpush1.msra.mxu0 0.0
  %1005 = vmatprep.subr.mxu0 0.0
  %1006 = vmatpush1.msra.mxu0 0.0
  %1007 = vmatprep.subr.mxu0 0.0
  %1008 = vmatpush1.msra.mxu0 0.0
  %1009 = vmatprep.subr.mxu0 0.0
  %1010 = vmatpush1.msra.mxu0 0.0
  %1011 = vmatprep.subr.mxu0 0.0
  %1012 = vmatpush1.msra.mxu0 0.0
  %1013 = vmatprep.subr.mxu0 0.0
  %1014 = vmatpush1.msra.mxu0 0.0
  %1015 = vmatprep.subr.mxu0 0.0
  %1016 = vmatpush1.msra.mxu0 0.0
  %1017 = vmatprep.subr.mxu0 0.0
  %1018 = vmatpush1.msra.mxu0 0.0
  %1019 = vmatprep.mubr.f32.mxu0 0.0
  %1020 = vmatmul.mubr.f32.gmra.mrb[0].mxu0 %v947
  %v1021 = vpop.f32.mrb[0].mxu0
  %v1022 = vadd.f32 %v939, %v1021
  %v1023 = vpop.f32.mrb[0].mxu0
  %1024 = vmatprep.mubr.f32.mxu0 0.0
  %1025 = vmatmul.mubr.f32.gmra.mrb[0].mxu0 %v950
  %v1026 = vpop.f32.mrb[0].mxu0
  %v1027 = vadd.f32 %v944, %v1026
  %v1028 = vpop.f32.mrb[0].mxu0
  %1029 = vdwg.mxu0
  %s1030 = scalar_lea.vmem %s4, 128
  %v1031 = vld [vmem:[%s1030] sm:$0xff]
  %v1032 = vld [vmem:[%s1030 + $0x8] sm:$0xff]
  %v1033 = vld [vmem:[%s1030 + $0x10] sm:$0xff]
  %v1034 = vld [vmem:[%s1030 + $0x18] sm:$0xff]
  %v1035 = vld [vmem:[%s1030 + $0x20] sm:$0xff]
  %v1036 = vld [vmem:[%s1030 + $0x28] sm:$0xff]
  %v1037 = vld [vmem:[%s1030 + $0x30] sm:$0xff]
  %v1038 = vld [vmem:[%s1030 + $0x38] sm:$0xff]
  %v1039 = vld [vmem:[%s1030 + $0x40] sm:$0xff]
  %v1040 = vld [vmem:[%s1030 + $0x48] sm:$0xff]
  %v1041 = vld [vmem:[%s1030 + $0x50] sm:$0xff]
  %v1042 = vld [vmem:[%s1030 + $0x58] sm:$0xff]
  %v1043 = vld [vmem:[%s1030 + $0x60] sm:$0xff]
  %v1044 = vld [vmem:[%s1030 + $0x68] sm:$0xff]
  %v1045 = vld [vmem:[%s1030 + $0x70] sm:$0xff]
  %v1046 = vld [vmem:[%s1030 + $0x78] sm:$0xff]
  %1047 = vmatprep.subr.mxu0 0.0
  %1048 = vmatpush1.msra.mxu0 %v1031
  %1049 = vmatprep.subr.mxu0 0.0
  %1050 = vmatpush1.msra.mxu0 %v1032
  %1051 = vmatprep.subr.mxu0 0.0
  %1052 = vmatpush1.msra.mxu0 %v1033
  %1053 = vmatprep.subr.mxu0 0.0
  %1054 = vmatpush1.msra.mxu0 %v1034
  %1055 = vmatprep.subr.mxu0 0.0
  %1056 = vmatpush1.msra.mxu0 %v1035
  %1057 = vmatprep.subr.mxu0 0.0
  %1058 = vmatpush1.msra.mxu0 %v1036
  %1059 = vmatprep.subr.mxu0 0.0
  %1060 = vmatpush1.msra.mxu0 %v1037
  %1061 = vmatprep.subr.mxu0 0.0
  %1062 = vmatpush1.msra.mxu0 %v1038
  %1063 = vmatprep.subr.mxu0 0.0
  %1064 = vmatpush1.msra.mxu0 %v1039
  %1065 = vmatprep.subr.mxu0 0.0
  %1066 = vmatpush1.msra.mxu0 %v1040
  %1067 = vmatprep.subr.mxu0 0.0
  %1068 = vmatpush1.msra.mxu0 %v1041
  %1069 = vmatprep.subr.mxu0 0.0
  %1070 = vmatpush1.msra.mxu0 %v1042
  %1071 = vmatprep.subr.mxu0 0.0
  %1072 = vmatpush1.msra.mxu0 %v1043
  %1073 = vmatprep.subr.mxu0 0.0
  %1074 = vmatpush1.msra.mxu0 %v1044
  %1075 = vmatprep.subr.mxu0 0.0
  %1076 = vmatpush1.msra.mxu0 %v1045
  %1077 = vmatprep.subr.mxu0 0.0
  %1078 = vmatpush1.msra.mxu0 %v1046
  %1079 = vmatprep.subr.mxu0 0.0
  %1080 = vmatpush1.msra.mxu0 0.0
  %1081 = vmatprep.subr.mxu0 0.0
  %1082 = vmatpush1.msra.mxu0 0.0
  %1083 = vmatprep.subr.mxu0 0.0
  %1084 = vmatpush1.msra.mxu0 0.0
  %1085 = vmatprep.subr.mxu0 0.0
  %1086 = vmatpush1.msra.mxu0 0.0
  %1087 = vmatprep.subr.mxu0 0.0
  %1088 = vmatpush1.msra.mxu0 0.0
  %1089 = vmatprep.subr.mxu0 0.0
  %1090 = vmatpush1.msra.mxu0 0.0
  %1091 = vmatprep.subr.mxu0 0.0
  %1092 = vmatpush1.msra.mxu0 0.0
  %1093 = vmatprep.subr.mxu0 0.0
  %1094 = vmatpush1.msra.mxu0 0.0
  %1095 = vmatprep.subr.mxu0 0.0
  %1096 = vmatpush1.msra.mxu0 0.0
  %1097 = vmatprep.subr.mxu0 0.0
  %1098 = vmatpush1.msra.mxu0 0.0
  %1099 = vmatprep.subr.mxu0 0.0
  %1100 = vmatpush1.msra.mxu0 0.0
  %1101 = vmatprep.subr.mxu0 0.0
  %1102 = vmatpush1.msra.mxu0 0.0
  %1103 = vmatprep.subr.mxu0 0.0
  %1104 = vmatpush1.msra.mxu0 0.0
  %1105 = vmatprep.subr.mxu0 0.0
  %1106 = vmatpush1.msra.mxu0 0.0
  %1107 = vmatprep.subr.mxu0 0.0
  %1108 = vmatpush1.msra.mxu0 0.0
  %1109 = vmatprep.subr.mxu0 0.0
  %1110 = vmatpush1.msra.mxu0 0.0
  %1111 = vmatprep.mubr.f32.mxu0 0.0
  %1112 = vmatmul.mubr.f32.gmra.mrb[0].mxu0 %v1022
  %v1113 = vpop.f32.mrb[0].mxu0
  %v1114 = vadd.f32 0.0, %v1113
  %v1115 = vpop.f32.mrb[0].mxu0
  %1116 = vmatprep.mubr.f32.mxu0 0.0
  %1117 = vmatmul.mubr.f32.gmra.mrb[0].mxu0 %v1027
  %v1118 = vpop.f32.mrb[0].mxu0
  %v1119 = vadd.f32 0.0, %v1118
  %v1120 = vpop.f32.mrb[0].mxu0
  %1121 = vdwg.mxu0
  %s1122 = scalar_lea.vmem %s5, 8
  %v1123 = vld [vmem:[%s1122] sm:$0xff]
  %v1125 = vsel %vm247, %v1114, 0
  %v1128 = vsel %vm247, %v1119, 0
  %1130 = vmatprep.subr.mxu0 0.0
  %1131 = vmatpush1.msra.mxu0 %v1123
  %1132 = vmatprep.subr.mxu0 0.0
  %1133 = vmatpush1.msra.mxu0 0.0
  %1134 = vmatprep.subr.mxu0 0.0
  %1135 = vmatpush1.msra.mxu0 0.0
  %1136 = vmatprep.subr.mxu0 0.0
  %1137 = vmatpush1.msra.mxu0 0.0
  %1138 = vmatprep.subr.mxu0 0.0
  %1139 = vmatpush1.msra.mxu0 0.0
  %1140 = vmatprep.subr.mxu0 0.0
  %1141 = vmatpush1.msra.mxu0 0.0
  %1142 = vmatprep.subr.mxu0 0.0
  %1143 = vmatpush1.msra.mxu0 0.0
  %1144 = vmatprep.subr.mxu0 0.0
  %1145 = vmatpush1.msra.mxu0 0.0
  %1146 = vmatprep.subr.mxu0 0.0
  %1147 = vmatpush1.msra.mxu0 0.0
  %1148 = vmatprep.subr.mxu0 0.0
  %1149 = vmatpush1.msra.mxu0 0.0
  %1150 = vmatprep.subr.mxu0 0.0
  %1151 = vmatpush1.msra.mxu0 0.0
  %1152 = vmatprep.subr.mxu0 0.0
  %1153 = vmatpush1.msra.mxu0 0.0
  %1154 = vmatprep.subr.mxu0 0.0
  %1155 = vmatpush1.msra.mxu0 0.0
  %1156 = vmatprep.subr.mxu0 0.0
  %1157 = vmatpush1.msra.mxu0 0.0
  %1158 = vmatprep.subr.mxu0 0.0
  %1159 = vmatpush1.msra.mxu0 0.0
  %1160 = vmatprep.subr.mxu0 0.0
  %1161 = vmatpush1.msra.mxu0 0.0
  %1162 = vmatprep.subr.mxu0 0.0
  %1163 = vmatpush1.msra.mxu0 0.0
  %1164 = vmatprep.subr.mxu0 0.0
  %1165 = vmatpush1.msra.mxu0 0.0
  %1166 = vmatprep.subr.mxu0 0.0
  %1167 = vmatpush1.msra.mxu0 0.0
  %1168 = vmatprep.subr.mxu0 0.0
  %1169 = vmatpush1.msra.mxu0 0.0
  %1170 = vmatprep.subr.mxu0 0.0
  %1171 = vmatpush1.msra.mxu0 0.0
  %1172 = vmatprep.subr.mxu0 0.0
  %1173 = vmatpush1.msra.mxu0 0.0
  %1174 = vmatprep.subr.mxu0 0.0
  %1175 = vmatpush1.msra.mxu0 0.0
  %1176 = vmatprep.subr.mxu0 0.0
  %1177 = vmatpush1.msra.mxu0 0.0
  %1178 = vmatprep.subr.mxu0 0.0
  %1179 = vmatpush1.msra.mxu0 0.0
  %1180 = vmatprep.subr.mxu0 0.0
  %1181 = vmatpush1.msra.mxu0 0.0
  %1182 = vmatprep.subr.mxu0 0.0
  %1183 = vmatpush1.msra.mxu0 0.0
  %1184 = vmatprep.subr.mxu0 0.0
  %1185 = vmatpush1.msra.mxu0 0.0
  %1186 = vmatprep.subr.mxu0 0.0
  %1187 = vmatpush1.msra.mxu0 0.0
  %1188 = vmatprep.subr.mxu0 0.0
  %1189 = vmatpush1.msra.mxu0 0.0
  %1190 = vmatprep.subr.mxu0 0.0
  %1191 = vmatpush1.msra.mxu0 0.0
  %1192 = vmatprep.subr.mxu0 0.0
  %1193 = vmatpush1.msra.mxu0 0.0
  %1194 = vmatprep.mubr.f32.mxu0 0.0
  %1195 = vmatmul.mubr.f32.gmra.mrb[0].mxu0 %v1125
  %v1196 = vpop.f32.mrb[0].mxu0
  %v1197 = vadd.f32 0.0, %v1196
  %v1198 = vpop.f32.mrb[0].mxu0
  %1199 = vmatprep.mubr.f32.mxu0 0.0
  %1200 = vmatmul.mubr.f32.gmra.mrb[0].mxu0 %v1128
  %v1201 = vpop.f32.mrb[0].mxu0
  %v1202 = vadd.f32 0.0, %v1201
  %v1203 = vpop.f32.mrb[0].mxu0
  %1204 = vdwg.mxu0
  %v1205 = vadd.f32 %v1022, %v1197
  %v1206 = vadd.f32 %v1027, %v1202
  %1207 = vrot.lane.b32.xlu0 %v1205, 9
  %v1208 = vpop.permute.xlu0 %1207
  %v1209 = vmul.f32 %v1208, %v338
  %1210 = vrot.lane.b32.xlu0 %v1205, 8
  %v1211 = vpop.permute.xlu0 %1210
  %v1212 = vmul.f32 %v1211, %v349
  %1213 = vrot.lane.b32.xlu0 %v1205, 7
  %v1214 = vpop.permute.xlu0 %1213
  %v1215 = vmul.f32 %v1214, %v360
  %1216 = vrot.lane.b32.xlu0 %v1205, 1
  %v1217 = vpop.permute.xlu0 %1216
  %v1218 = vmul.f32 %v1217, %v371
  %1219 = vrot.lane.b32.xlu0 %v1205, 127
  %v1220 = vpop.permute.xlu0 %1219
  %v1221 = vmul.f32 %v1220, %v382
  %1222 = vrot.lane.b32.xlu0 %v1205, 121
  %v1223 = vpop.permute.xlu0 %1222
  %v1224 = vmul.f32 %v1223, %v393
  %1225 = vrot.lane.b32.xlu0 %v1205, 120
  %v1226 = vpop.permute.xlu0 %1225
  %v1227 = vmul.f32 %v1226, %v404
  %1228 = vrot.lane.b32.xlu0 %v1205, 119
  %v1229 = vpop.permute.xlu0 %1228
  %v1230 = vmul.f32 %v1229, %v415
  %v1232 = vrot.slane %v1212, 2
  %v1235 = vrot.slane %v1215, 4
  %v1238 = vrot.slane %v1218, 6
  %v1241 = vrot.slane %v1221, 2
  %v1244 = vrot.slane %v1224, 4
  %v1247 = vrot.slane %v1227, 6
  %v1249 = vsel %vm436, %v1209, %v1232
  %v1250 = vsel %vm76, %v1232, %v1235
  %v1251 = vsel %vm439, %v1235, %v1238
  %v1252 = vsel %vm436, %v1205, %v1241
  %v1253 = vsel %vm76, %v1241, %v1244
  %v1254 = vsel %vm439, %v1244, %v1247
  %v1255 = vpack.c.bf16 %v1250, %v1249
  %v1256 = vpack.c.bf16 %v1252, %v1251
  %v1257 = vpack.c.bf16 %v1254, %v1253
  %v1258 = vpack.c.bf16 %v1230, %v1230
  %s1259 = scalar_lea.vmem %s6, 16
  %v1260 = vld [vmem:[%s1259] sm:$0xf]
  %v1261 = vld [vmem:[%s1259 + $0x4] sm:$0xf]
  %v1262 = vld [vmem:[%s1259 + $0x8] sm:$0xf]
  %v1263 = vld [vmem:[%s1259 + $0xc] sm:$0xf]
  %s1264 = scalar_lea.vmem %s7, 32
  %v1265 = vld [vmem:[%s1264] sm:$0xff]
  %v1266 = vld [vmem:[%s1264 + $0x8] sm:$0xff]
  %v1267 = vld [vmem:[%s1264 + $0x10] sm:$0xff]
  %v1268 = vld [vmem:[%s1264 + $0x18] sm:$0xff]
  %1270 = vset.pattern.permute.xlu0 0
  %1271 = vperm.xlu0 %1270, %v1265
  %v1272 = vpop.permute.xlu0 %1271
  %1275 = vset.pattern.permute.xlu0 0
  %1276 = vperm.xlu0 %1275, %v1266
  %v1277 = vpop.permute.xlu0 %1276
  %1280 = vset.pattern.permute.xlu0 0
  %1281 = vperm.xlu0 %1280, %v1267
  %v1282 = vpop.permute.xlu0 %1281
  %1285 = vset.pattern.permute.xlu0 0
  %1286 = vperm.xlu0 %1285, %v1268
  %v1287 = vpop.permute.xlu0 %1286
  %v1293 = vunpack.c.l.b16 %v1260
  %v1294 = vunpack.c.l.b16 %v1261
  %v1295 = vunpack.c.l.b16 %v1262
  %v1296 = vunpack.c.l.b16 %v1263
  %v1297 = vpack.c.b16 %v1294, %v1293
  %v1298 = vpack.c.b16 %v1296, %v1295
  %v1300 = vsel %vm486, %v1297, 0
  %v1303 = vsel %vm486, %v1298, 0
  %v1306 = vsel %vm493, %v1258, 0
  %1308 = vmatprep.subr.bf16.mxu0 0
  %1309 = vmatpush1.bf16.msra.mxu0 %v1255
  %1310 = vmatprep.subr.bf16.mxu0 0
  %1311 = vmatpush1.bf16.msra.mxu0 %v1256
  %1312 = vmatprep.subr.bf16.mxu0 0
  %1313 = vmatpush1.bf16.msra.mxu0 %v1257
  %1314 = vmatprep.subr.bf16.mxu0 0
  %1315 = vmatpush1.bf16.msra.mxu0 %v1306
  %1316 = vmatprep.subr.bf16.mxu0 0
  %1317 = vmatpush1.bf16.msra.mxu0 0
  %1318 = vmatprep.subr.bf16.mxu0 0
  %1319 = vmatpush1.bf16.msra.mxu0 0
  %1320 = vmatprep.subr.bf16.mxu0 0
  %1321 = vmatpush1.bf16.msra.mxu0 0
  %1322 = vmatprep.subr.bf16.mxu0 0
  %1323 = vmatpush1.bf16.msra.mxu0 0
  %1324 = vmatprep.subr.bf16.mxu0 0
  %1325 = vmatpush1.bf16.msra.mxu0 0
  %1326 = vmatprep.subr.bf16.mxu0 0
  %1327 = vmatpush1.bf16.msra.mxu0 0
  %1328 = vmatprep.subr.bf16.mxu0 0
  %1329 = vmatpush1.bf16.msra.mxu0 0
  %1330 = vmatprep.subr.bf16.mxu0 0
  %1331 = vmatpush1.bf16.msra.mxu0 0
  %1332 = vmatprep.subr.bf16.mxu0 0
  %1333 = vmatpush1.bf16.msra.mxu0 0
  %1334 = vmatprep.subr.bf16.mxu0 0
  %1335 = vmatpush1.bf16.msra.mxu0 0
  %1336 = vmatprep.subr.bf16.mxu0 0
  %1337 = vmatpush1.bf16.msra.mxu0 0
  %1338 = vmatprep.subr.bf16.mxu0 0
  %1339 = vmatpush1.bf16.msra.mxu0 0
  %1340 = vmatprep.mubr.bf16.mxu0 0
  %1341 = vmatmul.mubr.bf16.gmra.mrb[0].mxu0 %v1300
  %v1342 = vpop.f32.mrb[0].mxu0
  %v1343 = vadd.f32 %v1272, %v1342
  %v1344 = vpop.f32.mrb[0].mxu0
  %v1345 = vpop.f32.mrb[0].mxu0
  %v1346 = vadd.f32 %v1277, %v1345
  %v1347 = vpop.f32.mrb[0].mxu0
  %1348 = vmatprep.mubr.bf16.mxu0 0
  %1349 = vmatmul.mubr.bf16.gmra.mrb[0].mxu0 %v1303
  %v1350 = vpop.f32.mrb[0].mxu0
  %v1351 = vadd.f32 %v1282, %v1350
  %v1352 = vpop.f32.mrb[0].mxu0
  %v1353 = vpop.f32.mrb[0].mxu0
  %v1354 = vadd.f32 %v1287, %v1353
  %v1355 = vpop.f32.mrb[0].mxu0
  %1356 = vdwg.mxu0
  %v1357 = vmax.f32 %v1343, 0.0
  %v1358 = vmax.f32 %v1346, 0.0
  %v1359 = vmax.f32 %v1351, 0.0
  %v1360 = vmax.f32 %v1354, 0.0
  %s1361 = scalar_lea.vmem %s8, 16
  %v1362 = vld [vmem:[%s1361] sm:$0xf]
  %v1363 = vld [vmem:[%s1361 + $0x4] sm:$0xf]
  %v1364 = vld [vmem:[%s1361 + $0x8] sm:$0xf]
  %v1365 = vld [vmem:[%s1361 + $0xc] sm:$0xf]
  %v1366 = vpack.c.bf16 %v1358, %v1357
  %v1367 = vpack.c.bf16 %v1360, %v1359
  %s1368 = scalar_lea.vmem %s9, 32
  %v1369 = vld [vmem:[%s1368] sm:$0xff]
  %v1370 = vld [vmem:[%s1368 + $0x8] sm:$0xff]
  %v1371 = vld [vmem:[%s1368 + $0x10] sm:$0xff]
  %v1372 = vld [vmem:[%s1368 + $0x18] sm:$0xff]
  %1374 = vset.pattern.permute.xlu0 0
  %1375 = vperm.xlu0 %1374, %v1369
  %v1376 = vpop.permute.xlu0 %1375
  %1379 = vset.pattern.permute.xlu0 0
  %1380 = vperm.xlu0 %1379, %v1370
  %v1381 = vpop.permute.xlu0 %1380
  %1384 = vset.pattern.permute.xlu0 0
  %1385 = vperm.xlu0 %1384, %v1371
  %v1386 = vpop.permute.xlu0 %1385
  %1389 = vset.pattern.permute.xlu0 0
  %1390 = vperm.xlu0 %1389, %v1372
  %v1391 = vpop.permute.xlu0 %1390
  %v1397 = vunpack.c.l.b16 %v1362
  %v1398 = vunpack.c.l.b16 %v1363
  %v1399 = vunpack.c.l.b16 %v1364
  %v1400 = vunpack.c.l.b16 %v1365
  %v1401 = vpack.c.b16 %v1398, %v1397
  %v1402 = vpack.c.b16 %v1400, %v1399
  %v1404 = vsel %vm590, %v1401, 0
  %v1407 = vsel %vm590, %v1402, 0
  %1409 = vmatprep.subr.bf16.mxu0 0
  %1410 = vmatpush1.bf16.msra.mxu0 %v1366
  %1411 = vmatprep.subr.bf16.mxu0 0
  %1412 = vmatpush1.bf16.msra.mxu0 %v1367
  %1413 = vmatprep.subr.bf16.mxu0 0
  %1414 = vmatpush1.bf16.msra.mxu0 0
  %1415 = vmatprep.subr.bf16.mxu0 0
  %1416 = vmatpush1.bf16.msra.mxu0 0
  %1417 = vmatprep.subr.bf16.mxu0 0
  %1418 = vmatpush1.bf16.msra.mxu0 0
  %1419 = vmatprep.subr.bf16.mxu0 0
  %1420 = vmatpush1.bf16.msra.mxu0 0
  %1421 = vmatprep.subr.bf16.mxu0 0
  %1422 = vmatpush1.bf16.msra.mxu0 0
  %1423 = vmatprep.subr.bf16.mxu0 0
  %1424 = vmatpush1.bf16.msra.mxu0 0
  %1425 = vmatprep.subr.bf16.mxu0 0
  %1426 = vmatpush1.bf16.msra.mxu0 0
  %1427 = vmatprep.subr.bf16.mxu0 0
  %1428 = vmatpush1.bf16.msra.mxu0 0
  %1429 = vmatprep.subr.bf16.mxu0 0
  %1430 = vmatpush1.bf16.msra.mxu0 0
  %1431 = vmatprep.subr.bf16.mxu0 0
  %1432 = vmatpush1.bf16.msra.mxu0 0
  %1433 = vmatprep.subr.bf16.mxu0 0
  %1434 = vmatpush1.bf16.msra.mxu0 0
  %1435 = vmatprep.subr.bf16.mxu0 0
  %1436 = vmatpush1.bf16.msra.mxu0 0
  %1437 = vmatprep.subr.bf16.mxu0 0
  %1438 = vmatpush1.bf16.msra.mxu0 0
  %1439 = vmatprep.subr.bf16.mxu0 0
  %1440 = vmatpush1.bf16.msra.mxu0 0
  %1441 = vmatprep.mubr.bf16.mxu0 0
  %1442 = vmatmul.mubr.bf16.gmra.mrb[0].mxu0 %v1404
  %v1443 = vpop.f32.mrb[0].mxu0
  %v1444 = vadd.f32 %v1376, %v1443
  %v1445 = vpop.f32.mrb[0].mxu0
  %v1446 = vpop.f32.mrb[0].mxu0
  %v1447 = vadd.f32 %v1381, %v1446
  %v1448 = vpop.f32.mrb[0].mxu0
  %1449 = vmatprep.mubr.bf16.mxu0 0
  %1450 = vmatmul.mubr.bf16.gmra.mrb[0].mxu0 %v1407
  %v1451 = vpop.f32.mrb[0].mxu0
  %v1452 = vadd.f32 %v1386, %v1451
  %v1453 = vpop.f32.mrb[0].mxu0
  %v1454 = vpop.f32.mrb[0].mxu0
  %v1455 = vadd.f32 %v1391, %v1454
  %v1456 = vpop.f32.mrb[0].mxu0
  %1457 = vdwg.mxu0
  %v1458 = vmax.f32 %v1444, 0.0
  %v1459 = vmax.f32 %v1447, 0.0
  %v1460 = vmax.f32 %v1452, 0.0
  %v1461 = vmax.f32 %v1455, 0.0
  %1462 = vrot.lane.b32.xlu0 %v1458, 9
  %v1463 = vpop.permute.xlu0 %1462
  %1464 = vrot.lane.b32.xlu0 %v1459, 9
  %v1465 = vpop.permute.xlu0 %1464
  %1466 = vrot.lane.b32.xlu0 %v1460, 9
  %v1467 = vpop.permute.xlu0 %1466
  %1468 = vrot.lane.b32.xlu0 %v1461, 9
  %v1469 = vpop.permute.xlu0 %1468
  %v1470 = vmul.f32 %v1463, %v338
  %v1471 = vmul.f32 %v1465, %v338
  %v1472 = vmul.f32 %v1467, %v338
  %v1473 = vmul.f32 %v1469, %v338
  %1474 = vrot.lane.b32.xlu0 %v1458, 8
  %v1475 = vpop.permute.xlu0 %1474
  %1476 = vrot.lane.b32.xlu0 %v1459, 8
  %v1477 = vpop.permute.xlu0 %1476
  %1478 = vrot.lane.b32.xlu0 %v1460, 8
  %v1479 = vpop.permute.xlu0 %1478
  %1480 = vrot.lane.b32.xlu0 %v1461, 8
  %v1481 = vpop.permute.xlu0 %1480
  %v1482 = vmul.f32 %v1475, %v349
  %v1483 = vmul.f32 %v1477, %v349
  %v1484 = vmul.f32 %v1479, %v349
  %v1485 = vmul.f32 %v1481, %v349
  %1486 = vrot.lane.b32.xlu0 %v1458, 7
  %v1487 = vpop.permute.xlu0 %1486
  %1488 = vrot.lane.b32.xlu0 %v1459, 7
  %v1489 = vpop.permute.xlu0 %1488
  %1490 = vrot.lane.b32.xlu0 %v1460, 7
  %v1491 = vpop.permute.xlu0 %1490
  %1492 = vrot.lane.b32.xlu0 %v1461, 7
  %v1493 = vpop.permute.xlu0 %1492
  %v1494 = vmul.f32 %v1487, %v360
  %v1495 = vmul.f32 %v1489, %v360
  %v1496 = vmul.f32 %v1491, %v360
  %v1497 = vmul.f32 %v1493, %v360
  %1498 = vrot.lane.b32.xlu0 %v1458, 1
  %v1499 = vpop.permute.xlu0 %1498
  %1500 = vrot.lane.b32.xlu0 %v1459, 1
  %v1501 = vpop.permute.xlu0 %1500
  %1502 = vrot.lane.b32.xlu0 %v1460, 1
  %v1503 = vpop.permute.xlu0 %1502
  %1504 = vrot.lane.b32.xlu0 %v1461, 1
  %v1505 = vpop.permute.xlu0 %1504
  %v1506 = vmul.f32 %v1499, %v371
  %v1507 = vmul.f32 %v1501, %v371
  %v1508 = vmul.f32 %v1503, %v371
  %v1509 = vmul.f32 %v1505, %v371
  %1510 = vrot.lane.b32.xlu0 %v1458, 127
  %v1511 = vpop.permute.xlu0 %1510
  %1512 = vrot.lane.b32.xlu0 %v1459, 127
  %v1513 = vpop.permute.xlu0 %1512
  %1514 = vrot.lane.b32.xlu0 %v1460, 127
  %v1515 = vpop.permute.xlu0 %1514
  %1516 = vrot.lane.b32.xlu0 %v1461, 127
  %v1517 = vpop.permute.xlu0 %1516
  %v1518 = vmul.f32 %v1511, %v382
  %v1519 = vmul.f32 %v1513, %v382
  %v1520 = vmul.f32 %v1515, %v382
  %v1521 = vmul.f32 %v1517, %v382
  %1522 = vrot.lane.b32.xlu0 %v1458, 121
  %v1523 = vpop.permute.xlu0 %1522
  %1524 = vrot.lane.b32.xlu0 %v1459, 121
  %v1525 = vpop.permute.xlu0 %1524
  %1526 = vrot.lane.b32.xlu0 %v1460, 121
  %v1527 = vpop.permute.xlu0 %1526
  %1528 = vrot.lane.b32.xlu0 %v1461, 121
  %v1529 = vpop.permute.xlu0 %1528
  %v1530 = vmul.f32 %v1523, %v393
  %v1531 = vmul.f32 %v1525, %v393
  %v1532 = vmul.f32 %v1527, %v393
  %v1533 = vmul.f32 %v1529, %v393
  %1534 = vrot.lane.b32.xlu0 %v1458, 120
  %v1535 = vpop.permute.xlu0 %1534
  %1536 = vrot.lane.b32.xlu0 %v1459, 120
  %v1537 = vpop.permute.xlu0 %1536
  %1538 = vrot.lane.b32.xlu0 %v1460, 120
  %v1539 = vpop.permute.xlu0 %1538
  %1540 = vrot.lane.b32.xlu0 %v1461, 120
  %v1541 = vpop.permute.xlu0 %1540
  %v1542 = vmul.f32 %v1535, %v404
  %v1543 = vmul.f32 %v1537, %v404
  %v1544 = vmul.f32 %v1539, %v404
  %v1545 = vmul.f32 %v1541, %v404
  %1546 = vrot.lane.b32.xlu0 %v1458, 119
  %v1547 = vpop.permute.xlu0 %1546
  %1548 = vrot.lane.b32.xlu0 %v1459, 119
  %v1549 = vpop.permute.xlu0 %1548
  %1550 = vrot.lane.b32.xlu0 %v1460, 119
  %v1551 = vpop.permute.xlu0 %1550
  %1552 = vrot.lane.b32.xlu0 %v1461, 119
  %v1553 = vpop.permute.xlu0 %1552
  %v1554 = vmul.f32 %v1547, %v415
  %v1555 = vmul.f32 %v1549, %v415
  %v1556 = vmul.f32 %v1551, %v415
  %v1557 = vmul.f32 %v1553, %v415
  %v1558 = vpack.c.bf16 %v1471, %v1470
  %v1559 = vpack.c.bf16 %v1473, %v1472
  %v1560 = vpack.c.bf16 %v1483, %v1482
  %v1561 = vpack.c.bf16 %v1485, %v1484
  %v1562 = vpack.c.bf16 %v1495, %v1494
  %v1563 = vpack.c.bf16 %v1497, %v1496
  %v1564 = vpack.c.bf16 %v1507, %v1506
  %v1565 = vpack.c.bf16 %v1509, %v1508
  %v1566 = vpack.c.bf16 %v1459, %v1458
  %v1567 = vpack.c.bf16 %v1461, %v1460
  %v1568 = vpack.c.bf16 %v1519, %v1518
  %v1569 = vpack.c.bf16 %v1521, %v1520
  %v1570 = vpack.c.bf16 %v1531, %v1530
  %v1571 = vpack.c.bf16 %v1533, %v1532
  %v1572 = vpack.c.bf16 %v1543, %v1542
  %v1573 = vpack.c.bf16 %v1545, %v1544
  %v1574 = vpack.c.bf16 %v1555, %v1554
  %v1575 = vpack.c.bf16 %v1557, %v1556
  %s1576 = scalar_lea.vmem %s10, 24
  %v1577 = vld [vmem:[%s1576] sm:$0xff]
  %v1578 = vld [vmem:[%s1576 + $0x8] sm:$0xf]
  %v1579 = vld [vmem:[%s1576 + $0xc] sm:$0x33]
  %v1580 = vld [vmem:[%s1576 + $0x14] sm:$0x3]
  %s1581 = scalar_lea.vmem %s11, 16
  %v1582 = vld [vmem:[%s1581] sm:$0xff]
  %v1583 = vld [vmem:[%s1581 + $0x8] sm:$0xf]
  %1585 = vset.pattern.permute.xlu0 0
  %1586 = vperm.xlu0 %1585, %v1582
  %v1587 = vpop.permute.xlu0 %1586
  %1590 = vset.pattern.permute.xlu0 0
  %1591 = vperm.xlu0 %1590, %v1583
  %v1592 = vpop.permute.xlu0 %1591
  %v1598 = vunpack.c.l.b16 %v1577
  %v1599 = vunpack.c.h.b16 %v1577
  %v1600 = vunpack.c.l.b16 %v1578
  %v1601 = vunpack.c.l.b16 %v1579
  %v1602 = vunpack.c.h.b16 %v1579
  %v1603 = vunpack.c.l.b16 %v1580
  %v1604 = vpack.c.b16 %v1601, %v1598
  %v1605 = vpack.c.b16 %v1602, %v1599
  %v1606 = vpack.c.b16 %v1603, %v1600
  %v1610 = vsel %vm590, %v1606, 0
  %1612 = vmatprep.subr.bf16.mxu0 0
  %1613 = vmatpush1.bf16.msra.mxu0 %v1558
  %1614 = vmatprep.subr.bf16.mxu0 0
  %1615 = vmatpush1.bf16.msra.mxu0 %v1559
  %1616 = vmatprep.subr.bf16.mxu0 0
  %1617 = vmatpush1.bf16.msra.mxu0 %v1560
  %1618 = vmatprep.subr.bf16.mxu0 0
  %1619 = vmatpush1.bf16.msra.mxu0 %v1561
  %1620 = vmatprep.subr.bf16.mxu0 0
  %1621 = vmatpush1.bf16.msra.mxu0 %v1562
  %1622 = vmatprep.subr.bf16.mxu0 0
  %1623 = vmatpush1.bf16.msra.mxu0 %v1563
  %1624 = vmatprep.subr.bf16.mxu0 0
  %1625 = vmatpush1.bf16.msra.mxu0 %v1564
  %1626 = vmatprep.subr.bf16.mxu0 0
  %1627 = vmatpush1.bf16.msra.mxu0 %v1565
  %1628 = vmatprep.subr.bf16.mxu0 0
  %1629 = vmatpush1.bf16.msra.mxu0 %v1566
  %1630 = vmatprep.subr.bf16.mxu0 0
  %1631 = vmatpush1.bf16.msra.mxu0 %v1567
  %1632 = vmatprep.subr.bf16.mxu0 0
  %1633 = vmatpush1.bf16.msra.mxu0 %v1568
  %1634 = vmatprep.subr.bf16.mxu0 0
  %1635 = vmatpush1.bf16.msra.mxu0 %v1569
  %1636 = vmatprep.subr.bf16.mxu0 0
  %1637 = vmatpush1.bf16.msra.mxu0 %v1570
  %1638 = vmatprep.subr.bf16.mxu0 0
  %1639 = vmatpush1.bf16.msra.mxu0 %v1571
  %1640 = vmatprep.subr.bf16.mxu0 0
  %1641 = vmatpush1.bf16.msra.mxu0 %v1572
  %1642 = vmatprep.subr.bf16.mxu0 0
  %1643 = vmatpush1.bf16.msra.mxu0 %v1573
  %1644 = vmatprep.mubr.bf16.mxu0 %v1605
  %1645 = vmatmul.mubr.bf16.gmra.mrb[0].mxu0 %v1604
  %v1646 = vpop.f32.mrb[0].mxu0
  %v1647 = vadd.f32 %v1587, %v1646
  %v1648 = vpop.f32.mrb[0].mxu0
  %v1649 = vpop.f32.mrb[0].mxu0
  %v1650 = vadd.f32 %v1592, %v1649
  %v1651 = vpop.f32.mrb[0].mxu0
  %1652 = vdwg.mxu0
  %1653 = vmatprep.subr.bf16.mxu0 0
  %1654 = vmatpush1.bf16.msra.mxu0 %v1574
  %1655 = vmatprep.subr.bf16.mxu0 0
  %1656 = vmatpush1.bf16.msra.mxu0 %v1575
  %1657 = vmatprep.subr.bf16.mxu0 0
  %1658 = vmatpush1.bf16.msra.mxu0 0
  %1659 = vmatprep.subr.bf16.mxu0 0
  %1660 = vmatpush1.bf16.msra.mxu0 0
  %1661 = vmatprep.subr.bf16.mxu0 0
  %1662 = vmatpush1.bf16.msra.mxu0 0
  %1663 = vmatprep.subr.bf16.mxu0 0
  %1664 = vmatpush1.bf16.msra.mxu0 0
  %1665 = vmatprep.subr.bf16.mxu0 0
  %1666 = vmatpush1.bf16.msra.mxu0 0
  %1667 = vmatprep.subr.bf16.mxu0 0
  %1668 = vmatpush1.bf16.msra.mxu0 0
  %1669 = vmatprep.subr.bf16.mxu0 0
  %1670 = vmatpush1.bf16.msra.mxu0 0
  %1671 = vmatprep.subr.bf16.mxu0 0
  %1672 = vmatpush1.bf16.msra.mxu0 0
  %1673 = vmatprep.subr.bf16.mxu0 0
  %1674 = vmatpush1.bf16.msra.mxu0 0
  %1675 = vmatprep.subr.bf16.mxu0 0
  %1676 = vmatpush1.bf16.msra.mxu0 0
  %1677 = vmatprep.subr.bf16.mxu0 0
  %1678 = vmatpush1.bf16.msra.mxu0 0
  %1679 = vmatprep.subr.bf16.mxu0 0
  %1680 = vmatpush1.bf16.msra.mxu0 0
  %1681 = vmatprep.subr.bf16.mxu0 0
  %1682 = vmatpush1.bf16.msra.mxu0 0
  %1683 = vmatprep.subr.bf16.mxu0 0
  %1684 = vmatpush1.bf16.msra.mxu0 0
  %1685 = vmatprep.mubr.bf16.mxu0 0
  %1686 = vmatmul.mubr.bf16.gmra.mrb[0].mxu0 %v1610
  %v1687 = vpop.f32.mrb[0].mxu0
  %v1688 = vadd.f32 %v1647, %v1687
  %v1689 = vpop.f32.mrb[0].mxu0
  %v1690 = vpop.f32.mrb[0].mxu0
  %v1691 = vadd.f32 %v1650, %v1690
  %v1692 = vpop.f32.mrb[0].mxu0
  %1693 = vdwg.mxu0
  %v1694 = vadd.f32 %v1688, 2.0
  %v1695 = vadd.f32 %v1691, 2.0
  %v1696 = vand.u32 2147483647, %v1694
  %v1697 = vand.u32 2147483647, %v1695
  %v1698 = vsub.f32 0.0, %v1696
  %v1699 = vsub.f32 0.0, %v1697
  %v1700 = vmul.f32 %v1698, 1.442695
  %v1701 = vpow.pop %v1700
  %v1702 = vmul.f32 %v1699, 1.442695
  %v1703 = vpow.pop %v1702
  %v1704 = vadd.f32 %v1701, 1.0
  %v1705 = vadd.f32 %v1703, 1.0
  %v1706 = vmin.f32 %v1694, 0.0
  %v1707 = vmin.f32 %v1695, 0.0
  %v1708 = vlog2.pop %v1704
  %v1709 = vmul.f32 %v1708, 0.6931472
  %v1710 = vlog2.pop %v1705
  %v1711 = vmul.f32 %v1710, 0.6931472
  %v1712 = vsub.f32 %v1706, %v1709
  %v1713 = vsub.f32 %v1707, %v1711
  %vm1714 = vcmp.lt.f32.partialorder %v1694, 0.0
  %vm1715 = vcmp.lt.f32.partialorder %v1695, 0.0
  %v1716 = vsel %vm1714, %v1701, 1.0
  %v1717 = vsel %vm1715, %v1703, 1.0
  %v1718 = vrcp.pop %v1704
  %v1719 = vrcp.pop %v1705
  %v1720 = vmul.f32 %v1716, %v1718
  %v1721 = vmul.f32 %v1717, %v1719
  %v1723 = vrot.slane %v1688, 2
  %v1725 = vadd.f32 %v1205, %v1723
  %v1726 = vadd.f32 %v1206, %v1723
  %v1727 = vmul.f32 %v1725, %v1720
  %v1728 = vmul.f32 %v1726, %v1721
  %v1731 = vrot.slane %v1712, 6
  %v1732 = vrot.slane %v1713, 6
  %v1733 = vsel %vm439, %v1731, %v1732
  %v1735 = vsel %vm436, %v1733, 0.0
  %v1736 = vrot.slane %v1735, 4
  %v1737 = vadd.f32 %v1735, %v1736
  %v1738 = vrot.slane %v1737, 2
  %v1739 = vadd.f32 %v1737, %v1738
  %v1740 = vrot.slane %v1739, 1
  %v1741 = vadd.f32 %v1739, %v1740
  %v1742 = vadd.f32 %v928, %v1741
  %v1743 = vld [vmem:[%s12] sm:$0xf]
  %v1744 = vld [vmem:[%s12 + $0x4] sm:$0x3]
  %v1745 = vld [vmem:[%s13] sm:$0xff]
  %v1746 = vld [vmem:[%s13 + $0x8] sm:$0xf]
  %1748 = vset.pattern.permute.xlu0 0
  %1749 = vperm.xlu0 %1748, %v1745
  %v1750 = vpop.permute.xlu0 %1749
  %1753 = vset.pattern.permute.xlu0 0
  %1754 = vperm.xlu0 %1753, %v1746
  %v1755 = vpop.permute.xlu0 %1754
  %v1759 = vunpack.c.l.b16 %v1743
  %v1760 = vunpack.c.l.b16 %v1744
  %v1761 = vpack.c.b16 %v1760, %v1759
  %v1763 = vsel %vm486, %v1761, 0
  %1765 = vmatprep.subr.bf16.mxu0 0
  %1766 = vmatpush1.bf16.msra.mxu0 %v1255
  %1767 = vmatprep.subr.bf16.mxu0 0
  %1768 = vmatpush1.bf16.msra.mxu0 %v1256
  %1769 = vmatprep.subr.bf16.mxu0 0
  %1770 = vmatpush1.bf16.msra.mxu0 %v1257
  %1771 = vmatprep.subr.bf16.mxu0 0
  %1772 = vmatpush1.bf16.msra.mxu0 %v1306
  %1773 = vmatprep.subr.bf16.mxu0 0
  %1774 = vmatpush1.bf16.msra.mxu0 0
  %1775 = vmatprep.subr.bf16.mxu0 0
  %1776 = vmatpush1.bf16.msra.mxu0 0
  %1777 = vmatprep.subr.bf16.mxu0 0
  %1778 = vmatpush1.bf16.msra.mxu0 0
  %1779 = vmatprep.subr.bf16.mxu0 0
  %1780 = vmatpush1.bf16.msra.mxu0 0
  %1781 = vmatprep.subr.bf16.mxu0 0
  %1782 = vmatpush1.bf16.msra.mxu0 0
  %1783 = vmatprep.subr.bf16.mxu0 0
  %1784 = vmatpush1.bf16.msra.mxu0 0
  %1785 = vmatprep.subr.bf16.mxu0 0
  %1786 = vmatpush1.bf16.msra.mxu0 0
  %1787 = vmatprep.subr.bf16.mxu0 0
  %1788 = vmatpush1.bf16.msra.mxu0 0
  %1789 = vmatprep.subr.bf16.mxu0 0
  %1790 = vmatpush1.bf16.msra.mxu0 0
  %1791 = vmatprep.subr.bf16.mxu0 0
  %1792 = vmatpush1.bf16.msra.mxu0 0
  %1793 = vmatprep.subr.bf16.mxu0 0
  %1794 = vmatpush1.bf16.msra.mxu0 0
  %1795 = vmatprep.subr.bf16.mxu0 0
  %1796 = vmatpush1.bf16.msra.mxu0 0
  %1797 = vmatprep.mubr.bf16.mxu0 0
  %1798 = vmatmul.mubr.bf16.gmra.mrb[0].mxu0 %v1763
  %v1799 = vpop.f32.mrb[0].mxu0
  %v1800 = vadd.f32 %v1750, %v1799
  %v1801 = vpop.f32.mrb[0].mxu0
  %v1802 = vpop.f32.mrb[0].mxu0
  %v1803 = vadd.f32 %v1755, %v1802
  %v1804 = vpop.f32.mrb[0].mxu0
  %1805 = vdwg.mxu0
  %v1807 = vrot.slane %v1800, 2
  %v1809 = vsub.f32 %v1727, %v1807
  %v1810 = vsub.f32 %v1728, %v1807
  %v1811 = vmul.f32 %v1800, 2.0
  %v1812 = vmul.f32 %v1803, 2.0
  %v1813 = vadd.f32 %v1811, 1.837877
  %v1814 = vadd.f32 %v1812, 1.837877
  %v1815 = vmul.f32 %v1809, %v1809
  %v1816 = vmul.f32 %v1810, %v1810
  %v1817 = vmul.f32 %v1800, -2.0
  %v1818 = vmul.f32 %v1803, -2.0
  %v1819 = vmul.f32 %v1817, 1.442695
  %v1820 = vpow.pop %v1819
  %v1821 = vmul.f32 %v1818, 1.442695
  %v1822 = vpow.pop %v1821
  %v1823 = vmul.f32 %v1815, %v1820
  %v1824 = vmul.f32 %v1816, %v1822
  %v1825 = vadd.f32 %v1813, %v1823
  %v1826 = vadd.f32 %v1814, %v1824
  %v1827 = vmul.f32 %v1825, -0.5
  %v1828 = vmul.f32 %v1826, -0.5
  %v1831 = vrot.slane %v1827, 6
  %v1832 = vrot.slane %v1828, 6
  %v1833 = vsel %vm439, %v1831, %v1832
  %v1835 = vsel %vm436, %v1833, 0.0
  %v1836 = vrot.slane %v1835, 4
  %v1837 = vadd.f32 %v1835, %v1836
  %v1838 = vrot.slane %v1837, 2
  %v1839 = vadd.f32 %v1837, %v1838
  %v1840 = vrot.slane %v1839, 1
  %v1841 = vadd.f32 %v1839, %v1840
  %v1842 = vadd.f32 %v1742, %v1841
  %1843 = vst [vmem:[%s15] sm:$0x3f] %v1205
  %v1844 = vld [vmem:[%s14] sm:$0xff]
  %v1845 = vld [vmem:[%s14 + $0x8] sm:$0xff]
  %v1846 = vld [vmem:[%s14 + $0x10] sm:$0xff]
  %v1847 = vld [vmem:[%s14 + $0x18] sm:$0xff]
  %v1848 = vld [vmem:[%s14 + $0x20] sm:$0xff]
  %v1849 = vld [vmem:[%s14 + $0x28] sm:$0xff]
  %v1850 = vld [vmem:[%s14 + $0x30] sm:$0xff]
  %v1851 = vld [vmem:[%s14 + $0x38] sm:$0xff]
  %v1852 = vld [vmem:[%s14 + $0x40] sm:$0xff]
  %v1853 = vld [vmem:[%s14 + $0x48] sm:$0xff]
  %v1854 = vld [vmem:[%s14 + $0x50] sm:$0xff]
  %v1855 = vld [vmem:[%s14 + $0x58] sm:$0xff]
  %v1856 = vld [vmem:[%s14 + $0x60] sm:$0xff]
  %v1857 = vld [vmem:[%s14 + $0x68] sm:$0xff]
  %v1858 = vld [vmem:[%s14 + $0x70] sm:$0xff]
  %v1859 = vld [vmem:[%s14 + $0x78] sm:$0xff]
  %1860 = vmatprep.subr.mxu0 0.0
  %1861 = vmatpush1.msra.mxu0 %v1844
  %1862 = vmatprep.subr.mxu0 0.0
  %1863 = vmatpush1.msra.mxu0 %v1845
  %1864 = vmatprep.subr.mxu0 0.0
  %1865 = vmatpush1.msra.mxu0 %v1846
  %1866 = vmatprep.subr.mxu0 0.0
  %1867 = vmatpush1.msra.mxu0 %v1847
  %1868 = vmatprep.subr.mxu0 0.0
  %1869 = vmatpush1.msra.mxu0 %v1848
  %1870 = vmatprep.subr.mxu0 0.0
  %1871 = vmatpush1.msra.mxu0 %v1849
  %1872 = vmatprep.subr.mxu0 0.0
  %1873 = vmatpush1.msra.mxu0 %v1850
  %1874 = vmatprep.subr.mxu0 0.0
  %1875 = vmatpush1.msra.mxu0 %v1851
  %1876 = vmatprep.subr.mxu0 0.0
  %1877 = vmatpush1.msra.mxu0 %v1852
  %1878 = vmatprep.subr.mxu0 0.0
  %1879 = vmatpush1.msra.mxu0 %v1853
  %1880 = vmatprep.subr.mxu0 0.0
  %1881 = vmatpush1.msra.mxu0 %v1854
  %1882 = vmatprep.subr.mxu0 0.0
  %1883 = vmatpush1.msra.mxu0 %v1855
  %1884 = vmatprep.subr.mxu0 0.0
  %1885 = vmatpush1.msra.mxu0 %v1856
  %1886 = vmatprep.subr.mxu0 0.0
  %1887 = vmatpush1.msra.mxu0 %v1857
  %1888 = vmatprep.subr.mxu0 0.0
  %1889 = vmatpush1.msra.mxu0 %v1858
  %1890 = vmatprep.subr.mxu0 0.0
  %1891 = vmatpush1.msra.mxu0 %v1859
  %1892 = vmatprep.subr.mxu0 0.0
  %1893 = vmatpush1.msra.mxu0 0.0
  %1894 = vmatprep.subr.mxu0 0.0
  %1895 = vmatpush1.msra.mxu0 0.0
  %1896 = vmatprep.subr.mxu0 0.0
  %1897 = vmatpush1.msra.mxu0 0.0
  %1898 = vmatprep.subr.mxu0 0.0
  %1899 = vmatpush1.msra.mxu0 0.0
  %1900 = vmatprep.subr.mxu0 0.0
  %1901 = vmatpush1.msra.mxu0 0.0
  %1902 = vmatprep.subr.mxu0 0.0
  %1903 = vmatpush1.msra.mxu0 0.0
  %1904 = vmatprep.subr.mxu0 0.0
  %1905 = vmatpush1.msra.mxu0 0.0
  %1906 = vmatprep.subr.mxu0 0.0
  %1907 = vmatpush1.msra.mxu0 0.0
  %1908 = vmatprep.subr.mxu0 0.0
  %1909 = vmatpush1.msra.mxu0 0.0
  %1910 = vmatprep.subr.mxu0 0.0
  %1911 = vmatpush1.msra.mxu0 0.0
  %1912 = vmatprep.subr.mxu0 0.0
  %1913 = vmatpush1.msra.mxu0 0.0
  %1914 = vmatprep.subr.mxu0 0.0
  %1915 = vmatpush1.msra.mxu0 0.0
  %1916 = vmatprep.subr.mxu0 0.0
  %1917 = vmatpush1.msra.mxu0 0.0
  %1918 = vmatprep.subr.mxu0 0.0
  %1919 = vmatpush1.msra.mxu0 0.0
  %1920 = vmatprep.subr.mxu0 0.0
  %1921 = vmatpush1.msra.mxu0 0.0
  %1922 = vmatprep.subr.mxu0 0.0
  %1923 = vmatpush1.msra.mxu0 0.0
  %1924 = vmatprep.mubr.f32.mxu0 0.0
  %1925 = vmatmul.mubr.f32.gmra.mrb[0].mxu0 %v1842
  %v1926 = vpop.f32.mrb[0].mxu0
  %v1927 = vadd.f32 0.0, %v1926
  %v1928 = vpop.f32.mrb[0].mxu0
  %1929 = vdwg.mxu0
  %1930 = vst [vmem:[%s16] sm:$0x1] %v1927
  // Predicated region
  $region62: #{_lambda_.2} parent=0 // pred_check
    _
  $region63: #{_lambda_.2} parent=0 // pred_check_branch
    %1932 = sbr.rel (0) target = $region65
  $region64: #{_lambda_.2} parent=0 // pred_region
    _
  $region65: #{_lambda_.2} parent=0 // pred_fallthru
    _
  // Predicated region
  $region66: #{_lambda_.2} parent=0 // pred_check
    _
  $region67: #{_lambda_.2} parent=0 // pred_check_branch
    %1934 = sbr.rel (0) target = $region69
  $region68: #{_lambda_.2} parent=0 // pred_region
    _
  $region69: #{_lambda_.2} parent=0 // pred_fallthru
    _
  // Predicated region
  $region70: #{_lambda_.2} parent=0 // pred_check
    _
  $region71: #{_lambda_.2} parent=0 // pred_check_branch
    %1936 = sbr.rel (0) target = $region73
  $region72: #{_lambda_.2} parent=0 // pred_region
    _
  $region73: #{_lambda_.2} parent=0 // pred_fallthru
    _
  // Predicated region
  $region74: #{_lambda_.2} parent=0 // pred_check
    _
  $region75: #{_lambda_.2} parent=0 // pred_check_branch
    %1938 = sbr.rel (0) target = $region77
  $region76: #{_lambda_.2} parent=0 // pred_region
    _
  $region77: #{_lambda_.2} parent=0 // pred_fallthru
    _

// kernel: _lambda_.3
$region0: #{_lambda_.3}
  #allocation0 [shape = 'u32[]', space=smem, size = 0x4, offset = 0x4, fixed_abs, tag = 'smem constant byte address 0x4 - core index']
  #allocation1 [shape = 'u32[144,128]{1,0:T(1,128)}', space=vmem, size = 0x12000, scoped, tag = 'internal scratch']
  %s0 = inlined_call_operand.vmem [shape: f32[24,32], index: 0, kind: input, shape index: {}]
  %s1 = inlined_call_operand.vmem [shape: f32[9,1,32], index: 1, kind: input, shape index: {}]
  %s2 = inlined_call_operand.vmem [shape: f32[2,24,24], index: 2, kind: input, shape index: {}]
  %s3 = inlined_call_operand.vmem [shape: f32[2,24,1], index: 3, kind: input, shape index: {}]
  %s4 = inlined_call_operand.vmem [shape: f32[2,32,8], index: 4, kind: input, shape index: {}]
  %s5 = inlined_call_operand.vmem [shape: f32[2,8,32], index: 5, kind: input, shape index: {}]
  %s6 = inlined_call_operand.vmem [shape: bf16[2,32,108], index: 6, kind: input, shape index: {}]
  %s7 = inlined_call_operand.vmem [shape: f32[2,32,1], index: 7, kind: input, shape index: {}, may-alias: {7,9}]
  %s8 = inlined_call_operand.vmem [shape: bf16[2,32,32], index: 8, kind: input, shape index: {}]
  %s9 = inlined_call_operand.vmem [shape: f32[2,32,1], index: 9, kind: input, shape index: {}, may-alias: {7,9}]
  %s10 = inlined_call_operand.vmem [shape: bf16[2,24,288], index: 10, kind: input, shape index: {}]
  %s11 = inlined_call_operand.vmem [shape: f32[2,24,1], index: 11, kind: input, shape index: {}]
  %s12 = inlined_call_operand.vmem [shape: f32[32,128], index: 12, kind: input, shape index: {}]
  %s13 = inlined_call_operand.vmem [shape: f32[24,32], index: 13, kind: output, shape index: {0}]
  %s14 = inlined_call_operand.vmem [shape: f32[1,128], index: 14, kind: output, shape index: {1}]
  %15 = xla_tuple %s13, %s14
  %s16 = sld [smem:[#allocation0]]
  $region70: #{_lambda_.3} parent=0
    _
  %s18 = ssub.s32 1, %s16
  %s19 = scalar_select 0, %s18, %s16
  // Predicated region
  $region2: #{_lambda_.3} parent=0 // pred_check
    _
  $region3: #{_lambda_.3} parent=0 // pred_check_branch
    %21 = sbr.rel (0) target = $region5
  $region4: #{_lambda_.3} parent=0 // pred_region
    _
  $region5: #{_lambda_.3} parent=0 // pred_fallthru
    _
  // Predicated region
  $region6: #{_lambda_.3} parent=0 // pred_check
    _
  $region7: #{_lambda_.3} parent=0 // pred_check_branch
    %23 = sbr.rel (0) target = $region9
  $region8: #{_lambda_.3} parent=0 // pred_region
    _
  $region9: #{_lambda_.3} parent=0 // pred_fallthru
    _
  // Predicated region
  $region10: #{_lambda_.3} parent=0 // pred_check
    _
  $region11: #{_lambda_.3} parent=0 // pred_check_branch
    %25 = sbr.rel (0) target = $region13
  $region12: #{_lambda_.3} parent=0 // pred_region
    _
  $region13: #{_lambda_.3} parent=0 // pred_fallthru
    _
  // Predicated region
  $region14: #{_lambda_.3} parent=0 // pred_check
    _
  $region15: #{_lambda_.3} parent=0 // pred_check_branch
    %27 = sbr.rel (0) target = $region17
  $region16: #{_lambda_.3} parent=0 // pred_region
    _
  $region17: #{_lambda_.3} parent=0 // pred_fallthru
    _
  // Predicated region
  $region18: #{_lambda_.3} parent=0 // pred_check
    _
  $region19: #{_lambda_.3} parent=0 // pred_check_branch
    %29 = sbr.rel (0) target = $region21
  $region20: #{_lambda_.3} parent=0 // pred_region
    _
  $region21: #{_lambda_.3} parent=0 // pred_fallthru
    _
  // Predicated region
  $region22: #{_lambda_.3} parent=0 // pred_check
    _
  $region23: #{_lambda_.3} parent=0 // pred_check_branch
    %31 = sbr.rel (0) target = $region25
  $region24: #{_lambda_.3} parent=0 // pred_region
    _
  $region25: #{_lambda_.3} parent=0 // pred_fallthru
    _
  // Predicated region
  $region26: #{_lambda_.3} parent=0 // pred_check
    _
  $region27: #{_lambda_.3} parent=0 // pred_check_branch
    %33 = sbr.rel (0) target = $region29
  $region28: #{_lambda_.3} parent=0 // pred_region
    _
  $region29: #{_lambda_.3} parent=0 // pred_fallthru
    _
  // Predicated region
  $region30: #{_lambda_.3} parent=0 // pred_check
    _
  $region31: #{_lambda_.3} parent=0 // pred_check_branch
    %35 = sbr.rel (0) target = $region33
  $region32: #{_lambda_.3} parent=0 // pred_region
    _
  $region33: #{_lambda_.3} parent=0 // pred_fallthru
    _
  // Predicated region
  $region34: #{_lambda_.3} parent=0 // pred_check
    _
  $region35: #{_lambda_.3} parent=0 // pred_check_branch
    %37 = sbr.rel (0) target = $region37
  $region36: #{_lambda_.3} parent=0 // pred_region
    _
  $region37: #{_lambda_.3} parent=0 // pred_fallthru
    _
  // Predicated region
  $region38: #{_lambda_.3} parent=0 // pred_check
    _
  $region39: #{_lambda_.3} parent=0 // pred_check_branch
    %39 = sbr.rel (0) target = $region41
  $region40: #{_lambda_.3} parent=0 // pred_region
    _
  $region41: #{_lambda_.3} parent=0 // pred_fallthru
    _
  // Predicated region
  $region42: #{_lambda_.3} parent=0 // pred_check
    _
  $region43: #{_lambda_.3} parent=0 // pred_check_branch
    %41 = sbr.rel (0) target = $region45
  $region44: #{_lambda_.3} parent=0 // pred_region
    _
  $region45: #{_lambda_.3} parent=0 // pred_fallthru
    _
  // Predicated region
  $region46: #{_lambda_.3} parent=0 // pred_check
    _
  $region47: #{_lambda_.3} parent=0 // pred_check_branch
    %43 = sbr.rel (0) target = $region49
  $region48: #{_lambda_.3} parent=0 // pred_region
    _
  $region49: #{_lambda_.3} parent=0 // pred_fallthru
    _
  // Predicated region
  $region50: #{_lambda_.3} parent=0 // pred_check
    _
  $region51: #{_lambda_.3} parent=0 // pred_check_branch
    %45 = sbr.rel (0) target = $region53
  $region52: #{_lambda_.3} parent=0 // pred_region
    _
  $region53: #{_lambda_.3} parent=0 // pred_fallthru
    _
  %v47 = vld [vmem:[%s0] sm:$0xff]
  %v48 = vld [vmem:[%s0 + $0x8] sm:$0xff]
  %v49 = vld [vmem:[%s0 + $0x10] sm:$0xff]
  %v50 = vld [vmem:[%s2] sm:$0xff]
  %v51 = vld [vmem:[%s2 + $0x8] sm:$0xff]
  %v52 = vld [vmem:[%s2 + $0x10] sm:$0xff]
  %v53 = vld [vmem:[%s3] sm:$0xff]
  %v54 = vld [vmem:[%s3 + $0x8] sm:$0xff]
  %v55 = vld [vmem:[%s3 + $0x10] sm:$0xff]
  %57 = vset.pattern.permute.xlu0 0
  %58 = vperm.xlu0 %57, %v53
  %v59 = vpop.permute.xlu0 %58
  %62 = vset.pattern.permute.xlu0 0
  %63 = vperm.xlu0 %62, %v54
  %v64 = vpop.permute.xlu0 %63
  %67 = vset.pattern.permute.xlu0 0
  %68 = vperm.xlu0 %67, %v55
  %v69 = vpop.permute.xlu0 %68
  %vm71 = vcmask 195584
  %v73 = vsel %vm71, %v50, 0
  %v76 = vsel %vm71, %v51, 0
  %v79 = vsel %vm71, %v52, 0
  %81 = vmatprep.subr.mxu0 0.0
  %82 = vmatpush1.msra.mxu0 %v47
  %83 = vmatprep.subr.mxu0 0.0
  %84 = vmatpush1.msra.mxu0 %v48
  %85 = vmatprep.subr.mxu0 0.0
  %86 = vmatpush1.msra.mxu0 %v49
  %87 = vmatprep.subr.mxu0 0.0
  %88 = vmatpush1.msra.mxu0 0.0
  %89 = vmatprep.subr.mxu0 0.0
  %90 = vmatpush1.msra.mxu0 0.0
  %91 = vmatprep.subr.mxu0 0.0
  %92 = vmatpush1.msra.mxu0 0.0
  %93 = vmatprep.subr.mxu0 0.0
  %94 = vmatpush1.msra.mxu0 0.0
  %95 = vmatprep.subr.mxu0 0.0
  %96 = vmatpush1.msra.mxu0 0.0
  %97 = vmatprep.subr.mxu0 0.0
  %98 = vmatpush1.msra.mxu0 0.0
  %99 = vmatprep.subr.mxu0 0.0
  %100 = vmatpush1.msra.mxu0 0.0
  %101 = vmatprep.subr.mxu0 0.0
  %102 = vmatpush1.msra.mxu0 0.0
  %103 = vmatprep.subr.mxu0 0.0
  %104 = vmatpush1.msra.mxu0 0.0
  %105 = vmatprep.subr.mxu0 0.0
  %106 = vmatpush1.msra.mxu0 0.0
  %107 = vmatprep.subr.mxu0 0.0
  %108 = vmatpush1.msra.mxu0 0.0
  %109 = vmatprep.subr.mxu0 0.0
  %110 = vmatpush1.msra.mxu0 0.0
  %111 = vmatprep.subr.mxu0 0.0
  %112 = vmatpush1.msra.mxu0 0.0
  %113 = vmatprep.subr.mxu0 0.0
  %114 = vmatpush1.msra.mxu0 0.0
  %115 = vmatprep.subr.mxu0 0.0
  %116 = vmatpush1.msra.mxu0 0.0
  %117 = vmatprep.subr.mxu0 0.0
  %118 = vmatpush1.msra.mxu0 0.0
  %119 = vmatprep.subr.mxu0 0.0
  %120 = vmatpush1.msra.mxu0 0.0
  %121 = vmatprep.subr.mxu0 0.0
  %122 = vmatpush1.msra.mxu0 0.0
  %123 = vmatprep.subr.mxu0 0.0
  %124 = vmatpush1.msra.mxu0 0.0
  %125 = vmatprep.subr.mxu0 0.0
  %126 = vmatpush1.msra.mxu0 0.0
  %127 = vmatprep.subr.mxu0 0.0
  %128 = vmatpush1.msra.mxu0 0.0
  %129 = vmatprep.subr.mxu0 0.0
  %130 = vmatpush1.msra.mxu0 0.0
  %131 = vmatprep.subr.mxu0 0.0
  %132 = vmatpush1.msra.mxu0 0.0
  %133 = vmatprep.subr.mxu0 0.0
  %134 = vmatpush1.msra.mxu0 0.0
  %135 = vmatprep.subr.mxu0 0.0
  %136 = vmatpush1.msra.mxu0 0.0
  %137 = vmatprep.subr.mxu0 0.0
  %138 = vmatpush1.msra.mxu0 0.0
  %139 = vmatprep.subr.mxu0 0.0
  %140 = vmatpush1.msra.mxu0 0.0
  %141 = vmatprep.subr.mxu0 0.0
  %142 = vmatpush1.msra.mxu0 0.0
  %143 = vmatprep.subr.mxu0 0.0
  %144 = vmatpush1.msra.mxu0 0.0
  %145 = vmatprep.mubr.f32.mxu0 0.0
  %146 = vmatmul.mubr.f32.gmra.mrb[0].mxu0 %v73
  %v147 = vpop.f32.mrb[0].mxu0
  %v148 = vadd.f32 %v59, %v147
  %v149 = vpop.f32.mrb[0].mxu0
  %150 = vmatprep.mubr.f32.mxu0 0.0
  %151 = vmatmul.mubr.f32.gmra.mrb[0].mxu0 %v76
  %v152 = vpop.f32.mrb[0].mxu0
  %v153 = vadd.f32 %v64, %v152
  %v154 = vpop.f32.mrb[0].mxu0
  %155 = vmatprep.mubr.f32.mxu0 0.0
  %156 = vmatmul.mubr.f32.gmra.mrb[0].mxu0 %v79
  %v157 = vpop.f32.mrb[0].mxu0
  %v158 = vadd.f32 %v69, %v157
  %v159 = vpop.f32.mrb[0].mxu0
  %160 = vdwg.mxu0
  %v161 = vld [vmem:[%s4] sm:$0xff]
  %v162 = vld [vmem:[%s4 + $0x8] sm:$0xff]
  %v163 = vld [vmem:[%s4 + $0x10] sm:$0xff]
  %v164 = vld [vmem:[%s4 + $0x18] sm:$0xff]
  %vm165 = vcmask 261120
  %v167 = vsel %vm165, %v148, 0
  %v170 = vsel %vm165, %v153, 0
  %v173 = vsel %vm165, %v158, 0
  %175 = vmatprep.subr.mxu0 0.0
  %176 = vmatpush1.msra.mxu0 %v161
  %177 = vmatprep.subr.mxu0 0.0
  %178 = vmatpush1.msra.mxu0 %v162
  %179 = vmatprep.subr.mxu0 0.0
  %180 = vmatpush1.msra.mxu0 %v163
  %181 = vmatprep.subr.mxu0 0.0
  %182 = vmatpush1.msra.mxu0 %v164
  %183 = vmatprep.subr.mxu0 0.0
  %184 = vmatpush1.msra.mxu0 0.0
  %185 = vmatprep.subr.mxu0 0.0
  %186 = vmatpush1.msra.mxu0 0.0
  %187 = vmatprep.subr.mxu0 0.0
  %188 = vmatpush1.msra.mxu0 0.0
  %189 = vmatprep.subr.mxu0 0.0
  %190 = vmatpush1.msra.mxu0 0.0
  %191 = vmatprep.subr.mxu0 0.0
  %192 = vmatpush1.msra.mxu0 0.0
  %193 = vmatprep.subr.mxu0 0.0
  %194 = vmatpush1.msra.mxu0 0.0
  %195 = vmatprep.subr.mxu0 0.0
  %196 = vmatpush1.msra.mxu0 0.0
  %197 = vmatprep.subr.mxu0 0.0
  %198 = vmatpush1.msra.mxu0 0.0
  %199 = vmatprep.subr.mxu0 0.0
  %200 = vmatpush1.msra.mxu0 0.0
  %201 = vmatprep.subr.mxu0 0.0
  %202 = vmatpush1.msra.mxu0 0.0
  %203 = vmatprep.subr.mxu0 0.0
  %204 = vmatpush1.msra.mxu0 0.0
  %205 = vmatprep.subr.mxu0 0.0
  %206 = vmatpush1.msra.mxu0 0.0
  %207 = vmatprep.subr.mxu0 0.0
  %208 = vmatpush1.msra.mxu0 0.0
  %209 = vmatprep.subr.mxu0 0.0
  %210 = vmatpush1.msra.mxu0 0.0
  %211 = vmatprep.subr.mxu0 0.0
  %212 = vmatpush1.msra.mxu0 0.0
  %213 = vmatprep.subr.mxu0 0.0
  %214 = vmatpush1.msra.mxu0 0.0
  %215 = vmatprep.subr.mxu0 0.0
  %216 = vmatpush1.msra.mxu0 0.0
  %217 = vmatprep.subr.mxu0 0.0
  %218 = vmatpush1.msra.mxu0 0.0
  %219 = vmatprep.subr.mxu0 0.0
  %220 = vmatpush1.msra.mxu0 0.0
  %221 = vmatprep.subr.mxu0 0.0
  %222 = vmatpush1.msra.mxu0 0.0
  %223 = vmatprep.subr.mxu0 0.0
  %224 = vmatpush1.msra.mxu0 0.0
  %225 = vmatprep.subr.mxu0 0.0
  %226 = vmatpush1.msra.mxu0 0.0
  %227 = vmatprep.subr.mxu0 0.0
  %228 = vmatpush1.msra.mxu0 0.0
  %229 = vmatprep.subr.mxu0 0.0
  %230 = vmatpush1.msra.mxu0 0.0
  %231 = vmatprep.subr.mxu0 0.0
  %232 = vmatpush1.msra.mxu0 0.0
  %233 = vmatprep.subr.mxu0 0.0
  %234 = vmatpush1.msra.mxu0 0.0
  %235 = vmatprep.subr.mxu0 0.0
  %236 = vmatpush1.msra.mxu0 0.0
  %237 = vmatprep.subr.mxu0 0.0
  %238 = vmatpush1.msra.mxu0 0.0
  %239 = vmatprep.mubr.f32.mxu0 0.0
  %240 = vmatmul.mubr.f32.gmra.mrb[0].mxu0 %v167
  %v241 = vpop.f32.mrb[0].mxu0
  %v242 = vadd.f32 0.0, %v241
  %v243 = vpop.f32.mrb[0].mxu0
  %244 = vmatprep.mubr.f32.mxu0 0.0
  %245 = vmatmul.mubr.f32.gmra.mrb[0].mxu0 %v170
  %v246 = vpop.f32.mrb[0].mxu0
  %v247 = vadd.f32 0.0, %v246
  %v248 = vpop.f32.mrb[0].mxu0
  %249 = vmatprep.mubr.f32.mxu0 0.0
  %250 = vmatmul.mubr.f32.gmra.mrb[0].mxu0 %v173
  %v251 = vpop.f32.mrb[0].mxu0
  %v252 = vadd.f32 0.0, %v251
  %v253 = vpop.f32.mrb[0].mxu0
  %254 = vdwg.mxu0
  %v255 = vld [vmem:[%s5] sm:$0xff]
  %vm256 = vcmask 64512
  %v258 = vsel %vm256, %v242, 0
  %v261 = vsel %vm256, %v247, 0
  %v264 = vsel %vm256, %v252, 0
  %266 = vmatprep.subr.mxu0 0.0
  %267 = vmatpush1.msra.mxu0 %v255
  %268 = vmatprep.subr.mxu0 0.0
  %269 = vmatpush1.msra.mxu0 0.0
  %270 = vmatprep.subr.mxu0 0.0
  %271 = vmatpush1.msra.mxu0 0.0
  %272 = vmatprep.subr.mxu0 0.0
  %273 = vmatpush1.msra.mxu0 0.0
  %274 = vmatprep.subr.mxu0 0.0
  %275 = vmatpush1.msra.mxu0 0.0
  %276 = vmatprep.subr.mxu0 0.0
  %277 = vmatpush1.msra.mxu0 0.0
  %278 = vmatprep.subr.mxu0 0.0
  %279 = vmatpush1.msra.mxu0 0.0
  %280 = vmatprep.subr.mxu0 0.0
  %281 = vmatpush1.msra.mxu0 0.0
  %282 = vmatprep.subr.mxu0 0.0
  %283 = vmatpush1.msra.mxu0 0.0
  %284 = vmatprep.subr.mxu0 0.0
  %285 = vmatpush1.msra.mxu0 0.0
  %286 = vmatprep.subr.mxu0 0.0
  %287 = vmatpush1.msra.mxu0 0.0
  %288 = vmatprep.subr.mxu0 0.0
  %289 = vmatpush1.msra.mxu0 0.0
  %290 = vmatprep.subr.mxu0 0.0
  %291 = vmatpush1.msra.mxu0 0.0
  %292 = vmatprep.subr.mxu0 0.0
  %293 = vmatpush1.msra.mxu0 0.0
  %294 = vmatprep.subr.mxu0 0.0
  %295 = vmatpush1.msra.mxu0 0.0
  %296 = vmatprep.subr.mxu0 0.0
  %297 = vmatpush1.msra.mxu0 0.0
  %298 = vmatprep.subr.mxu0 0.0
  %299 = vmatpush1.msra.mxu0 0.0
  %300 = vmatprep.subr.mxu0 0.0
  %301 = vmatpush1.msra.mxu0 0.0
  %302 = vmatprep.subr.mxu0 0.0
  %303 = vmatpush1.msra.mxu0 0.0
  %304 = vmatprep.subr.mxu0 0.0
  %305 = vmatpush1.msra.mxu0 0.0
  %306 = vmatprep.subr.mxu0 0.0
  %307 = vmatpush1.msra.mxu0 0.0
  %308 = vmatprep.subr.mxu0 0.0
  %309 = vmatpush1.msra.mxu0 0.0
  %310 = vmatprep.subr.mxu0 0.0
  %311 = vmatpush1.msra.mxu0 0.0
  %312 = vmatprep.subr.mxu0 0.0
  %313 = vmatpush1.msra.mxu0 0.0
  %314 = vmatprep.subr.mxu0 0.0
  %315 = vmatpush1.msra.mxu0 0.0
  %316 = vmatprep.subr.mxu0 0.0
  %317 = vmatpush1.msra.mxu0 0.0
  %318 = vmatprep.subr.mxu0 0.0
  %319 = vmatpush1.msra.mxu0 0.0
  %320 = vmatprep.subr.mxu0 0.0
  %321 = vmatpush1.msra.mxu0 0.0
  %322 = vmatprep.subr.mxu0 0.0
  %323 = vmatpush1.msra.mxu0 0.0
  %324 = vmatprep.subr.mxu0 0.0
  %325 = vmatpush1.msra.mxu0 0.0
  %326 = vmatprep.subr.mxu0 0.0
  %327 = vmatpush1.msra.mxu0 0.0
  %328 = vmatprep.subr.mxu0 0.0
  %329 = vmatpush1.msra.mxu0 0.0
  %330 = vmatprep.mubr.f32.mxu0 0.0
  %331 = vmatmul.mubr.f32.gmra.mrb[0].mxu0 %v258
  %v332 = vpop.f32.mrb[0].mxu0
  %v333 = vadd.f32 0.0, %v332
  %v334 = vpop.f32.mrb[0].mxu0
  %335 = vmatprep.mubr.f32.mxu0 0.0
  %336 = vmatmul.mubr.f32.gmra.mrb[0].mxu0 %v261
  %v337 = vpop.f32.mrb[0].mxu0
  %v338 = vadd.f32 0.0, %v337
  %v339 = vpop.f32.mrb[0].mxu0
  %340 = vmatprep.mubr.f32.mxu0 0.0
  %341 = vmatmul.mubr.f32.gmra.mrb[0].mxu0 %v264
  %v342 = vpop.f32.mrb[0].mxu0
  %v343 = vadd.f32 0.0, %v342
  %v344 = vpop.f32.mrb[0].mxu0
  %345 = vdwg.mxu0
  %v346 = vadd.f32 %v148, %v333
  %v347 = vadd.f32 %v153, %v338
  %v348 = vadd.f32 %v158, %v343
  %351 = vrot.lane.b32.xlu0 %v346, 101
  %v352 = vpop.permute.xlu0 %351
  %353 = vrot.lane.b32.xlu0 %v347, 101
  %v354 = vpop.permute.xlu0 %353
  %357 = vrot.lane.b32.xlu0 %v346, 5
  %v358 = vpop.permute.xlu0 %357
  %359 = vrot.lane.b32.xlu0 %v347, 5
  %v360 = vpop.permute.xlu0 %359
  %vm363 = vcmask 39936
  %v364 = vsel %vm363, %v352, %v358
  %v365 = vsel %vm363, %v354, %v360
  %v366 = vld [vmem:[%s1] sm:$0x1]
  %v368 = vlaneseq
  %v369 = vshrl.u32 %v368, 7
  %v370 = vsub.s32 0, %v369
  %v371 = vrot.slane %v366, %v370
  %v373 = vmul.f32 %v364, %v371
  %v374 = vmul.f32 %v365, %v371
  %375 = vrot.lane.b32.xlu0 %v346, 100
  %v376 = vpop.permute.xlu0 %375
  %377 = vrot.lane.b32.xlu0 %v347, 100
  %v378 = vpop.permute.xlu0 %377
  %381 = vrot.lane.b32.xlu0 %v346, 4
  %v382 = vpop.permute.xlu0 %381
  %383 = vrot.lane.b32.xlu0 %v347, 4
  %v384 = vpop.permute.xlu0 %383
  %vm387 = vcmask 31744
  %v388 = vsel %vm387, %v376, %v382
  %v389 = vsel %vm387, %v378, %v384
  %s390 = scalar_lea.vmem %s1, 1
  %v391 = vld [vmem:[%s390] sm:$0x1]
  %v393 = vlaneseq
  %v394 = vshrl.u32 %v393, 7
  %v395 = vsub.s32 0, %v394
  %v396 = vrot.slane %v391, %v395
  %v398 = vmul.f32 %v388, %v396
  %v399 = vmul.f32 %v389, %v396
  %400 = vrot.lane.b32.xlu0 %v346, 99
  %v401 = vpop.permute.xlu0 %400
  %402 = vrot.lane.b32.xlu0 %v347, 99
  %v403 = vpop.permute.xlu0 %402
  %406 = vrot.lane.b32.xlu0 %v346, 3
  %v407 = vpop.permute.xlu0 %406
  %408 = vrot.lane.b32.xlu0 %v347, 3
  %v409 = vpop.permute.xlu0 %408
  %vm412 = vcmask 23552
  %v413 = vsel %vm412, %v401, %v407
  %v414 = vsel %vm412, %v403, %v409
  %s415 = scalar_lea.vmem %s1, 2
  %v416 = vld [vmem:[%s415] sm:$0x1]
  %v418 = vlaneseq
  %v419 = vshrl.u32 %v418, 7
  %v420 = vsub.s32 0, %v419
  %v421 = vrot.slane %v416, %v420
  %v423 = vmul.f32 %v413, %v421
  %v424 = vmul.f32 %v414, %v421
  %425 = vrot.lane.b32.xlu0 %v346, 97
  %v426 = vpop.permute.xlu0 %425
  %427 = vrot.lane.b32.xlu0 %v347, 97
  %v428 = vpop.permute.xlu0 %427
  %431 = vrot.lane.b32.xlu0 %v346, 1
  %v432 = vpop.permute.xlu0 %431
  %433 = vrot.lane.b32.xlu0 %v347, 1
  %v434 = vpop.permute.xlu0 %433
  %vm437 = vcmask 7168
  %v438 = vsel %vm437, %v426, %v432
  %v439 = vsel %vm437, %v428, %v434
  %s440 = scalar_lea.vmem %s1, 3
  %v441 = vld [vmem:[%s440] sm:$0x1]
  %v443 = vlaneseq
  %v444 = vshrl.u32 %v443, 7
  %v445 = vsub.s32 0, %v444
  %v446 = vrot.slane %v441, %v445
  %v448 = vmul.f32 %v438, %v446
  %v449 = vmul.f32 %v439, %v446
  %450 = vrot.lane.b32.xlu0 %v346, 127
  %v451 = vpop.permute.xlu0 %450
  %452 = vrot.lane.b32.xlu0 %v347, 127
  %v453 = vpop.permute.xlu0 %452
  %456 = vrot.lane.b32.xlu0 %v346, 31
  %v457 = vpop.permute.xlu0 %456
  %458 = vrot.lane.b32.xlu0 %v347, 31
  %v459 = vpop.permute.xlu0 %458
  %vm462 = vcmask 252928
  %v463 = vsel %vm462, %v451, %v457
  %v464 = vsel %vm462, %v453, %v459
  %s465 = scalar_lea.vmem %s1, 5
  %v466 = vld [vmem:[%s465] sm:$0x1]
  %v468 = vlaneseq
  %v469 = vshrl.u32 %v468, 7
  %v470 = vsub.s32 0, %v469
  %v471 = vrot.slane %v466, %v470
  %v473 = vmul.f32 %v463, %v471
  %v474 = vmul.f32 %v464, %v471
  %475 = vrot.lane.b32.xlu0 %v346, 125
  %v476 = vpop.permute.xlu0 %475
  %477 = vrot.lane.b32.xlu0 %v347, 125
  %v478 = vpop.permute.xlu0 %477
  %481 = vrot.lane.b32.xlu0 %v346, 29
  %v482 = vpop.permute.xlu0 %481
  %483 = vrot.lane.b32.xlu0 %v347, 29
  %v484 = vpop.permute.xlu0 %483
  %vm487 = vcmask 236544
  %v488 = vsel %vm487, %v476, %v482
  %v489 = vsel %vm487, %v478, %v484
  %s490 = scalar_lea.vmem %s1, 6
  %v491 = vld [vmem:[%s490] sm:$0x1]
  %v493 = vlaneseq
  %v494 = vshrl.u32 %v493, 7
  %v495 = vsub.s32 0, %v494
  %v496 = vrot.slane %v491, %v495
  %v498 = vmul.f32 %v488, %v496
  %v499 = vmul.f32 %v489, %v496
  %500 = vrot.lane.b32.xlu0 %v346, 124
  %v501 = vpop.permute.xlu0 %500
  %502 = vrot.lane.b32.xlu0 %v347, 124
  %v503 = vpop.permute.xlu0 %502
  %506 = vrot.lane.b32.xlu0 %v346, 28
  %v507 = vpop.permute.xlu0 %506
  %508 = vrot.lane.b32.xlu0 %v347, 28
  %v509 = vpop.permute.xlu0 %508
  %vm512 = vcmask 228352
  %v513 = vsel %vm512, %v501, %v507
  %v514 = vsel %vm512, %v503, %v509
  %s515 = scalar_lea.vmem %s1, 7
  %v516 = vld [vmem:[%s515] sm:$0x1]
  %v518 = vlaneseq
  %v519 = vshrl.u32 %v518, 7
  %v520 = vsub.s32 0, %v519
  %v521 = vrot.slane %v516, %v520
  %v523 = vmul.f32 %v513, %v521
  %v524 = vmul.f32 %v514, %v521
  %525 = vrot.lane.b32.xlu0 %v346, 123
  %v526 = vpop.permute.xlu0 %525
  %527 = vrot.lane.b32.xlu0 %v347, 123
  %v528 = vpop.permute.xlu0 %527
  %531 = vrot.lane.b32.xlu0 %v346, 27
  %v532 = vpop.permute.xlu0 %531
  %533 = vrot.lane.b32.xlu0 %v347, 27
  %v534 = vpop.permute.xlu0 %533
  %vm537 = vcmask 220160
  %v538 = vsel %vm537, %v526, %v532
  %v539 = vsel %vm537, %v528, %v534
  %s540 = scalar_lea.vmem %s1, 8
  %v541 = vld [vmem:[%s540] sm:$0x1]
  %v543 = vlaneseq
  %v544 = vshrl.u32 %v543, 7
  %v545 = vsub.s32 0, %v544
  %v546 = vrot.slane %v541, %v545
  %v548 = vmul.f32 %v538, %v546
  %v549 = vmul.f32 %v539, %v546
  %vm552 = vcmask 1043456
  %v553 = vrot.slane %v398, 4
  %v554 = vrot.slane %v399, 4
  %v555 = vsel %vm552, %v553, %v554
  %v560 = vrot.slane %v448, 4
  %v561 = vrot.slane %v449, 4
  %v562 = vsel %vm552, %v560, %v561
  %v567 = vrot.slane %v473, 4
  %v568 = vrot.slane %v474, 4
  %v569 = vsel %vm552, %v567, %v568
  %v574 = vrot.slane %v523, 4
  %v575 = vrot.slane %v524, 4
  %v576 = vsel %vm552, %v574, %v575
  %v579 = vsel %vm552, %v374, %v553
  %v580 = vsel %vm552, %v424, %v560
  %v581 = vsel %vm552, %v347, %v567
  %v582 = vsel %vm552, %v499, %v574
  %v583 = vpack.c.bf16 %v579, %v373
  %v584 = vpack.c.bf16 %v423, %v555
  %v585 = vpack.c.bf16 %v562, %v580
  %v586 = vpack.c.bf16 %v581, %v346
  %v587 = vpack.c.bf16 %v498, %v569
  %v588 = vpack.c.bf16 %v576, %v582
  %v589 = vpack.c.bf16 %v549, %v548
  %v590 = vld [vmem:[%s6] sm:$0xf]
  %v591 = vld [vmem:[%s6 + $0x4] sm:$0xf]
  %v592 = vld [vmem:[%s6 + $0x8] sm:$0xf]
  %v593 = vld [vmem:[%s6 + $0xc] sm:$0xf]
  %v594 = vld [vmem:[%s7] sm:$0xff]
  %v595 = vld [vmem:[%s7 + $0x8] sm:$0xff]
  %v596 = vld [vmem:[%s7 + $0x10] sm:$0xff]
  %v597 = vld [vmem:[%s7 + $0x18] sm:$0xff]
  %599 = vset.pattern.permute.xlu0 0
  %600 = vperm.xlu0 %599, %v594
  %v601 = vpop.permute.xlu0 %600
  %604 = vset.pattern.permute.xlu0 0
  %605 = vperm.xlu0 %604, %v595
  %v606 = vpop.permute.xlu0 %605
  %609 = vset.pattern.permute.xlu0 0
  %610 = vperm.xlu0 %609, %v596
  %v611 = vpop.permute.xlu0 %610
  %614 = vset.pattern.permute.xlu0 0
  %615 = vperm.xlu0 %614, %v597
  %v616 = vpop.permute.xlu0 %615
  %v622 = vunpack.c.l.b16 %v590
  %v623 = vunpack.c.l.b16 %v591
  %v624 = vunpack.c.l.b16 %v592
  %v625 = vunpack.c.l.b16 %v593
  %v626 = vpack.c.b16 %v623, %v622
  %v627 = vpack.c.b16 %v625, %v624
  %vm628 = vcmask 883712
  %v630 = vsel %vm628, %v626, 0
  %v633 = vsel %vm628, %v627, 0
  %vm635 = vcmask 1045504
  %v637 = vsel %vm635, %v589, 0
  %639 = vmatprep.subr.bf16.mxu0 0
  %640 = vmatpush1.bf16.msra.mxu0 %v583
  %641 = vmatprep.subr.bf16.mxu0 0
  %642 = vmatpush1.bf16.msra.mxu0 %v584
  %643 = vmatprep.subr.bf16.mxu0 0
  %644 = vmatpush1.bf16.msra.mxu0 %v585
  %645 = vmatprep.subr.bf16.mxu0 0
  %646 = vmatpush1.bf16.msra.mxu0 %v586
  %647 = vmatprep.subr.bf16.mxu0 0
  %648 = vmatpush1.bf16.msra.mxu0 %v587
  %649 = vmatprep.subr.bf16.mxu0 0
  %650 = vmatpush1.bf16.msra.mxu0 %v588
  %651 = vmatprep.subr.bf16.mxu0 0
  %652 = vmatpush1.bf16.msra.mxu0 %v637
  %653 = vmatprep.subr.bf16.mxu0 0
  %654 = vmatpush1.bf16.msra.mxu0 0
  %655 = vmatprep.subr.bf16.mxu0 0
  %656 = vmatpush1.bf16.msra.mxu0 0
  %657 = vmatprep.subr.bf16.mxu0 0
  %658 = vmatpush1.bf16.msra.mxu0 0
  %659 = vmatprep.subr.bf16.mxu0 0
  %660 = vmatpush1.bf16.msra.mxu0 0
  %661 = vmatprep.subr.bf16.mxu0 0
  %662 = vmatpush1.bf16.msra.mxu0 0
  %663 = vmatprep.subr.bf16.mxu0 0
  %664 = vmatpush1.bf16.msra.mxu0 0
  %665 = vmatprep.subr.bf16.mxu0 0
  %666 = vmatpush1.bf16.msra.mxu0 0
  %667 = vmatprep.subr.bf16.mxu0 0
  %668 = vmatpush1.bf16.msra.mxu0 0
  %669 = vmatprep.subr.bf16.mxu0 0
  %670 = vmatpush1.bf16.msra.mxu0 0
  %671 = vmatprep.mubr.bf16.mxu0 0
  %672 = vmatmul.mubr.bf16.gmra.mrb[0].mxu0 %v630
  %v673 = vpop.f32.mrb[0].mxu0
  %v674 = vadd.f32 %v601, %v673
  %v675 = vpop.f32.mrb[0].mxu0
  %v676 = vpop.f32.mrb[0].mxu0
  %v677 = vadd.f32 %v606, %v676
  %v678 = vpop.f32.mrb[0].mxu0
  %679 = vmatprep.mubr.bf16.mxu0 0
  %680 = vmatmul.mubr.bf16.gmra.mrb[0].mxu0 %v633
  %v681 = vpop.f32.mrb[0].mxu0
  %v682 = vadd.f32 %v611, %v681
  %v683 = vpop.f32.mrb[0].mxu0
  %v684 = vpop.f32.mrb[0].mxu0
  %v685 = vadd.f32 %v616, %v684
  %v686 = vpop.f32.mrb[0].mxu0
  %687 = vdwg.mxu0
  %v688 = vmax.f32 %v674, 0.0
  %v689 = vmax.f32 %v677, 0.0
  %v690 = vmax.f32 %v682, 0.0
  %v691 = vmax.f32 %v685, 0.0
  %v692 = vld [vmem:[%s8] sm:$0xf]
  %v693 = vld [vmem:[%s8 + $0x4] sm:$0xf]
  %v694 = vld [vmem:[%s8 + $0x8] sm:$0xf]
  %v695 = vld [vmem:[%s8 + $0xc] sm:$0xf]
  %v696 = vpack.c.bf16 %v689, %v688
  %v697 = vpack.c.bf16 %v691, %v690
  %v698 = vld [vmem:[%s9] sm:$0xff]
  %v699 = vld [vmem:[%s9 + $0x8] sm:$0xff]
  %v700 = vld [vmem:[%s9 + $0x10] sm:$0xff]
  %v701 = vld [vmem:[%s9 + $0x18] sm:$0xff]
  %703 = vset.pattern.permute.xlu0 0
  %704 = vperm.xlu0 %703, %v698
  %v705 = vpop.permute.xlu0 %704
  %708 = vset.pattern.permute.xlu0 0
  %709 = vperm.xlu0 %708, %v699
  %v710 = vpop.permute.xlu0 %709
  %713 = vset.pattern.permute.xlu0 0
  %714 = vperm.xlu0 %713, %v700
  %v715 = vpop.permute.xlu0 %714
  %718 = vset.pattern.permute.xlu0 0
  %719 = vperm.xlu0 %718, %v701
  %v720 = vpop.permute.xlu0 %719
  %v726 = vunpack.c.l.b16 %v692
  %v727 = vunpack.c.l.b16 %v693
  %v728 = vunpack.c.l.b16 %v694
  %v729 = vunpack.c.l.b16 %v695
  %v730 = vpack.c.b16 %v727, %v726
  %v731 = vpack.c.b16 %v729, %v728
  %v733 = vsel %vm165, %v730, 0
  %v736 = vsel %vm165, %v731, 0
  %738 = vmatprep.subr.bf16.mxu0 0
  %739 = vmatpush1.bf16.msra.mxu0 %v696
  %740 = vmatprep.subr.bf16.mxu0 0
  %741 = vmatpush1.bf16.msra.mxu0 %v697
  %742 = vmatprep.subr.bf16.mxu0 0
  %743 = vmatpush1.bf16.msra.mxu0 0
  %744 = vmatprep.subr.bf16.mxu0 0
  %745 = vmatpush1.bf16.msra.mxu0 0
  %746 = vmatprep.subr.bf16.mxu0 0
  %747 = vmatpush1.bf16.msra.mxu0 0
  %748 = vmatprep.subr.bf16.mxu0 0
  %749 = vmatpush1.bf16.msra.mxu0 0
  %750 = vmatprep.subr.bf16.mxu0 0
  %751 = vmatpush1.bf16.msra.mxu0 0
  %752 = vmatprep.subr.bf16.mxu0 0
  %753 = vmatpush1.bf16.msra.mxu0 0
  %754 = vmatprep.subr.bf16.mxu0 0
  %755 = vmatpush1.bf16.msra.mxu0 0
  %756 = vmatprep.subr.bf16.mxu0 0
  %757 = vmatpush1.bf16.msra.mxu0 0
  %758 = vmatprep.subr.bf16.mxu0 0
  %759 = vmatpush1.bf16.msra.mxu0 0
  %760 = vmatprep.subr.bf16.mxu0 0
  %761 = vmatpush1.bf16.msra.mxu0 0
  %762 = vmatprep.subr.bf16.mxu0 0
  %763 = vmatpush1.bf16.msra.mxu0 0
  %764 = vmatprep.subr.bf16.mxu0 0
  %765 = vmatpush1.bf16.msra.mxu0 0
  %766 = vmatprep.subr.bf16.mxu0 0
  %767 = vmatpush1.bf16.msra.mxu0 0
  %768 = vmatprep.subr.bf16.mxu0 0
  %769 = vmatpush1.bf16.msra.mxu0 0
  %770 = vmatprep.mubr.bf16.mxu0 0
  %771 = vmatmul.mubr.bf16.gmra.mrb[0].mxu0 %v733
  %v772 = vpop.f32.mrb[0].mxu0
  %v773 = vadd.f32 %v705, %v772
  %v774 = vpop.f32.mrb[0].mxu0
  %v775 = vpop.f32.mrb[0].mxu0
  %v776 = vadd.f32 %v710, %v775
  %v777 = vpop.f32.mrb[0].mxu0
  %778 = vmatprep.mubr.bf16.mxu0 0
  %779 = vmatmul.mubr.bf16.gmra.mrb[0].mxu0 %v736
  %v780 = vpop.f32.mrb[0].mxu0
  %v781 = vadd.f32 %v715, %v780
  %v782 = vpop.f32.mrb[0].mxu0
  %v783 = vpop.f32.mrb[0].mxu0
  %v784 = vadd.f32 %v720, %v783
  %v785 = vpop.f32.mrb[0].mxu0
  %786 = vdwg.mxu0
  %v787 = vmax.f32 %v773, 0.0
  %v788 = vmax.f32 %v776, 0.0
  %v789 = vmax.f32 %v781, 0.0
  %v790 = vmax.f32 %v784, 0.0
  %795 = vrot.lane.b32.xlu0 %v787, 101
  %v796 = vpop.permute.xlu0 %795
  %797 = vrot.lane.b32.xlu0 %v788, 101
  %v798 = vpop.permute.xlu0 %797
  %799 = vrot.lane.b32.xlu0 %v789, 101
  %v800 = vpop.permute.xlu0 %799
  %801 = vrot.lane.b32.xlu0 %v790, 101
  %v802 = vpop.permute.xlu0 %801
  %807 = vrot.lane.b32.xlu0 %v787, 5
  %v808 = vpop.permute.xlu0 %807
  %809 = vrot.lane.b32.xlu0 %v788, 5
  %v810 = vpop.permute.xlu0 %809
  %811 = vrot.lane.b32.xlu0 %v789, 5
  %v812 = vpop.permute.xlu0 %811
  %813 = vrot.lane.b32.xlu0 %v790, 5
  %v814 = vpop.permute.xlu0 %813
  %v819 = vsel %vm363, %v796, %v808
  %v820 = vsel %vm363, %v798, %v810
  %v821 = vsel %vm363, %v800, %v812
  %v822 = vsel %vm363, %v802, %v814
  %v823 = vmul.f32 %v819, %v371
  %v824 = vmul.f32 %v820, %v371
  %v825 = vmul.f32 %v821, %v371
  %v826 = vmul.f32 %v822, %v371
  %827 = vrot.lane.b32.xlu0 %v787, 100
  %v828 = vpop.permute.xlu0 %827
  %829 = vrot.lane.b32.xlu0 %v788, 100
  %v830 = vpop.permute.xlu0 %829
  %831 = vrot.lane.b32.xlu0 %v789, 100
  %v832 = vpop.permute.xlu0 %831
  %833 = vrot.lane.b32.xlu0 %v790, 100
  %v834 = vpop.permute.xlu0 %833
  %839 = vrot.lane.b32.xlu0 %v787, 4
  %v840 = vpop.permute.xlu0 %839
  %841 = vrot.lane.b32.xlu0 %v788, 4
  %v842 = vpop.permute.xlu0 %841
  %843 = vrot.lane.b32.xlu0 %v789, 4
  %v844 = vpop.permute.xlu0 %843
  %845 = vrot.lane.b32.xlu0 %v790, 4
  %v846 = vpop.permute.xlu0 %845
  %v851 = vsel %vm387, %v828, %v840
  %v852 = vsel %vm387, %v830, %v842
  %v853 = vsel %vm387, %v832, %v844
  %v854 = vsel %vm387, %v834, %v846
  %v855 = vmul.f32 %v851, %v396
  %v856 = vmul.f32 %v852, %v396
  %v857 = vmul.f32 %v853, %v396
  %v858 = vmul.f32 %v854, %v396
  %859 = vrot.lane.b32.xlu0 %v787, 99
  %v860 = vpop.permute.xlu0 %859
  %861 = vrot.lane.b32.xlu0 %v788, 99
  %v862 = vpop.permute.xlu0 %861
  %863 = vrot.lane.b32.xlu0 %v789, 99
  %v864 = vpop.permute.xlu0 %863
  %865 = vrot.lane.b32.xlu0 %v790, 99
  %v866 = vpop.permute.xlu0 %865
  %871 = vrot.lane.b32.xlu0 %v787, 3
  %v872 = vpop.permute.xlu0 %871
  %873 = vrot.lane.b32.xlu0 %v788, 3
  %v874 = vpop.permute.xlu0 %873
  %875 = vrot.lane.b32.xlu0 %v789, 3
  %v876 = vpop.permute.xlu0 %875
  %877 = vrot.lane.b32.xlu0 %v790, 3
  %v878 = vpop.permute.xlu0 %877
  %v883 = vsel %vm412, %v860, %v872
  %v884 = vsel %vm412, %v862, %v874
  %v885 = vsel %vm412, %v864, %v876
  %v886 = vsel %vm412, %v866, %v878
  %v887 = vmul.f32 %v883, %v421
  %v888 = vmul.f32 %v884, %v421
  %v889 = vmul.f32 %v885, %v421
  %v890 = vmul.f32 %v886, %v421
  %891 = vrot.lane.b32.xlu0 %v787, 97
  %v892 = vpop.permute.xlu0 %891
  %893 = vrot.lane.b32.xlu0 %v788, 97
  %v894 = vpop.permute.xlu0 %893
  %895 = vrot.lane.b32.xlu0 %v789, 97
  %v896 = vpop.permute.xlu0 %895
  %897 = vrot.lane.b32.xlu0 %v790, 97
  %v898 = vpop.permute.xlu0 %897
  %903 = vrot.lane.b32.xlu0 %v787, 1
  %v904 = vpop.permute.xlu0 %903
  %905 = vrot.lane.b32.xlu0 %v788, 1
  %v906 = vpop.permute.xlu0 %905
  %907 = vrot.lane.b32.xlu0 %v789, 1
  %v908 = vpop.permute.xlu0 %907
  %909 = vrot.lane.b32.xlu0 %v790, 1
  %v910 = vpop.permute.xlu0 %909
  %v915 = vsel %vm437, %v892, %v904
  %v916 = vsel %vm437, %v894, %v906
  %v917 = vsel %vm437, %v896, %v908
  %v918 = vsel %vm437, %v898, %v910
  %v919 = vmul.f32 %v915, %v446
  %v920 = vmul.f32 %v916, %v446
  %v921 = vmul.f32 %v917, %v446
  %v922 = vmul.f32 %v918, %v446
  %923 = vrot.lane.b32.xlu0 %v787, 127
  %v924 = vpop.permute.xlu0 %923
  %925 = vrot.lane.b32.xlu0 %v788, 127
  %v926 = vpop.permute.xlu0 %925
  %927 = vrot.lane.b32.xlu0 %v789, 127
  %v928 = vpop.permute.xlu0 %927
  %929 = vrot.lane.b32.xlu0 %v790, 127
  %v930 = vpop.permute.xlu0 %929
  %935 = vrot.lane.b32.xlu0 %v787, 31
  %v936 = vpop.permute.xlu0 %935
  %937 = vrot.lane.b32.xlu0 %v788, 31
  %v938 = vpop.permute.xlu0 %937
  %939 = vrot.lane.b32.xlu0 %v789, 31
  %v940 = vpop.permute.xlu0 %939
  %941 = vrot.lane.b32.xlu0 %v790, 31
  %v942 = vpop.permute.xlu0 %941
  %v947 = vsel %vm462, %v924, %v936
  %v948 = vsel %vm462, %v926, %v938
  %v949 = vsel %vm462, %v928, %v940
  %v950 = vsel %vm462, %v930, %v942
  %v951 = vmul.f32 %v947, %v471
  %v952 = vmul.f32 %v948, %v471
  %v953 = vmul.f32 %v949, %v471
  %v954 = vmul.f32 %v950, %v471
  %955 = vrot.lane.b32.xlu0 %v787, 125
  %v956 = vpop.permute.xlu0 %955
  %957 = vrot.lane.b32.xlu0 %v788, 125
  %v958 = vpop.permute.xlu0 %957
  %959 = vrot.lane.b32.xlu0 %v789, 125
  %v960 = vpop.permute.xlu0 %959
  %961 = vrot.lane.b32.xlu0 %v790, 125
  %v962 = vpop.permute.xlu0 %961
  %967 = vrot.lane.b32.xlu0 %v787, 29
  %v968 = vpop.permute.xlu0 %967
  %969 = vrot.lane.b32.xlu0 %v788, 29
  %v970 = vpop.permute.xlu0 %969
  %971 = vrot.lane.b32.xlu0 %v789, 29
  %v972 = vpop.permute.xlu0 %971
  %973 = vrot.lane.b32.xlu0 %v790, 29
  %v974 = vpop.permute.xlu0 %973
  %v979 = vsel %vm487, %v956, %v968
  %v980 = vsel %vm487, %v958, %v970
  %v981 = vsel %vm487, %v960, %v972
  %v982 = vsel %vm487, %v962, %v974
  %v983 = vmul.f32 %v979, %v496
  %v984 = vmul.f32 %v980, %v496
  %v985 = vmul.f32 %v981, %v496
  %v986 = vmul.f32 %v982, %v496
  %987 = vrot.lane.b32.xlu0 %v787, 124
  %v988 = vpop.permute.xlu0 %987
  %989 = vrot.lane.b32.xlu0 %v788, 124
  %v990 = vpop.permute.xlu0 %989
  %991 = vrot.lane.b32.xlu0 %v789, 124
  %v992 = vpop.permute.xlu0 %991
  %993 = vrot.lane.b32.xlu0 %v790, 124
  %v994 = vpop.permute.xlu0 %993
  %999 = vrot.lane.b32.xlu0 %v787, 28
  %v1000 = vpop.permute.xlu0 %999
  %1001 = vrot.lane.b32.xlu0 %v788, 28
  %v1002 = vpop.permute.xlu0 %1001
  %1003 = vrot.lane.b32.xlu0 %v789, 28
  %v1004 = vpop.permute.xlu0 %1003
  %1005 = vrot.lane.b32.xlu0 %v790, 28
  %v1006 = vpop.permute.xlu0 %1005
  %v1011 = vsel %vm512, %v988, %v1000
  %v1012 = vsel %vm512, %v990, %v1002
  %v1013 = vsel %vm512, %v992, %v1004
  %v1014 = vsel %vm512, %v994, %v1006
  %v1015 = vmul.f32 %v1011, %v521
  %v1016 = vmul.f32 %v1012, %v521
  %v1017 = vmul.f32 %v1013, %v521
  %v1018 = vmul.f32 %v1014, %v521
  %1019 = vrot.lane.b32.xlu0 %v787, 123
  %v1020 = vpop.permute.xlu0 %1019
  %1021 = vrot.lane.b32.xlu0 %v788, 123
  %v1022 = vpop.permute.xlu0 %1021
  %1023 = vrot.lane.b32.xlu0 %v789, 123
  %v1024 = vpop.permute.xlu0 %1023
  %1025 = vrot.lane.b32.xlu0 %v790, 123
  %v1026 = vpop.permute.xlu0 %1025
  %1031 = vrot.lane.b32.xlu0 %v787, 27
  %v1032 = vpop.permute.xlu0 %1031
  %1033 = vrot.lane.b32.xlu0 %v788, 27
  %v1034 = vpop.permute.xlu0 %1033
  %1035 = vrot.lane.b32.xlu0 %v789, 27
  %v1036 = vpop.permute.xlu0 %1035
  %1037 = vrot.lane.b32.xlu0 %v790, 27
  %v1038 = vpop.permute.xlu0 %1037
  %v1043 = vsel %vm537, %v1020, %v1032
  %v1044 = vsel %vm537, %v1022, %v1034
  %v1045 = vsel %vm537, %v1024, %v1036
  %v1046 = vsel %vm537, %v1026, %v1038
  %v1047 = vmul.f32 %v1043, %v546
  %v1048 = vmul.f32 %v1044, %v546
  %v1049 = vmul.f32 %v1045, %v546
  %v1050 = vmul.f32 %v1046, %v546
  %v1051 = vpack.c.bf16 %v824, %v823
  %v1052 = vpack.c.bf16 %v826, %v825
  %v1053 = vpack.c.bf16 %v856, %v855
  %v1054 = vpack.c.bf16 %v858, %v857
  %v1055 = vpack.c.bf16 %v888, %v887
  %v1056 = vpack.c.bf16 %v890, %v889
  %v1057 = vpack.c.bf16 %v920, %v919
  %v1058 = vpack.c.bf16 %v922, %v921
  %v1059 = vpack.c.bf16 %v788, %v787
  %v1060 = vpack.c.bf16 %v790, %v789
  %v1061 = vpack.c.bf16 %v952, %v951
  %v1062 = vpack.c.bf16 %v954, %v953
  %v1063 = vpack.c.bf16 %v984, %v983
  %v1064 = vpack.c.bf16 %v986, %v985
  %v1065 = vpack.c.bf16 %v1016, %v1015
  %v1066 = vpack.c.bf16 %v1018, %v1017
  %v1067 = vpack.c.bf16 %v1048, %v1047
  %v1068 = vpack.c.bf16 %v1050, %v1049
  %v1069 = vld [vmem:[%s10] sm:$0xff]
  %v1070 = vld [vmem:[%s10 + $0x8] sm:$0xf]
  %v1071 = vld [vmem:[%s10 + $0xc] sm:$0xff]
  %v1072 = vld [vmem:[%s10 + $0x14] sm:$0xf]
  %v1073 = vld [vmem:[%s10 + $0x18] sm:$0xff]
  %v1074 = vld [vmem:[%s10 + $0x20] sm:$0xf]
  %v1075 = vld [vmem:[%s11] sm:$0xff]
  %v1076 = vld [vmem:[%s11 + $0x8] sm:$0xff]
  %v1077 = vld [vmem:[%s11 + $0x10] sm:$0xff]
  %1079 = vset.pattern.permute.xlu0 0
  %1080 = vperm.xlu0 %1079, %v1075
  %v1081 = vpop.permute.xlu0 %1080
  %1084 = vset.pattern.permute.xlu0 0
  %1085 = vperm.xlu0 %1084, %v1076
  %v1086 = vpop.permute.xlu0 %1085
  %1089 = vset.pattern.permute.xlu0 0
  %1090 = vperm.xlu0 %1089, %v1077
  %v1091 = vpop.permute.xlu0 %1090
  %v1099 = vunpack.c.l.b16 %v1069
  %v1100 = vunpack.c.h.b16 %v1069
  %v1101 = vunpack.c.l.b16 %v1070
  %v1102 = vunpack.c.l.b16 %v1071
  %v1103 = vunpack.c.h.b16 %v1071
  %v1104 = vunpack.c.l.b16 %v1072
  %v1105 = vunpack.c.l.b16 %v1073
  %v1106 = vunpack.c.h.b16 %v1073
  %v1107 = vunpack.c.l.b16 %v1074
  %v1108 = vpack.c.b16 %v1102, %v1099
  %v1109 = vpack.c.b16 %v1103, %v1100
  %v1110 = vpack.c.b16 %v1104, %v1101
  %v1111 = vpack.c.b16 %v1105, %v1105
  %v1112 = vpack.c.b16 %v1106, %v1106
  %v1113 = vpack.c.b16 %v1107, %v1107
  %v1119 = vsel %vm165, %v1110, 0
  %v1122 = vsel %vm165, %v1113, 0
  %1124 = vmatprep.subr.bf16.mxu0 0
  %1125 = vmatpush1.bf16.msra.mxu0 %v1051
  %1126 = vmatprep.subr.bf16.mxu0 0
  %1127 = vmatpush1.bf16.msra.mxu0 %v1052
  %1128 = vmatprep.subr.bf16.mxu0 0
  %1129 = vmatpush1.bf16.msra.mxu0 %v1053
  %1130 = vmatprep.subr.bf16.mxu0 0
  %1131 = vmatpush1.bf16.msra.mxu0 %v1054
  %1132 = vmatprep.subr.bf16.mxu0 0
  %1133 = vmatpush1.bf16.msra.mxu0 %v1055
  %1134 = vmatprep.subr.bf16.mxu0 0
  %1135 = vmatpush1.bf16.msra.mxu0 %v1056
  %1136 = vmatprep.subr.bf16.mxu0 0
  %1137 = vmatpush1.bf16.msra.mxu0 %v1057
  %1138 = vmatprep.subr.bf16.mxu0 0
  %1139 = vmatpush1.bf16.msra.mxu0 %v1058
  %1140 = vmatprep.subr.bf16.mxu0 0
  %1141 = vmatpush1.bf16.msra.mxu0 %v1059
  %1142 = vmatprep.subr.bf16.mxu0 0
  %1143 = vmatpush1.bf16.msra.mxu0 %v1060
  %1144 = vmatprep.subr.bf16.mxu0 0
  %1145 = vmatpush1.bf16.msra.mxu0 %v1061
  %1146 = vmatprep.subr.bf16.mxu0 0
  %1147 = vmatpush1.bf16.msra.mxu0 %v1062
  %1148 = vmatprep.subr.bf16.mxu0 0
  %1149 = vmatpush1.bf16.msra.mxu0 %v1063
  %1150 = vmatprep.subr.bf16.mxu0 0
  %1151 = vmatpush1.bf16.msra.mxu0 %v1064
  %1152 = vmatprep.subr.bf16.mxu0 0
  %1153 = vmatpush1.bf16.msra.mxu0 %v1065
  %1154 = vmatprep.subr.bf16.mxu0 0
  %1155 = vmatpush1.bf16.msra.mxu0 %v1066
  %1156 = vmatprep.mubr.bf16.mxu0 %v1109
  %1157 = vmatmul.mubr.bf16.gmra.mrb[0].mxu0 %v1108
  %v1158 = vpop.f32.mrb[0].mxu0
  %v1159 = vadd.f32 %v1081, %v1158
  %v1160 = vpop.f32.mrb[0].mxu0
  %v1161 = vpop.f32.mrb[0].mxu0
  %v1162 = vadd.f32 %v1086, %v1161
  %v1163 = vpop.f32.mrb[0].mxu0
  %1164 = vmatprep.mubr.bf16.mxu0 %v1112
  %1165 = vmatmul.mubr.bf16.gmra.mrb[0].mxu0 %v1111
  %v1166 = vpop.f32.mrb[0].mxu0
  %v1167 = vadd.f32 %v1091, %v1166
  %v1168 = vpop.f32.mrb[0].mxu0
  %v1169 = vpop.f32.mrb[0].mxu0
  %v1170 = vpop.f32.mrb[0].mxu0
  %1171 = vdwg.mxu0
  %1172 = vmatprep.subr.bf16.mxu0 0
  %1173 = vmatpush1.bf16.msra.mxu0 %v1067
  %1174 = vmatprep.subr.bf16.mxu0 0
  %1175 = vmatpush1.bf16.msra.mxu0 %v1068
  %1176 = vmatprep.subr.bf16.mxu0 0
  %1177 = vmatpush1.bf16.msra.mxu0 0
  %1178 = vmatprep.subr.bf16.mxu0 0
  %1179 = vmatpush1.bf16.msra.mxu0 0
  %1180 = vmatprep.subr.bf16.mxu0 0
  %1181 = vmatpush1.bf16.msra.mxu0 0
  %1182 = vmatprep.subr.bf16.mxu0 0
  %1183 = vmatpush1.bf16.msra.mxu0 0
  %1184 = vmatprep.subr.bf16.mxu0 0
  %1185 = vmatpush1.bf16.msra.mxu0 0
  %1186 = vmatprep.subr.bf16.mxu0 0
  %1187 = vmatpush1.bf16.msra.mxu0 0
  %1188 = vmatprep.subr.bf16.mxu0 0
  %1189 = vmatpush1.bf16.msra.mxu0 0
  %1190 = vmatprep.subr.bf16.mxu0 0
  %1191 = vmatpush1.bf16.msra.mxu0 0
  %1192 = vmatprep.subr.bf16.mxu0 0
  %1193 = vmatpush1.bf16.msra.mxu0 0
  %1194 = vmatprep.subr.bf16.mxu0 0
  %1195 = vmatpush1.bf16.msra.mxu0 0
  %1196 = vmatprep.subr.bf16.mxu0 0
  %1197 = vmatpush1.bf16.msra.mxu0 0
  %1198 = vmatprep.subr.bf16.mxu0 0
  %1199 = vmatpush1.bf16.msra.mxu0 0
  %1200 = vmatprep.subr.bf16.mxu0 0
  %1201 = vmatpush1.bf16.msra.mxu0 0
  %1202 = vmatprep.subr.bf16.mxu0 0
  %1203 = vmatpush1.bf16.msra.mxu0 0
  %1204 = vmatprep.mubr.bf16.mxu0 0
  %1205 = vmatmul.mubr.bf16.gmra.mrb[0].mxu0 %v1119
  %v1206 = vpop.f32.mrb[0].mxu0
  %v1207 = vadd.f32 %v1159, %v1206
  %v1208 = vpop.f32.mrb[0].mxu0
  %v1209 = vpop.f32.mrb[0].mxu0
  %v1210 = vadd.f32 %v1162, %v1209
  %v1211 = vpop.f32.mrb[0].mxu0
  %1212 = vmatprep.mubr.bf16.mxu0 0
  %1213 = vmatmul.mubr.bf16.gmra.mrb[0].mxu0 %v1122
  %v1214 = vpop.f32.mrb[0].mxu0
  %v1215 = vadd.f32 %v1167, %v1214
  %v1216 = vpop.f32.mrb[0].mxu0
  %v1217 = vpop.f32.mrb[0].mxu0
  %v1218 = vpop.f32.mrb[0].mxu0
  %1219 = vdwg.mxu0
  %v1220 = vadd.f32 %v1210, 2.0
  %v1221 = vadd.f32 %v1215, 2.0
  %v1222 = vand.u32 2147483647, %v1220
  %v1223 = vand.u32 2147483647, %v1221
  %v1224 = vsub.f32 0.0, %v1222
  %v1225 = vsub.f32 0.0, %v1223
  %v1226 = vmul.f32 %v1224, 1.442695
  %v1227 = vpow.pop %v1226
  %v1228 = vmul.f32 %v1225, 1.442695
  %v1229 = vpow.pop %v1228
  %v1230 = vadd.f32 %v1227, 1.0
  %v1231 = vadd.f32 %v1229, 1.0
  %v1232 = vmin.f32 %v1220, 0.0
  %v1233 = vmin.f32 %v1221, 0.0
  %v1234 = vlog2.pop %v1230
  %v1235 = vmul.f32 %v1234, 0.6931472
  %v1236 = vlog2.pop %v1231
  %v1237 = vmul.f32 %v1236, 0.6931472
  %v1238 = vsub.f32 %v1232, %v1235
  %v1239 = vsub.f32 %v1233, %v1237
  %vm1240 = vcmp.lt.f32.partialorder %v1220, 0.0
  %vm1241 = vcmp.lt.f32.partialorder %v1221, 0.0
  %v1242 = vsel %vm1240, %v1227, 1.0
  %v1243 = vsel %vm1241, %v1229, 1.0
  %v1244 = vrcp.pop %v1230
  %v1245 = vrcp.pop %v1231
  %v1246 = vmul.f32 %v1242, %v1244
  %v1247 = vmul.f32 %v1243, %v1245
  %v1250 = vrot.slane %v1207, 4
  %v1251 = vrot.slane %v1210, 4
  %v1252 = vsel %vm552, %v1250, %v1251
  %v1255 = vadd.f32 %v347, %v1250
  %v1256 = vadd.f32 %v348, %v1252
  %v1257 = vmul.f32 %v1255, %v1246
  %v1258 = vmul.f32 %v1256, %v1247
  %v1261 = vrot.slane %v1238, 4
  %v1262 = vrot.slane %v1239, 4
  %v1263 = vsel %vm552, %v1261, %v1262
  %v1266 = vsel %vm165, %v1263, 0.0
  %vm1267 = vcmask 257024
  %v1268 = vsel %vm1267, %v1262, 0.0
  %v1269 = vadd.f32 %v1266, %v1268
  %v1270 = vrot.slane %v1269, 4
  %v1271 = vadd.f32 %v1269, %v1270
  %v1272 = vrot.slane %v1271, 2
  %v1273 = vadd.f32 %v1271, %v1272
  %v1274 = vrot.slane %v1273, 1
  %v1275 = vadd.f32 %v1273, %v1274
  %v1276 = vadd.f32 %v1275, 0.0
  %v1277 = vsel %vm552, %v347, %v1257
  %s1278 = scalar_lea.vmem %s2, 24
  %v1279 = vld [vmem:[%s1278] sm:$0xff]
  %v1280 = vld [vmem:[%s1278 + $0x8] sm:$0xff]
  %v1281 = vld [vmem:[%s1278 + $0x10] sm:$0xff]
  %s1282 = scalar_lea.vmem %s3, 24
  %v1283 = vld [vmem:[%s1282] sm:$0xff]
  %v1284 = vld [vmem:[%s1282 + $0x8] sm:$0xff]
  %v1285 = vld [vmem:[%s1282 + $0x10] sm:$0xff]
  %1287 = vset.pattern.permute.xlu0 0
  %1288 = vperm.xlu0 %1287, %v1283
  %v1289 = vpop.permute.xlu0 %1288
  %1292 = vset.pattern.permute.xlu0 0
  %1293 = vperm.xlu0 %1292, %v1284
  %v1294 = vpop.permute.xlu0 %1293
  %1297 = vset.pattern.permute.xlu0 0
  %1298 = vperm.xlu0 %1297, %v1285
  %v1299 = vpop.permute.xlu0 %1298
  %v1302 = vsel %vm71, %v1279, 0
  %v1305 = vsel %vm71, %v1280, 0
  %v1308 = vsel %vm71, %v1281, 0
  %1310 = vmatprep.subr.mxu0 0.0
  %1311 = vmatpush1.msra.mxu0 %v346
  %1312 = vmatprep.subr.mxu0 0.0
  %1313 = vmatpush1.msra.mxu0 %v1277
  %1314 = vmatprep.subr.mxu0 0.0
  %1315 = vmatpush1.msra.mxu0 %v1258
  %1316 = vmatprep.subr.mxu0 0.0
  %1317 = vmatpush1.msra.mxu0 0.0
  %1318 = vmatprep.subr.mxu0 0.0
  %1319 = vmatpush1.msra.mxu0 0.0
  %1320 = vmatprep.subr.mxu0 0.0
  %1321 = vmatpush1.msra.mxu0 0.0
  %1322 = vmatprep.subr.mxu0 0.0
  %1323 = vmatpush1.msra.mxu0 0.0
  %1324 = vmatprep.subr.mxu0 0.0
  %1325 = vmatpush1.msra.mxu0 0.0
  %1326 = vmatprep.subr.mxu0 0.0
  %1327 = vmatpush1.msra.mxu0 0.0
  %1328 = vmatprep.subr.mxu0 0.0
  %1329 = vmatpush1.msra.mxu0 0.0
  %1330 = vmatprep.subr.mxu0 0.0
  %1331 = vmatpush1.msra.mxu0 0.0
  %1332 = vmatprep.subr.mxu0 0.0
  %1333 = vmatpush1.msra.mxu0 0.0
  %1334 = vmatprep.subr.mxu0 0.0
  %1335 = vmatpush1.msra.mxu0 0.0
  %1336 = vmatprep.subr.mxu0 0.0
  %1337 = vmatpush1.msra.mxu0 0.0
  %1338 = vmatprep.subr.mxu0 0.0
  %1339 = vmatpush1.msra.mxu0 0.0
  %1340 = vmatprep.subr.mxu0 0.0
  %1341 = vmatpush1.msra.mxu0 0.0
  %1342 = vmatprep.subr.mxu0 0.0
  %1343 = vmatpush1.msra.mxu0 0.0
  %1344 = vmatprep.subr.mxu0 0.0
  %1345 = vmatpush1.msra.mxu0 0.0
  %1346 = vmatprep.subr.mxu0 0.0
  %1347 = vmatpush1.msra.mxu0 0.0
  %1348 = vmatprep.subr.mxu0 0.0
  %1349 = vmatpush1.msra.mxu0 0.0
  %1350 = vmatprep.subr.mxu0 0.0
  %1351 = vmatpush1.msra.mxu0 0.0
  %1352 = vmatprep.subr.mxu0 0.0
  %1353 = vmatpush1.msra.mxu0 0.0
  %1354 = vmatprep.subr.mxu0 0.0
  %1355 = vmatpush1.msra.mxu0 0.0
  %1356 = vmatprep.subr.mxu0 0.0
  %1357 = vmatpush1.msra.mxu0 0.0
  %1358 = vmatprep.subr.mxu0 0.0
  %1359 = vmatpush1.msra.mxu0 0.0
  %1360 = vmatprep.subr.mxu0 0.0
  %1361 = vmatpush1.msra.mxu0 0.0
  %1362 = vmatprep.subr.mxu0 0.0
  %1363 = vmatpush1.msra.mxu0 0.0
  %1364 = vmatprep.subr.mxu0 0.0
  %1365 = vmatpush1.msra.mxu0 0.0
  %1366 = vmatprep.subr.mxu0 0.0
  %1367 = vmatpush1.msra.mxu0 0.0
  %1368 = vmatprep.subr.mxu0 0.0
  %1369 = vmatpush1.msra.mxu0 0.0
  %1370 = vmatprep.subr.mxu0 0.0
  %1371 = vmatpush1.msra.mxu0 0.0
  %1372 = vmatprep.subr.mxu0 0.0
  %1373 = vmatpush1.msra.mxu0 0.0
  %1374 = vmatprep.mubr.f32.mxu0 0.0
  %1375 = vmatmul.mubr.f32.gmra.mrb[0].mxu0 %v1302
  %v1376 = vpop.f32.mrb[0].mxu0
  %v1377 = vadd.f32 %v1289, %v1376
  %v1378 = vpop.f32.mrb[0].mxu0
  %1379 = vmatprep.mubr.f32.mxu0 0.0
  %1380 = vmatmul.mubr.f32.gmra.mrb[0].mxu0 %v1305
  %v1381 = vpop.f32.mrb[0].mxu0
  %v1382 = vadd.f32 %v1294, %v1381
  %v1383 = vpop.f32.mrb[0].mxu0
  %1384 = vmatprep.mubr.f32.mxu0 0.0
  %1385 = vmatmul.mubr.f32.gmra.mrb[0].mxu0 %v1308
  %v1386 = vpop.f32.mrb[0].mxu0
  %v1387 = vadd.f32 %v1299, %v1386
  %v1388 = vpop.f32.mrb[0].mxu0
  %1389 = vdwg.mxu0
  %s1390 = scalar_lea.vmem %s4, 32
  %v1391 = vld [vmem:[%s1390] sm:$0xff]
  %v1392 = vld [vmem:[%s1390 + $0x8] sm:$0xff]
  %v1393 = vld [vmem:[%s1390 + $0x10] sm:$0xff]
  %v1394 = vld [vmem:[%s1390 + $0x18] sm:$0xff]
  %v1396 = vsel %vm165, %v1377, 0
  %v1399 = vsel %vm165, %v1382, 0
  %v1402 = vsel %vm165, %v1387, 0
  %1404 = vmatprep.subr.mxu0 0.0
  %1405 = vmatpush1.msra.mxu0 %v1391
  %1406 = vmatprep.subr.mxu0 0.0
  %1407 = vmatpush1.msra.mxu0 %v1392
  %1408 = vmatprep.subr.mxu0 0.0
  %1409 = vmatpush1.msra.mxu0 %v1393
  %1410 = vmatprep.subr.mxu0 0.0
  %1411 = vmatpush1.msra.mxu0 %v1394
  %1412 = vmatprep.subr.mxu0 0.0
  %1413 = vmatpush1.msra.mxu0 0.0
  %1414 = vmatprep.subr.mxu0 0.0
  %1415 = vmatpush1.msra.mxu0 0.0
  %1416 = vmatprep.subr.mxu0 0.0
  %1417 = vmatpush1.msra.mxu0 0.0
  %1418 = vmatprep.subr.mxu0 0.0
  %1419 = vmatpush1.msra.mxu0 0.0
  %1420 = vmatprep.subr.mxu0 0.0
  %1421 = vmatpush1.msra.mxu0 0.0
  %1422 = vmatprep.subr.mxu0 0.0
  %1423 = vmatpush1.msra.mxu0 0.0
  %1424 = vmatprep.subr.mxu0 0.0
  %1425 = vmatpush1.msra.mxu0 0.0
  %1426 = vmatprep.subr.mxu0 0.0
  %1427 = vmatpush1.msra.mxu0 0.0
  %1428 = vmatprep.subr.mxu0 0.0
  %1429 = vmatpush1.msra.mxu0 0.0
  %1430 = vmatprep.subr.mxu0 0.0
  %1431 = vmatpush1.msra.mxu0 0.0
  %1432 = vmatprep.subr.mxu0 0.0
  %1433 = vmatpush1.msra.mxu0 0.0
  %1434 = vmatprep.subr.mxu0 0.0
  %1435 = vmatpush1.msra.mxu0 0.0
  %1436 = vmatprep.subr.mxu0 0.0
  %1437 = vmatpush1.msra.mxu0 0.0
  %1438 = vmatprep.subr.mxu0 0.0
  %1439 = vmatpush1.msra.mxu0 0.0
  %1440 = vmatprep.subr.mxu0 0.0
  %1441 = vmatpush1.msra.mxu0 0.0
  %1442 = vmatprep.subr.mxu0 0.0
  %1443 = vmatpush1.msra.mxu0 0.0
  %1444 = vmatprep.subr.mxu0 0.0
  %1445 = vmatpush1.msra.mxu0 0.0
  %1446 = vmatprep.subr.mxu0 0.0
  %1447 = vmatpush1.msra.mxu0 0.0
  %1448 = vmatprep.subr.mxu0 0.0
  %1449 = vmatpush1.msra.mxu0 0.0
  %1450 = vmatprep.subr.mxu0 0.0
  %1451 = vmatpush1.msra.mxu0 0.0
  %1452 = vmatprep.subr.mxu0 0.0
  %1453 = vmatpush1.msra.mxu0 0.0
  %1454 = vmatprep.subr.mxu0 0.0
  %1455 = vmatpush1.msra.mxu0 0.0
  %1456 = vmatprep.subr.mxu0 0.0
  %1457 = vmatpush1.msra.mxu0 0.0
  %1458 = vmatprep.subr.mxu0 0.0
  %1459 = vmatpush1.msra.mxu0 0.0
  %1460 = vmatprep.subr.mxu0 0.0
  %1461 = vmatpush1.msra.mxu0 0.0
  %1462 = vmatprep.subr.mxu0 0.0
  %1463 = vmatpush1.msra.mxu0 0.0
  %1464 = vmatprep.subr.mxu0 0.0
  %1465 = vmatpush1.msra.mxu0 0.0
  %1466 = vmatprep.subr.mxu0 0.0
  %1467 = vmatpush1.msra.mxu0 0.0
  %1468 = vmatprep.mubr.f32.mxu0 0.0
  %1469 = vmatmul.mubr.f32.gmra.mrb[0].mxu0 %v1396
  %v1470 = vpop.f32.mrb[0].mxu0
  %v1471 = vadd.f32 0.0, %v1470
  %v1472 = vpop.f32.mrb[0].mxu0
  %1473 = vmatprep.mubr.f32.mxu0 0.0
  %1474 = vmatmul.mubr.f32.gmra.mrb[0].mxu0 %v1399
  %v1475 = vpop.f32.mrb[0].mxu0
  %v1476 = vadd.f32 0.0, %v1475
  %v1477 = vpop.f32.mrb[0].mxu0
  %1478 = vmatprep.mubr.f32.mxu0 0.0
  %1479 = vmatmul.mubr.f32.gmra.mrb[0].mxu0 %v1402
  %v1480 = vpop.f32.mrb[0].mxu0
  %v1481 = vadd.f32 0.0, %v1480
  %v1482 = vpop.f32.mrb[0].mxu0
  %1483 = vdwg.mxu0
  %s1484 = scalar_lea.vmem %s5, 8
  %v1485 = vld [vmem:[%s1484] sm:$0xff]
  %v1487 = vsel %vm256, %v1471, 0
  %v1490 = vsel %vm256, %v1476, 0
  %v1493 = vsel %vm256, %v1481, 0
  %1495 = vmatprep.subr.mxu0 0.0
  %1496 = vmatpush1.msra.mxu0 %v1485
  %1497 = vmatprep.subr.mxu0 0.0
  %1498 = vmatpush1.msra.mxu0 0.0
  %1499 = vmatprep.subr.mxu0 0.0
  %1500 = vmatpush1.msra.mxu0 0.0
  %1501 = vmatprep.subr.mxu0 0.0
  %1502 = vmatpush1.msra.mxu0 0.0
  %1503 = vmatprep.subr.mxu0 0.0
  %1504 = vmatpush1.msra.mxu0 0.0
  %1505 = vmatprep.subr.mxu0 0.0
  %1506 = vmatpush1.msra.mxu0 0.0
  %1507 = vmatprep.subr.mxu0 0.0
  %1508 = vmatpush1.msra.mxu0 0.0
  %1509 = vmatprep.subr.mxu0 0.0
  %1510 = vmatpush1.msra.mxu0 0.0
  %1511 = vmatprep.subr.mxu0 0.0
  %1512 = vmatpush1.msra.mxu0 0.0
  %1513 = vmatprep.subr.mxu0 0.0
  %1514 = vmatpush1.msra.mxu0 0.0
  %1515 = vmatprep.subr.mxu0 0.0
  %1516 = vmatpush1.msra.mxu0 0.0
  %1517 = vmatprep.subr.mxu0 0.0
  %1518 = vmatpush1.msra.mxu0 0.0
  %1519 = vmatprep.subr.mxu0 0.0
  %1520 = vmatpush1.msra.mxu0 0.0
  %1521 = vmatprep.subr.mxu0 0.0
  %1522 = vmatpush1.msra.mxu0 0.0
  %1523 = vmatprep.subr.mxu0 0.0
  %1524 = vmatpush1.msra.mxu0 0.0
  %1525 = vmatprep.subr.mxu0 0.0
  %1526 = vmatpush1.msra.mxu0 0.0
  %1527 = vmatprep.subr.mxu0 0.0
  %1528 = vmatpush1.msra.mxu0 0.0
  %1529 = vmatprep.subr.mxu0 0.0
  %1530 = vmatpush1.msra.mxu0 0.0
  %1531 = vmatprep.subr.mxu0 0.0
  %1532 = vmatpush1.msra.mxu0 0.0
  %1533 = vmatprep.subr.mxu0 0.0
  %1534 = vmatpush1.msra.mxu0 0.0
  %1535 = vmatprep.subr.mxu0 0.0
  %1536 = vmatpush1.msra.mxu0 0.0
  %1537 = vmatprep.subr.mxu0 0.0
  %1538 = vmatpush1.msra.mxu0 0.0
  %1539 = vmatprep.subr.mxu0 0.0
  %1540 = vmatpush1.msra.mxu0 0.0
  %1541 = vmatprep.subr.mxu0 0.0
  %1542 = vmatpush1.msra.mxu0 0.0
  %1543 = vmatprep.subr.mxu0 0.0
  %1544 = vmatpush1.msra.mxu0 0.0
  %1545 = vmatprep.subr.mxu0 0.0
  %1546 = vmatpush1.msra.mxu0 0.0
  %1547 = vmatprep.subr.mxu0 0.0
  %1548 = vmatpush1.msra.mxu0 0.0
  %1549 = vmatprep.subr.mxu0 0.0
  %1550 = vmatpush1.msra.mxu0 0.0
  %1551 = vmatprep.subr.mxu0 0.0
  %1552 = vmatpush1.msra.mxu0 0.0
  %1553 = vmatprep.subr.mxu0 0.0
  %1554 = vmatpush1.msra.mxu0 0.0
  %1555 = vmatprep.subr.mxu0 0.0
  %1556 = vmatpush1.msra.mxu0 0.0
  %1557 = vmatprep.subr.mxu0 0.0
  %1558 = vmatpush1.msra.mxu0 0.0
  %1559 = vmatprep.mubr.f32.mxu0 0.0
  %1560 = vmatmul.mubr.f32.gmra.mrb[0].mxu0 %v1487
  %v1561 = vpop.f32.mrb[0].mxu0
  %v1562 = vadd.f32 0.0, %v1561
  %v1563 = vpop.f32.mrb[0].mxu0
  %1564 = vmatprep.mubr.f32.mxu0 0.0
  %1565 = vmatmul.mubr.f32.gmra.mrb[0].mxu0 %v1490
  %v1566 = vpop.f32.mrb[0].mxu0
  %v1567 = vadd.f32 0.0, %v1566
  %v1568 = vpop.f32.mrb[0].mxu0
  %1569 = vmatprep.mubr.f32.mxu0 0.0
  %1570 = vmatmul.mubr.f32.gmra.mrb[0].mxu0 %v1493
  %v1571 = vpop.f32.mrb[0].mxu0
  %v1572 = vadd.f32 0.0, %v1571
  %v1573 = vpop.f32.mrb[0].mxu0
  %1574 = vdwg.mxu0
  %v1575 = vadd.f32 %v1377, %v1562
  %v1576 = vadd.f32 %v1382, %v1567
  %v1577 = vadd.f32 %v1387, %v1572
  %1580 = vrot.lane.b32.xlu0 %v1575, 101
  %v1581 = vpop.permute.xlu0 %1580
  %1582 = vrot.lane.b32.xlu0 %v1576, 101
  %v1583 = vpop.permute.xlu0 %1582
  %1586 = vrot.lane.b32.xlu0 %v1575, 5
  %v1587 = vpop.permute.xlu0 %1586
  %1588 = vrot.lane.b32.xlu0 %v1576, 5
  %v1589 = vpop.permute.xlu0 %1588
  %v1592 = vsel %vm363, %v1581, %v1587
  %v1593 = vsel %vm363, %v1583, %v1589
  %v1594 = vmul.f32 %v1592, %v371
  %v1595 = vmul.f32 %v1593, %v371
  %1596 = vrot.lane.b32.xlu0 %v1575, 100
  %v1597 = vpop.permute.xlu0 %1596
  %1598 = vrot.lane.b32.xlu0 %v1576, 100
  %v1599 = vpop.permute.xlu0 %1598
  %1602 = vrot.lane.b32.xlu0 %v1575, 4
  %v1603 = vpop.permute.xlu0 %1602
  %1604 = vrot.lane.b32.xlu0 %v1576, 4
  %v1605 = vpop.permute.xlu0 %1604
  %v1608 = vsel %vm387, %v1597, %v1603
  %v1609 = vsel %vm387, %v1599, %v1605
  %v1610 = vmul.f32 %v1608, %v396
  %v1611 = vmul.f32 %v1609, %v396
  %1612 = vrot.lane.b32.xlu0 %v1575, 99
  %v1613 = vpop.permute.xlu0 %1612
  %1614 = vrot.lane.b32.xlu0 %v1576, 99
  %v1615 = vpop.permute.xlu0 %1614
  %1618 = vrot.lane.b32.xlu0 %v1575, 3
  %v1619 = vpop.permute.xlu0 %1618
  %1620 = vrot.lane.b32.xlu0 %v1576, 3
  %v1621 = vpop.permute.xlu0 %1620
  %v1624 = vsel %vm412, %v1613, %v1619
  %v1625 = vsel %vm412, %v1615, %v1621
  %v1626 = vmul.f32 %v1624, %v421
  %v1627 = vmul.f32 %v1625, %v421
  %1628 = vrot.lane.b32.xlu0 %v1575, 97
  %v1629 = vpop.permute.xlu0 %1628
  %1630 = vrot.lane.b32.xlu0 %v1576, 97
  %v1631 = vpop.permute.xlu0 %1630
  %1634 = vrot.lane.b32.xlu0 %v1575, 1
  %v1635 = vpop.permute.xlu0 %1634
  %1636 = vrot.lane.b32.xlu0 %v1576, 1
  %v1637 = vpop.permute.xlu0 %1636
  %v1640 = vsel %vm437, %v1629, %v1635
  %v1641 = vsel %vm437, %v1631, %v1637
  %v1642 = vmul.f32 %v1640, %v446
  %v1643 = vmul.f32 %v1641, %v446
  %1644 = vrot.lane.b32.xlu0 %v1575, 127
  %v1645 = vpop.permute.xlu0 %1644
  %1646 = vrot.lane.b32.xlu0 %v1576, 127
  %v1647 = vpop.permute.xlu0 %1646
  %1650 = vrot.lane.b32.xlu0 %v1575, 31
  %v1651 = vpop.permute.xlu0 %1650
  %1652 = vrot.lane.b32.xlu0 %v1576, 31
  %v1653 = vpop.permute.xlu0 %1652
  %v1656 = vsel %vm462, %v1645, %v1651
  %v1657 = vsel %vm462, %v1647, %v1653
  %v1658 = vmul.f32 %v1656, %v471
  %v1659 = vmul.f32 %v1657, %v471
  %1660 = vrot.lane.b32.xlu0 %v1575, 125
  %v1661 = vpop.permute.xlu0 %1660
  %1662 = vrot.lane.b32.xlu0 %v1576, 125
  %v1663 = vpop.permute.xlu0 %1662
  %1666 = vrot.lane.b32.xlu0 %v1575, 29
  %v1667 = vpop.permute.xlu0 %1666
  %1668 = vrot.lane.b32.xlu0 %v1576, 29
  %v1669 = vpop.permute.xlu0 %1668
  %v1672 = vsel %vm487, %v1661, %v1667
  %v1673 = vsel %vm487, %v1663, %v1669
  %v1674 = vmul.f32 %v1672, %v496
  %v1675 = vmul.f32 %v1673, %v496
  %1676 = vrot.lane.b32.xlu0 %v1575, 124
  %v1677 = vpop.permute.xlu0 %1676
  %1678 = vrot.lane.b32.xlu0 %v1576, 124
  %v1679 = vpop.permute.xlu0 %1678
  %1682 = vrot.lane.b32.xlu0 %v1575, 28
  %v1683 = vpop.permute.xlu0 %1682
  %1684 = vrot.lane.b32.xlu0 %v1576, 28
  %v1685 = vpop.permute.xlu0 %1684
  %v1688 = vsel %vm512, %v1677, %v1683
  %v1689 = vsel %vm512, %v1679, %v1685
  %v1690 = vmul.f32 %v1688, %v521
  %v1691 = vmul.f32 %v1689, %v521
  %1692 = vrot.lane.b32.xlu0 %v1575, 123
  %v1693 = vpop.permute.xlu0 %1692
  %1694 = vrot.lane.b32.xlu0 %v1576, 123
  %v1695 = vpop.permute.xlu0 %1694
  %1698 = vrot.lane.b32.xlu0 %v1575, 27
  %v1699 = vpop.permute.xlu0 %1698
  %1700 = vrot.lane.b32.xlu0 %v1576, 27
  %v1701 = vpop.permute.xlu0 %1700
  %v1704 = vsel %vm537, %v1693, %v1699
  %v1705 = vsel %vm537, %v1695, %v1701
  %v1706 = vmul.f32 %v1704, %v546
  %v1707 = vmul.f32 %v1705, %v546
  %v1710 = vrot.slane %v1610, 4
  %v1711 = vrot.slane %v1611, 4
  %v1712 = vsel %vm552, %v1710, %v1711
  %v1717 = vrot.slane %v1642, 4
  %v1718 = vrot.slane %v1643, 4
  %v1719 = vsel %vm552, %v1717, %v1718
  %v1724 = vrot.slane %v1658, 4
  %v1725 = vrot.slane %v1659, 4
  %v1726 = vsel %vm552, %v1724, %v1725
  %v1731 = vrot.slane %v1690, 4
  %v1732 = vrot.slane %v1691, 4
  %v1733 = vsel %vm552, %v1731, %v1732
  %v1736 = vsel %vm552, %v1595, %v1710
  %v1737 = vsel %vm552, %v1627, %v1717
  %v1738 = vsel %vm552, %v1576, %v1724
  %v1739 = vsel %vm552, %v1675, %v1731
  %v1740 = vpack.c.bf16 %v1736, %v1594
  %v1741 = vpack.c.bf16 %v1626, %v1712
  %v1742 = vpack.c.bf16 %v1719, %v1737
  %v1743 = vpack.c.bf16 %v1738, %v1575
  %v1744 = vpack.c.bf16 %v1674, %v1726
  %v1745 = vpack.c.bf16 %v1733, %v1739
  %v1746 = vpack.c.bf16 %v1707, %v1706
  %s1747 = scalar_lea.vmem %s6, 16
  %v1748 = vld [vmem:[%s1747] sm:$0xf]
  %v1749 = vld [vmem:[%s1747 + $0x4] sm:$0xf]
  %v1750 = vld [vmem:[%s1747 + $0x8] sm:$0xf]
  %v1751 = vld [vmem:[%s1747 + $0xc] sm:$0xf]
  %s1752 = scalar_lea.vmem %s7, 32
  %v1753 = vld [vmem:[%s1752] sm:$0xff]
  %v1754 = vld [vmem:[%s1752 + $0x8] sm:$0xff]
  %v1755 = vld [vmem:[%s1752 + $0x10] sm:$0xff]
  %v1756 = vld [vmem:[%s1752 + $0x18] sm:$0xff]
  %1758 = vset.pattern.permute.xlu0 0
  %1759 = vperm.xlu0 %1758, %v1753
  %v1760 = vpop.permute.xlu0 %1759
  %1763 = vset.pattern.permute.xlu0 0
  %1764 = vperm.xlu0 %1763, %v1754
  %v1765 = vpop.permute.xlu0 %1764
  %1768 = vset.pattern.permute.xlu0 0
  %1769 = vperm.xlu0 %1768, %v1755
  %v1770 = vpop.permute.xlu0 %1769
  %1773 = vset.pattern.permute.xlu0 0
  %1774 = vperm.xlu0 %1773, %v1756
  %v1775 = vpop.permute.xlu0 %1774
  %v1781 = vunpack.c.l.b16 %v1748
  %v1782 = vunpack.c.l.b16 %v1749
  %v1783 = vunpack.c.l.b16 %v1750
  %v1784 = vunpack.c.l.b16 %v1751
  %v1785 = vpack.c.b16 %v1782, %v1781
  %v1786 = vpack.c.b16 %v1784, %v1783
  %v1788 = vsel %vm628, %v1785, 0
  %v1791 = vsel %vm628, %v1786, 0
  %v1794 = vsel %vm635, %v1746, 0
  %1796 = vmatprep.subr.bf16.mxu0 0
  %1797 = vmatpush1.bf16.msra.mxu0 %v1740
  %1798 = vmatprep.subr.bf16.mxu0 0
  %1799 = vmatpush1.bf16.msra.mxu0 %v1741
  %1800 = vmatprep.subr.bf16.mxu0 0
  %1801 = vmatpush1.bf16.msra.mxu0 %v1742
  %1802 = vmatprep.subr.bf16.mxu0 0
  %1803 = vmatpush1.bf16.msra.mxu0 %v1743
  %1804 = vmatprep.subr.bf16.mxu0 0
  %1805 = vmatpush1.bf16.msra.mxu0 %v1744
  %1806 = vmatprep.subr.bf16.mxu0 0
  %1807 = vmatpush1.bf16.msra.mxu0 %v1745
  %1808 = vmatprep.subr.bf16.mxu0 0
  %1809 = vmatpush1.bf16.msra.mxu0 %v1794
  %1810 = vmatprep.subr.bf16.mxu0 0
  %1811 = vmatpush1.bf16.msra.mxu0 0
  %1812 = vmatprep.subr.bf16.mxu0 0
  %1813 = vmatpush1.bf16.msra.mxu0 0
  %1814 = vmatprep.subr.bf16.mxu0 0
  %1815 = vmatpush1.bf16.msra.mxu0 0
  %1816 = vmatprep.subr.bf16.mxu0 0
  %1817 = vmatpush1.bf16.msra.mxu0 0
  %1818 = vmatprep.subr.bf16.mxu0 0
  %1819 = vmatpush1.bf16.msra.mxu0 0
  %1820 = vmatprep.subr.bf16.mxu0 0
  %1821 = vmatpush1.bf16.msra.mxu0 0
  %1822 = vmatprep.subr.bf16.mxu0 0
  %1823 = vmatpush1.bf16.msra.mxu0 0
  %1824 = vmatprep.subr.bf16.mxu0 0
  %1825 = vmatpush1.bf16.msra.mxu0 0
  %1826 = vmatprep.subr.bf16.mxu0 0
  %1827 = vmatpush1.bf16.msra.mxu0 0
  %1828 = vmatprep.mubr.bf16.mxu0 0
  %1829 = vmatmul.mubr.bf16.gmra.mrb[0].mxu0 %v1788
  %v1830 = vpop.f32.mrb[0].mxu0
  %v1831 = vadd.f32 %v1760, %v1830
  %v1832 = vpop.f32.mrb[0].mxu0
  %v1833 = vpop.f32.mrb[0].mxu0
  %v1834 = vadd.f32 %v1765, %v1833
  %v1835 = vpop.f32.mrb[0].mxu0
  %1836 = vmatprep.mubr.bf16.mxu0 0
  %1837 = vmatmul.mubr.bf16.gmra.mrb[0].mxu0 %v1791
  %v1838 = vpop.f32.mrb[0].mxu0
  %v1839 = vadd.f32 %v1770, %v1838
  %v1840 = vpop.f32.mrb[0].mxu0
  %v1841 = vpop.f32.mrb[0].mxu0
  %v1842 = vadd.f32 %v1775, %v1841
  %v1843 = vpop.f32.mrb[0].mxu0
  %1844 = vdwg.mxu0
  %v1845 = vmax.f32 %v1831, 0.0
  %v1846 = vmax.f32 %v1834, 0.0
  %v1847 = vmax.f32 %v1839, 0.0
  %v1848 = vmax.f32 %v1842, 0.0
  %s1849 = scalar_lea.vmem %s8, 16
  %v1850 = vld [vmem:[%s1849] sm:$0xf]
  %v1851 = vld [vmem:[%s1849 + $0x4] sm:$0xf]
  %v1852 = vld [vmem:[%s1849 + $0x8] sm:$0xf]
  %v1853 = vld [vmem:[%s1849 + $0xc] sm:$0xf]
  %v1854 = vpack.c.bf16 %v1846, %v1845
  %v1855 = vpack.c.bf16 %v1848, %v1847
  %s1856 = scalar_lea.vmem %s9, 32
  %v1857 = vld [vmem:[%s1856] sm:$0xff]
  %v1858 = vld [vmem:[%s1856 + $0x8] sm:$0xff]
  %v1859 = vld [vmem:[%s1856 + $0x10] sm:$0xff]
  %v1860 = vld [vmem:[%s1856 + $0x18] sm:$0xff]
  %1862 = vset.pattern.permute.xlu0 0
  %1863 = vperm.xlu0 %1862, %v1857
  %v1864 = vpop.permute.xlu0 %1863
  %1867 = vset.pattern.permute.xlu0 0
  %1868 = vperm.xlu0 %1867, %v1858
  %v1869 = vpop.permute.xlu0 %1868
  %1872 = vset.pattern.permute.xlu0 0
  %1873 = vperm.xlu0 %1872, %v1859
  %v1874 = vpop.permute.xlu0 %1873
  %1877 = vset.pattern.permute.xlu0 0
  %1878 = vperm.xlu0 %1877, %v1860
  %v1879 = vpop.permute.xlu0 %1878
  %v1885 = vunpack.c.l.b16 %v1850
  %v1886 = vunpack.c.l.b16 %v1851
  %v1887 = vunpack.c.l.b16 %v1852
  %v1888 = vunpack.c.l.b16 %v1853
  %v1889 = vpack.c.b16 %v1886, %v1885
  %v1890 = vpack.c.b16 %v1888, %v1887
  %v1892 = vsel %vm165, %v1889, 0
  %v1895 = vsel %vm165, %v1890, 0
  %1897 = vmatprep.subr.bf16.mxu0 0
  %1898 = vmatpush1.bf16.msra.mxu0 %v1854
  %1899 = vmatprep.subr.bf16.mxu0 0
  %1900 = vmatpush1.bf16.msra.mxu0 %v1855
  %1901 = vmatprep.subr.bf16.mxu0 0
  %1902 = vmatpush1.bf16.msra.mxu0 0
  %1903 = vmatprep.subr.bf16.mxu0 0
  %1904 = vmatpush1.bf16.msra.mxu0 0
  %1905 = vmatprep.subr.bf16.mxu0 0
  %1906 = vmatpush1.bf16.msra.mxu0 0
  %1907 = vmatprep.subr.bf16.mxu0 0
  %1908 = vmatpush1.bf16.msra.mxu0 0
  %1909 = vmatprep.subr.bf16.mxu0 0
  %1910 = vmatpush1.bf16.msra.mxu0 0
  %1911 = vmatprep.subr.bf16.mxu0 0
  %1912 = vmatpush1.bf16.msra.mxu0 0
  %1913 = vmatprep.subr.bf16.mxu0 0
  %1914 = vmatpush1.bf16.msra.mxu0 0
  %1915 = vmatprep.subr.bf16.mxu0 0
  %1916 = vmatpush1.bf16.msra.mxu0 0
  %1917 = vmatprep.subr.bf16.mxu0 0
  %1918 = vmatpush1.bf16.msra.mxu0 0
  %1919 = vmatprep.subr.bf16.mxu0 0
  %1920 = vmatpush1.bf16.msra.mxu0 0
  %1921 = vmatprep.subr.bf16.mxu0 0
  %1922 = vmatpush1.bf16.msra.mxu0 0
  %1923 = vmatprep.subr.bf16.mxu0 0
  %1924 = vmatpush1.bf16.msra.mxu0 0
  %1925 = vmatprep.subr.bf16.mxu0 0
  %1926 = vmatpush1.bf16.msra.mxu0 0
  %1927 = vmatprep.subr.bf16.mxu0 0
  %1928 = vmatpush1.bf16.msra.mxu0 0
  %1929 = vmatprep.mubr.bf16.mxu0 0
  %1930 = vmatmul.mubr.bf16.gmra.mrb[0].mxu0 %v1892
  %v1931 = vpop.f32.mrb[0].mxu0
  %v1932 = vadd.f32 %v1864, %v1931
  %v1933 = vpop.f32.mrb[0].mxu0
  %v1934 = vpop.f32.mrb[0].mxu0
  %v1935 = vadd.f32 %v1869, %v1934
  %v1936 = vpop.f32.mrb[0].mxu0
  %1937 = vmatprep.mubr.bf16.mxu0 0
  %1938 = vmatmul.mubr.bf16.gmra.mrb[0].mxu0 %v1895
  %v1939 = vpop.f32.mrb[0].mxu0
  %v1940 = vadd.f32 %v1874, %v1939
  %v1941 = vpop.f32.mrb[0].mxu0
  %v1942 = vpop.f32.mrb[0].mxu0
  %v1943 = vadd.f32 %v1879, %v1942
  %v1944 = vpop.f32.mrb[0].mxu0
  %1945 = vdwg.mxu0
  %v1946 = vmax.f32 %v1932, 0.0
  %v1947 = vmax.f32 %v1935, 0.0
  %v1948 = vmax.f32 %v1940, 0.0
  %v1949 = vmax.f32 %v1943, 0.0
  %1954 = vrot.lane.b32.xlu0 %v1946, 101
  %v1955 = vpop.permute.xlu0 %1954
  %1956 = vrot.lane.b32.xlu0 %v1947, 101
  %v1957 = vpop.permute.xlu0 %1956
  %1958 = vrot.lane.b32.xlu0 %v1948, 101
  %v1959 = vpop.permute.xlu0 %1958
  %1960 = vrot.lane.b32.xlu0 %v1949, 101
  %v1961 = vpop.permute.xlu0 %1960
  %1966 = vrot.lane.b32.xlu0 %v1946, 5
  %v1967 = vpop.permute.xlu0 %1966
  %1968 = vrot.lane.b32.xlu0 %v1947, 5
  %v1969 = vpop.permute.xlu0 %1968
  %1970 = vrot.lane.b32.xlu0 %v1948, 5
  %v1971 = vpop.permute.xlu0 %1970
  %1972 = vrot.lane.b32.xlu0 %v1949, 5
  %v1973 = vpop.permute.xlu0 %1972
  %v1978 = vsel %vm363, %v1955, %v1967
  %v1979 = vsel %vm363, %v1957, %v1969
  %v1980 = vsel %vm363, %v1959, %v1971
  %v1981 = vsel %vm363, %v1961, %v1973
  %v1982 = vmul.f32 %v1978, %v371
  %v1983 = vmul.f32 %v1979, %v371
  %v1984 = vmul.f32 %v1980, %v371
  %v1985 = vmul.f32 %v1981, %v371
  %1986 = vrot.lane.b32.xlu0 %v1946, 100
  %v1987 = vpop.permute.xlu0 %1986
  %1988 = vrot.lane.b32.xlu0 %v1947, 100
  %v1989 = vpop.permute.xlu0 %1988
  %1990 = vrot.lane.b32.xlu0 %v1948, 100
  %v1991 = vpop.permute.xlu0 %1990
  %1992 = vrot.lane.b32.xlu0 %v1949, 100
  %v1993 = vpop.permute.xlu0 %1992
  %1998 = vrot.lane.b32.xlu0 %v1946, 4
  %v1999 = vpop.permute.xlu0 %1998
  %2000 = vrot.lane.b32.xlu0 %v1947, 4
  %v2001 = vpop.permute.xlu0 %2000
  %2002 = vrot.lane.b32.xlu0 %v1948, 4
  %v2003 = vpop.permute.xlu0 %2002
  %2004 = vrot.lane.b32.xlu0 %v1949, 4
  %v2005 = vpop.permute.xlu0 %2004
  %v2010 = vsel %vm387, %v1987, %v1999
  %v2011 = vsel %vm387, %v1989, %v2001
  %v2012 = vsel %vm387, %v1991, %v2003
  %v2013 = vsel %vm387, %v1993, %v2005
  %v2014 = vmul.f32 %v2010, %v396
  %v2015 = vmul.f32 %v2011, %v396
  %v2016 = vmul.f32 %v2012, %v396
  %v2017 = vmul.f32 %v2013, %v396
  %2018 = vrot.lane.b32.xlu0 %v1946, 99
  %v2019 = vpop.permute.xlu0 %2018
  %2020 = vrot.lane.b32.xlu0 %v1947, 99
  %v2021 = vpop.permute.xlu0 %2020
  %2022 = vrot.lane.b32.xlu0 %v1948, 99
  %v2023 = vpop.permute.xlu0 %2022
  %2024 = vrot.lane.b32.xlu0 %v1949, 99
  %v2025 = vpop.permute.xlu0 %2024
  %2030 = vrot.lane.b32.xlu0 %v1946, 3
  %v2031 = vpop.permute.xlu0 %2030
  %2032 = vrot.lane.b32.xlu0 %v1947, 3
  %v2033 = vpop.permute.xlu0 %2032
  %2034 = vrot.lane.b32.xlu0 %v1948, 3
  %v2035 = vpop.permute.xlu0 %2034
  %2036 = vrot.lane.b32.xlu0 %v1949, 3
  %v2037 = vpop.permute.xlu0 %2036
  %v2042 = vsel %vm412, %v2019, %v2031
  %v2043 = vsel %vm412, %v2021, %v2033
  %v2044 = vsel %vm412, %v2023, %v2035
  %v2045 = vsel %vm412, %v2025, %v2037
  %v2046 = vmul.f32 %v2042, %v421
  %v2047 = vmul.f32 %v2043, %v421
  %v2048 = vmul.f32 %v2044, %v421
  %v2049 = vmul.f32 %v2045, %v421
  %2050 = vrot.lane.b32.xlu0 %v1946, 97
  %v2051 = vpop.permute.xlu0 %2050
  %2052 = vrot.lane.b32.xlu0 %v1947, 97
  %v2053 = vpop.permute.xlu0 %2052
  %2054 = vrot.lane.b32.xlu0 %v1948, 97
  %v2055 = vpop.permute.xlu0 %2054
  %2056 = vrot.lane.b32.xlu0 %v1949, 97
  %v2057 = vpop.permute.xlu0 %2056
  %2062 = vrot.lane.b32.xlu0 %v1946, 1
  %v2063 = vpop.permute.xlu0 %2062
  %2064 = vrot.lane.b32.xlu0 %v1947, 1
  %v2065 = vpop.permute.xlu0 %2064
  %2066 = vrot.lane.b32.xlu0 %v1948, 1
  %v2067 = vpop.permute.xlu0 %2066
  %2068 = vrot.lane.b32.xlu0 %v1949, 1
  %v2069 = vpop.permute.xlu0 %2068
  %v2074 = vsel %vm437, %v2051, %v2063
  %v2075 = vsel %vm437, %v2053, %v2065
  %v2076 = vsel %vm437, %v2055, %v2067
  %v2077 = vsel %vm437, %v2057, %v2069
  %v2078 = vmul.f32 %v2074, %v446
  %v2079 = vmul.f32 %v2075, %v446
  %v2080 = vmul.f32 %v2076, %v446
  %v2081 = vmul.f32 %v2077, %v446
  %2082 = vrot.lane.b32.xlu0 %v1946, 127
  %v2083 = vpop.permute.xlu0 %2082
  %2084 = vrot.lane.b32.xlu0 %v1947, 127
  %v2085 = vpop.permute.xlu0 %2084
  %2086 = vrot.lane.b32.xlu0 %v1948, 127
  %v2087 = vpop.permute.xlu0 %2086
  %2088 = vrot.lane.b32.xlu0 %v1949, 127
  %v2089 = vpop.permute.xlu0 %2088
  %2094 = vrot.lane.b32.xlu0 %v1946, 31
  %v2095 = vpop.permute.xlu0 %2094
  %2096 = vrot.lane.b32.xlu0 %v1947, 31
  %v2097 = vpop.permute.xlu0 %2096
  %2098 = vrot.lane.b32.xlu0 %v1948, 31
  %v2099 = vpop.permute.xlu0 %2098
  %2100 = vrot.lane.b32.xlu0 %v1949, 31
  %v2101 = vpop.permute.xlu0 %2100
  %v2106 = vsel %vm462, %v2083, %v2095
  %v2107 = vsel %vm462, %v2085, %v2097
  %v2108 = vsel %vm462, %v2087, %v2099
  %v2109 = vsel %vm462, %v2089, %v2101
  %v2110 = vmul.f32 %v2106, %v471
  %v2111 = vmul.f32 %v2107, %v471
  %v2112 = vmul.f32 %v2108, %v471
  %v2113 = vmul.f32 %v2109, %v471
  %2114 = vrot.lane.b32.xlu0 %v1946, 125
  %v2115 = vpop.permute.xlu0 %2114
  %2116 = vrot.lane.b32.xlu0 %v1947, 125
  %v2117 = vpop.permute.xlu0 %2116
  %2118 = vrot.lane.b32.xlu0 %v1948, 125
  %v2119 = vpop.permute.xlu0 %2118
  %2120 = vrot.lane.b32.xlu0 %v1949, 125
  %v2121 = vpop.permute.xlu0 %2120
  %2126 = vrot.lane.b32.xlu0 %v1946, 29
  %v2127 = vpop.permute.xlu0 %2126
  %2128 = vrot.lane.b32.xlu0 %v1947, 29
  %v2129 = vpop.permute.xlu0 %2128
  %2130 = vrot.lane.b32.xlu0 %v1948, 29
  %v2131 = vpop.permute.xlu0 %2130
  %2132 = vrot.lane.b32.xlu0 %v1949, 29
  %v2133 = vpop.permute.xlu0 %2132
  %v2138 = vsel %vm487, %v2115, %v2127
  %v2139 = vsel %vm487, %v2117, %v2129
  %v2140 = vsel %vm487, %v2119, %v2131
  %v2141 = vsel %vm487, %v2121, %v2133
  %v2142 = vmul.f32 %v2138, %v496
  %v2143 = vmul.f32 %v2139, %v496
  %v2144 = vmul.f32 %v2140, %v496
  %v2145 = vmul.f32 %v2141, %v496
  %2146 = vrot.lane.b32.xlu0 %v1946, 124
  %v2147 = vpop.permute.xlu0 %2146
  %2148 = vrot.lane.b32.xlu0 %v1947, 124
  %v2149 = vpop.permute.xlu0 %2148
  %2150 = vrot.lane.b32.xlu0 %v1948, 124
  %v2151 = vpop.permute.xlu0 %2150
  %2152 = vrot.lane.b32.xlu0 %v1949, 124
  %v2153 = vpop.permute.xlu0 %2152
  %2158 = vrot.lane.b32.xlu0 %v1946, 28
  %v2159 = vpop.permute.xlu0 %2158
  %2160 = vrot.lane.b32.xlu0 %v1947, 28
  %v2161 = vpop.permute.xlu0 %2160
  %2162 = vrot.lane.b32.xlu0 %v1948, 28
  %v2163 = vpop.permute.xlu0 %2162
  %2164 = vrot.lane.b32.xlu0 %v1949, 28
  %v2165 = vpop.permute.xlu0 %2164
  %v2170 = vsel %vm512, %v2147, %v2159
  %v2171 = vsel %vm512, %v2149, %v2161
  %v2172 = vsel %vm512, %v2151, %v2163
  %v2173 = vsel %vm512, %v2153, %v2165
  %v2174 = vmul.f32 %v2170, %v521
  %v2175 = vmul.f32 %v2171, %v521
  %v2176 = vmul.f32 %v2172, %v521
  %v2177 = vmul.f32 %v2173, %v521
  %2178 = vrot.lane.b32.xlu0 %v1946, 123
  %v2179 = vpop.permute.xlu0 %2178
  %2180 = vrot.lane.b32.xlu0 %v1947, 123
  %v2181 = vpop.permute.xlu0 %2180
  %2182 = vrot.lane.b32.xlu0 %v1948, 123
  %v2183 = vpop.permute.xlu0 %2182
  %2184 = vrot.lane.b32.xlu0 %v1949, 123
  %v2185 = vpop.permute.xlu0 %2184
  %2190 = vrot.lane.b32.xlu0 %v1946, 27
  %v2191 = vpop.permute.xlu0 %2190
  %2192 = vrot.lane.b32.xlu0 %v1947, 27
  %v2193 = vpop.permute.xlu0 %2192
  %2194 = vrot.lane.b32.xlu0 %v1948, 27
  %v2195 = vpop.permute.xlu0 %2194
  %2196 = vrot.lane.b32.xlu0 %v1949, 27
  %v2197 = vpop.permute.xlu0 %2196
  %v2202 = vsel %vm537, %v2179, %v2191
  %v2203 = vsel %vm537, %v2181, %v2193
  %v2204 = vsel %vm537, %v2183, %v2195
  %v2205 = vsel %vm537, %v2185, %v2197
  %v2206 = vmul.f32 %v2202, %v546
  %v2207 = vmul.f32 %v2203, %v546
  %v2208 = vmul.f32 %v2204, %v546
  %v2209 = vmul.f32 %v2205, %v546
  %v2210 = vpack.c.bf16 %v1983, %v1982
  %v2211 = vpack.c.bf16 %v1985, %v1984
  %v2212 = vpack.c.bf16 %v2015, %v2014
  %v2213 = vpack.c.bf16 %v2017, %v2016
  %v2214 = vpack.c.bf16 %v2047, %v2046
  %v2215 = vpack.c.bf16 %v2049, %v2048
  %v2216 = vpack.c.bf16 %v2079, %v2078
  %v2217 = vpack.c.bf16 %v2081, %v2080
  %v2218 = vpack.c.bf16 %v1947, %v1946
  %v2219 = vpack.c.bf16 %v1949, %v1948
  %v2220 = vpack.c.bf16 %v2111, %v2110
  %v2221 = vpack.c.bf16 %v2113, %v2112
  %v2222 = vpack.c.bf16 %v2143, %v2142
  %v2223 = vpack.c.bf16 %v2145, %v2144
  %v2224 = vpack.c.bf16 %v2175, %v2174
  %v2225 = vpack.c.bf16 %v2177, %v2176
  %v2226 = vpack.c.bf16 %v2207, %v2206
  %v2227 = vpack.c.bf16 %v2209, %v2208
  %s2228 = scalar_lea.vmem %s10, 36
  %v2229 = vld [vmem:[%s2228] sm:$0xff]
  %v2230 = vld [vmem:[%s2228 + $0x8] sm:$0xf]
  %v2231 = vld [vmem:[%s2228 + $0xc] sm:$0xff]
  %v2232 = vld [vmem:[%s2228 + $0x14] sm:$0xf]
  %v2233 = vld [vmem:[%s2228 + $0x18] sm:$0xff]
  %v2234 = vld [vmem:[%s2228 + $0x20] sm:$0xf]
  %s2235 = scalar_lea.vmem %s11, 24
  %v2236 = vld [vmem:[%s2235] sm:$0xff]
  %v2237 = vld [vmem:[%s2235 + $0x8] sm:$0xff]
  %v2238 = vld [vmem:[%s2235 + $0x10] sm:$0xff]
  %2240 = vset.pattern.permute.xlu0 0
  %2241 = vperm.xlu0 %2240, %v2236
  %v2242 = vpop.permute.xlu0 %2241
  %2245 = vset.pattern.permute.xlu0 0
  %2246 = vperm.xlu0 %2245, %v2237
  %v2247 = vpop.permute.xlu0 %2246
  %2250 = vset.pattern.permute.xlu0 0
  %2251 = vperm.xlu0 %2250, %v2238
  %v2252 = vpop.permute.xlu0 %2251
  %v2260 = vunpack.c.l.b16 %v2229
  %v2261 = vunpack.c.h.b16 %v2229
  %v2262 = vunpack.c.l.b16 %v2230
  %v2263 = vunpack.c.l.b16 %v2231
  %v2264 = vunpack.c.h.b16 %v2231
  %v2265 = vunpack.c.l.b16 %v2232
  %v2266 = vunpack.c.l.b16 %v2233
  %v2267 = vunpack.c.h.b16 %v2233
  %v2268 = vunpack.c.l.b16 %v2234
  %v2269 = vpack.c.b16 %v2263, %v2260
  %v2270 = vpack.c.b16 %v2264, %v2261
  %v2271 = vpack.c.b16 %v2265, %v2262
  %v2272 = vpack.c.b16 %v2266, %v2266
  %v2273 = vpack.c.b16 %v2267, %v2267
  %v2274 = vpack.c.b16 %v2268, %v2268
  %v2280 = vsel %vm165, %v2271, 0
  %v2283 = vsel %vm165, %v2274, 0
  %2285 = vmatprep.subr.bf16.mxu0 0
  %2286 = vmatpush1.bf16.msra.mxu0 %v2210
  %2287 = vmatprep.subr.bf16.mxu0 0
  %2288 = vmatpush1.bf16.msra.mxu0 %v2211
  %2289 = vmatprep.subr.bf16.mxu0 0
  %2290 = vmatpush1.bf16.msra.mxu0 %v2212
  %2291 = vmatprep.subr.bf16.mxu0 0
  %2292 = vmatpush1.bf16.msra.mxu0 %v2213
  %2293 = vmatprep.subr.bf16.mxu0 0
  %2294 = vmatpush1.bf16.msra.mxu0 %v2214
  %2295 = vmatprep.subr.bf16.mxu0 0
  %2296 = vmatpush1.bf16.msra.mxu0 %v2215
  %2297 = vmatprep.subr.bf16.mxu0 0
  %2298 = vmatpush1.bf16.msra.mxu0 %v2216
  %2299 = vmatprep.subr.bf16.mxu0 0
  %2300 = vmatpush1.bf16.msra.mxu0 %v2217
  %2301 = vmatprep.subr.bf16.mxu0 0
  %2302 = vmatpush1.bf16.msra.mxu0 %v2218
  %2303 = vmatprep.subr.bf16.mxu0 0
  %2304 = vmatpush1.bf16.msra.mxu0 %v2219
  %2305 = vmatprep.subr.bf16.mxu0 0
  %2306 = vmatpush1.bf16.msra.mxu0 %v2220
  %2307 = vmatprep.subr.bf16.mxu0 0
  %2308 = vmatpush1.bf16.msra.mxu0 %v2221
  %2309 = vmatprep.subr.bf16.mxu0 0
  %2310 = vmatpush1.bf16.msra.mxu0 %v2222
  %2311 = vmatprep.subr.bf16.mxu0 0
  %2312 = vmatpush1.bf16.msra.mxu0 %v2223
  %2313 = vmatprep.subr.bf16.mxu0 0
  %2314 = vmatpush1.bf16.msra.mxu0 %v2224
  %2315 = vmatprep.subr.bf16.mxu0 0
  %2316 = vmatpush1.bf16.msra.mxu0 %v2225
  %2317 = vmatprep.mubr.bf16.mxu0 %v2270
  %2318 = vmatmul.mubr.bf16.gmra.mrb[0].mxu0 %v2269
  %v2319 = vpop.f32.mrb[0].mxu0
  %v2320 = vadd.f32 %v2242, %v2319
  %v2321 = vpop.f32.mrb[0].mxu0
  %v2322 = vpop.f32.mrb[0].mxu0
  %v2323 = vadd.f32 %v2247, %v2322
  %v2324 = vpop.f32.mrb[0].mxu0
  %2325 = vmatprep.mubr.bf16.mxu0 %v2273
  %2326 = vmatmul.mubr.bf16.gmra.mrb[0].mxu0 %v2272
  %v2327 = vpop.f32.mrb[0].mxu0
  %v2328 = vadd.f32 %v2252, %v2327
  %v2329 = vpop.f32.mrb[0].mxu0
  %v2330 = vpop.f32.mrb[0].mxu0
  %v2331 = vpop.f32.mrb[0].mxu0
  %2332 = vdwg.mxu0
  %2333 = vmatprep.subr.bf16.mxu0 0
  %2334 = vmatpush1.bf16.msra.mxu0 %v2226
  %2335 = vmatprep.subr.bf16.mxu0 0
  %2336 = vmatpush1.bf16.msra.mxu0 %v2227
  %2337 = vmatprep.subr.bf16.mxu0 0
  %2338 = vmatpush1.bf16.msra.mxu0 0
  %2339 = vmatprep.subr.bf16.mxu0 0
  %2340 = vmatpush1.bf16.msra.mxu0 0
  %2341 = vmatprep.subr.bf16.mxu0 0
  %2342 = vmatpush1.bf16.msra.mxu0 0
  %2343 = vmatprep.subr.bf16.mxu0 0
  %2344 = vmatpush1.bf16.msra.mxu0 0
  %2345 = vmatprep.subr.bf16.mxu0 0
  %2346 = vmatpush1.bf16.msra.mxu0 0
  %2347 = vmatprep.subr.bf16.mxu0 0
  %2348 = vmatpush1.bf16.msra.mxu0 0
  %2349 = vmatprep.subr.bf16.mxu0 0
  %2350 = vmatpush1.bf16.msra.mxu0 0
  %2351 = vmatprep.subr.bf16.mxu0 0
  %2352 = vmatpush1.bf16.msra.mxu0 0
  %2353 = vmatprep.subr.bf16.mxu0 0
  %2354 = vmatpush1.bf16.msra.mxu0 0
  %2355 = vmatprep.subr.bf16.mxu0 0
  %2356 = vmatpush1.bf16.msra.mxu0 0
  %2357 = vmatprep.subr.bf16.mxu0 0
  %2358 = vmatpush1.bf16.msra.mxu0 0
  %2359 = vmatprep.subr.bf16.mxu0 0
  %2360 = vmatpush1.bf16.msra.mxu0 0
  %2361 = vmatprep.subr.bf16.mxu0 0
  %2362 = vmatpush1.bf16.msra.mxu0 0
  %2363 = vmatprep.subr.bf16.mxu0 0
  %2364 = vmatpush1.bf16.msra.mxu0 0
  %2365 = vmatprep.mubr.bf16.mxu0 0
  %2366 = vmatmul.mubr.bf16.gmra.mrb[0].mxu0 %v2280
  %v2367 = vpop.f32.mrb[0].mxu0
  %v2368 = vadd.f32 %v2320, %v2367
  %v2369 = vpop.f32.mrb[0].mxu0
  %v2370 = vpop.f32.mrb[0].mxu0
  %v2371 = vadd.f32 %v2323, %v2370
  %v2372 = vpop.f32.mrb[0].mxu0
  %2373 = vmatprep.mubr.bf16.mxu0 0
  %2374 = vmatmul.mubr.bf16.gmra.mrb[0].mxu0 %v2283
  %v2375 = vpop.f32.mrb[0].mxu0
  %v2376 = vadd.f32 %v2328, %v2375
  %v2377 = vpop.f32.mrb[0].mxu0
  %v2378 = vpop.f32.mrb[0].mxu0
  %v2379 = vpop.f32.mrb[0].mxu0
  %2380 = vdwg.mxu0
  %v2381 = vadd.f32 %v2371, 2.0
  %v2382 = vadd.f32 %v2376, 2.0
  %v2383 = vand.u32 2147483647, %v2381
  %v2384 = vand.u32 2147483647, %v2382
  %v2385 = vsub.f32 0.0, %v2383
  %v2386 = vsub.f32 0.0, %v2384
  %v2387 = vmul.f32 %v2385, 1.442695
  %v2388 = vpow.pop %v2387
  %v2389 = vmul.f32 %v2386, 1.442695
  %v2390 = vpow.pop %v2389
  %v2391 = vadd.f32 %v2388, 1.0
  %v2392 = vadd.f32 %v2390, 1.0
  %v2393 = vmin.f32 %v2381, 0.0
  %v2394 = vmin.f32 %v2382, 0.0
  %v2395 = vlog2.pop %v2391
  %v2396 = vmul.f32 %v2395, 0.6931472
  %v2397 = vlog2.pop %v2392
  %v2398 = vmul.f32 %v2397, 0.6931472
  %v2399 = vsub.f32 %v2393, %v2396
  %v2400 = vsub.f32 %v2394, %v2398
  %vm2401 = vcmp.lt.f32.partialorder %v2381, 0.0
  %vm2402 = vcmp.lt.f32.partialorder %v2382, 0.0
  %v2403 = vsel %vm2401, %v2388, 1.0
  %v2404 = vsel %vm2402, %v2390, 1.0
  %v2405 = vrcp.pop %v2391
  %v2406 = vrcp.pop %v2392
  %v2407 = vmul.f32 %v2403, %v2405
  %v2408 = vmul.f32 %v2404, %v2406
  %v2411 = vrot.slane %v2368, 4
  %v2412 = vrot.slane %v2371, 4
  %v2413 = vsel %vm552, %v2411, %v2412
  %v2416 = vadd.f32 %v1576, %v2411
  %v2417 = vadd.f32 %v1577, %v2413
  %v2418 = vmul.f32 %v2416, %v2407
  %v2419 = vmul.f32 %v2417, %v2408
  %v2422 = vrot.slane %v2399, 4
  %v2423 = vrot.slane %v2400, 4
  %v2424 = vsel %vm552, %v2422, %v2423
  %v2427 = vsel %vm165, %v2424, 0.0
  %v2428 = vsel %vm1267, %v2423, 0.0
  %v2429 = vadd.f32 %v2427, %v2428
  %v2430 = vrot.slane %v2429, 4
  %v2431 = vadd.f32 %v2429, %v2430
  %v2432 = vrot.slane %v2431, 2
  %v2433 = vadd.f32 %v2431, %v2432
  %v2434 = vrot.slane %v2433, 1
  %v2435 = vadd.f32 %v2433, %v2434
  %v2436 = vadd.f32 %v1276, %v2435
  %v2437 = vsel %vm552, %v1576, %v2418
  %2438 = vst.msk [vmem:[%s13] sm:$0xff] %vm165, %v1575
  %2439 = vst.msk [vmem:[%s13 + $0x8] sm:$0xff] %vm165, %v2437
  %2440 = vst.msk [vmem:[%s13 + $0x10] sm:$0xff] %vm165, %v2419
  %v2441 = vld [vmem:[%s12] sm:$0xff]
  %v2442 = vld [vmem:[%s12 + $0x8] sm:$0xff]
  %v2443 = vld [vmem:[%s12 + $0x10] sm:$0xff]
  %v2444 = vld [vmem:[%s12 + $0x18] sm:$0xff]
  %v2446 = vsel %vm165, %v2436, 0
  %2448 = vmatprep.subr.mxu0 0.0
  %2449 = vmatpush1.msra.mxu0 %v2441
  %2450 = vmatprep.subr.mxu0 0.0
  %2451 = vmatpush1.msra.mxu0 %v2442
  %2452 = vmatprep.subr.mxu0 0.0
  %2453 = vmatpush1.msra.mxu0 %v2443
  %2454 = vmatprep.subr.mxu0 0.0
  %2455 = vmatpush1.msra.mxu0 %v2444
  %2456 = vmatprep.subr.mxu0 0.0
  %2457 = vmatpush1.msra.mxu0 0.0
  %2458 = vmatprep.subr.mxu0 0.0
  %2459 = vmatpush1.msra.mxu0 0.0
  %2460 = vmatprep.subr.mxu0 0.0
  %2461 = vmatpush1.msra.mxu0 0.0
  %2462 = vmatprep.subr.mxu0 0.0
  %2463 = vmatpush1.msra.mxu0 0.0
  %2464 = vmatprep.subr.mxu0 0.0
  %2465 = vmatpush1.msra.mxu0 0.0
  %2466 = vmatprep.subr.mxu0 0.0
  %2467 = vmatpush1.msra.mxu0 0.0
  %2468 = vmatprep.subr.mxu0 0.0
  %2469 = vmatpush1.msra.mxu0 0.0
  %2470 = vmatprep.subr.mxu0 0.0
  %2471 = vmatpush1.msra.mxu0 0.0
  %2472 = vmatprep.subr.mxu0 0.0
  %2473 = vmatpush1.msra.mxu0 0.0
  %2474 = vmatprep.subr.mxu0 0.0
  %2475 = vmatpush1.msra.mxu0 0.0
  %2476 = vmatprep.subr.mxu0 0.0
  %2477 = vmatpush1.msra.mxu0 0.0
  %2478 = vmatprep.subr.mxu0 0.0
  %2479 = vmatpush1.msra.mxu0 0.0
  %2480 = vmatprep.subr.mxu0 0.0
  %2481 = vmatpush1.msra.mxu0 0.0
  %2482 = vmatprep.subr.mxu0 0.0
  %2483 = vmatpush1.msra.mxu0 0.0
  %2484 = vmatprep.subr.mxu0 0.0
  %2485 = vmatpush1.msra.mxu0 0.0
  %2486 = vmatprep.subr.mxu0 0.0
  %2487 = vmatpush1.msra.mxu0 0.0
  %2488 = vmatprep.subr.mxu0 0.0
  %2489 = vmatpush1.msra.mxu0 0.0
  %2490 = vmatprep.subr.mxu0 0.0
  %2491 = vmatpush1.msra.mxu0 0.0
  %2492 = vmatprep.subr.mxu0 0.0
  %2493 = vmatpush1.msra.mxu0 0.0
  %2494 = vmatprep.subr.mxu0 0.0
  %2495 = vmatpush1.msra.mxu0 0.0
  %2496 = vmatprep.subr.mxu0 0.0
  %2497 = vmatpush1.msra.mxu0 0.0
  %2498 = vmatprep.subr.mxu0 0.0
  %2499 = vmatpush1.msra.mxu0 0.0
  %2500 = vmatprep.subr.mxu0 0.0
  %2501 = vmatpush1.msra.mxu0 0.0
  %2502 = vmatprep.subr.mxu0 0.0
  %2503 = vmatpush1.msra.mxu0 0.0
  %2504 = vmatprep.subr.mxu0 0.0
  %2505 = vmatpush1.msra.mxu0 0.0
  %2506 = vmatprep.subr.mxu0 0.0
  %2507 = vmatpush1.msra.mxu0 0.0
  %2508 = vmatprep.subr.mxu0 0.0
  %2509 = vmatpush1.msra.mxu0 0.0
  %2510 = vmatprep.subr.mxu0 0.0
  %2511 = vmatpush1.msra.mxu0 0.0
  %2512 = vmatprep.mubr.f32.mxu0 0.0
  %2513 = vmatmul.mubr.f32.gmra.mrb[0].mxu0 %v2446
  %v2514 = vpop.f32.mrb[0].mxu0
  %v2515 = vadd.f32 0.0, %v2514
  %v2516 = vpop.f32.mrb[0].mxu0
  %2517 = vdwg.mxu0
  %2518 = vst [vmem:[%s14] sm:$0x1] %v2515
  // Predicated region
  $region54: #{_lambda_.3} parent=0 // pred_check
    _
  $region55: #{_lambda_.3} parent=0 // pred_check_branch
    %2520 = sbr.rel (0) target = $region57
  $region56: #{_lambda_.3} parent=0 // pred_region
    _
  $region57: #{_lambda_.3} parent=0 // pred_fallthru
    _
  // Predicated region
  $region58: #{_lambda_.3} parent=0 // pred_check
    _
  $region59: #{_lambda_.3} parent=0 // pred_check_branch
    %2522 = sbr.rel (0) target = $region61
  $region60: #{_lambda_.3} parent=0 // pred_region
    _
  $region61: #{_lambda_.3} parent=0 // pred_fallthru
    _
  // Predicated region
  $region62: #{_lambda_.3} parent=0 // pred_check
    _
  $region63: #{_lambda_.3} parent=0 // pred_check_branch
    %2524 = sbr.rel (0) target = $region65
  $region64: #{_lambda_.3} parent=0 // pred_region
    _
  $region65: #{_lambda_.3} parent=0 // pred_fallthru
    _
  // Predicated region
  $region66: #{_lambda_.3} parent=0 // pred_check
    _
  $region67: #{_lambda_.3} parent=0 // pred_check_branch
    %2526 = sbr.rel (0) target = $region69
  $region68: #{_lambda_.3} parent=0 // pred_region
    _
  $region69: #{_lambda_.3} parent=0 // pred_fallthru
    _

</llo_original>
